<compile_context>
chip_gen: v7x
topology: tpu7x:2x2x1
jax: 0.10.0
libtpu: 0.0.40
codegen_flags: <defaults>
</compile_context>

<pallas_src>
import math
from functools import partial

import jax
import jax.numpy as jnp
import numpy as np
from jax.experimental import pallas as pl
from jax.experimental.pallas import tpu as pltpu

INF = 1.0e9
LN_EPS = 1e-5


# ----------------------------- Pallas kernel ---------------------------------
def _tri_attn_kernel(x_ref, mb_ref, tri_ref, wqkvg_ref, bg_ref, wo_ref, bo_ref,
                     o_ref, og_ref, *, no_heads, c_hidden, compute_dtype):
    """One (batch b, row-tile) step.

    x_ref:     [TI, N, C]        layer-normed rows (compute_dtype)
    mb_ref:    [TI, 1, N]        mask bias (inf * (mask - 1)) for the key axis
    tri_ref:   [H, N, N]         triangle bias for batch b (shared across rows)
    wqkvg_ref: [C, 4*H*Ch]       fused Wq|Wk|Wv|Wg (head-major columns)
    bg_ref:    [1, H*Ch]         gating bias (f32)
    wo_ref:    [H*Ch, C]         fused output projection
    bo_ref:    [1, C]            output bias (f32)
    o_ref:     [TI, N, C]        output rows
    og_ref:    [TI*N, H*Ch]      VMEM scratch holding the gated per-head outputs
    """
    ti, n, c = x_ref.shape
    h_tot = no_heads * c_hidden
    scale = 1.0 / math.sqrt(c_hidden)

    x = x_ref[...].reshape(ti * n, c)                                        # bf16
    proj = jnp.dot(x, wqkvg_ref[...],
                   preferred_element_type=jnp.float32)                       # [TI*N, 4*H*Ch] f32

    q_all = proj[:, 0 * h_tot:1 * h_tot].astype(compute_dtype).reshape(ti, n, h_tot)
    k_all = proj[:, 1 * h_tot:2 * h_tot].astype(compute_dtype).reshape(ti, n, h_tot)
    v_all = proj[:, 2 * h_tot:3 * h_tot].astype(compute_dtype).reshape(ti, n, h_tot)
    gate = jax.nn.sigmoid(proj[:, 3 * h_tot:4 * h_tot]
                          + bg_ref[...].astype(jnp.float32))                 # [TI*N, H*Ch] f32

    mb = mb_ref[...].astype(jnp.float32)                                     # [TI, 1, N]

    for h in range(no_heads):                                                # static, small H
        sl = slice(h * c_hidden, (h + 1) * c_hidden)
        q = q_all[:, :, sl]                                                  # [TI, N, Ch]
        k = k_all[:, :, sl]
        v = v_all[:, :, sl]

        s = jnp.einsum("tqd,tkd->tqk", q, k,
                       preferred_element_type=jnp.float32) * scale           # [TI, N, N] f32
        s = s + mb                                   # mask bias, broadcast over query dim
        s = s + tri_ref[h].astype(jnp.float32)       # triangle bias [N, N]

        s = s - jnp.max(s, axis=-1, keepdims=True)
        p = jnp.exp(s)
        p = p * pl.reciprocal(jnp.sum(p, axis=-1, keepdims=True), approx=True)

        o = jnp.einsum("tqk,tkd->tqd", p.astype(compute_dtype), v,
                       preferred_element_type=jnp.float32)                   # [TI, N, Ch] f32
        o = o.reshape(ti * n, c_hidden) * gate[:, sl]
        og_ref[:, sl] = o.astype(og_ref.dtype)

    out = jnp.dot(og_ref[...], wo_ref[...], preferred_element_type=jnp.float32)
    out = out + bo_ref[...].astype(jnp.float32)
    o_ref[...] = out.reshape(ti, n, c).astype(o_ref.dtype)


# ------------------------------ wrapper ---------------------------------------
def _fuse_heads(w):
    """[H, C, Ch] -> [C, H*Ch] with columns ordered (head, dim)."""
    h, c, d = w.shape
    return jnp.transpose(w, (1, 0, 2)).reshape(c, h * d)


def triangle_attention_pallas(x, mask, params, *, starting, inf=INF,
                              compute_dtype=jnp.bfloat16, row_tile=8):
    """x: [B, I, J, C_in], mask: [B, I, J] (float). Returns [B, I, J, C_in]."""
    if not starting:
        x = jnp.swapaxes(x, -2, -3)
        mask = jnp.swapaxes(mask, -1, -2)

    B, I, J, C = x.shape
    assert I == J, "pair representation must be square"
    N = I
    H, _, Ch = params["wq"].shape
    h_tot = H * Ch

    # LayerNorm over C_in (glue; needed globally for the triangle bias).
    xf = x.astype(jnp.float32)
    mu = jnp.mean(xf, axis=-1, keepdims=True)
    var = jnp.mean((xf - mu) ** 2, axis=-1, keepdims=True)
    xn = (xf - mu) * jax.lax.rsqrt(var + LN_EPS) * params["ln_w"] + params["ln_b"]

    # Triangle bias from the whole normalized pair matrix (f32 math, bf16 to the kernel).
    tri = jnp.einsum("bijc,ch->bhij", xn, params["w_tri"])                   # [B, H, N, N]

    # Pad the square pair dims: lane multiple (128) for production N, sublane (8) otherwise.
    pad_to = 128 if N >= 128 else 8
    n_pad = -(-N // pad_to) * pad_to
    pad = n_pad - N
    if pad:
        xn = jnp.pad(xn, ((0, 0), (0, pad), (0, pad), (0, 0)))
        mask = jnp.pad(mask, ((0, 0), (0, pad), (0, pad)))    # zeros -> padded keys masked
        tri = jnp.pad(tri, ((0, 0), (0, 0), (0, pad), (0, pad)))

    mask_bias = (inf * (mask.astype(jnp.float32) - 1.0))[:, :, None, :]      # [B, N, 1, N]

    # Row tile: keep the per-head f32 score block (TI, N, N) within ~8 MiB of VMEM.
    ti = 1
    cand = min(row_tile, n_pad)
    while cand > 1:
        if n_pad % cand == 0 and cand * n_pad * n_pad * 4 <= (8 << 20):
            ti = cand
            break
        cand //= 2

    # Fused, compute_dtype (bf16) weights -> lane-dense MXU operands.
    w_qkvg = jnp.concatenate(
        [_fuse_heads(params["wq"]), _fuse_heads(params["wk"]),
         _fuse_heads(params["wv"]), _fuse_heads(params["wg"])],
        axis=1).astype(compute_dtype)                                        # [C, 4*H*Ch]
    wo_f = params["wo"].reshape(h_tot, C).astype(compute_dtype)              # [H*Ch, C]
    bg_f = params["bg"].reshape(1, h_tot).astype(jnp.float32)
    bo_f = params["bo"].reshape(1, C).astype(jnp.float32)

    xn_c = xn.astype(compute_dtype)
    tri_c = tri.astype(compute_dtype)
    mb_c = mask_bias.astype(compute_dtype)

    # VMEM budget: double-buffered blocks + weights + scratch + score block, with headroom.
    esz = np.dtype(compute_dtype).itemsize
    blocks = (ti * n_pad * C * esz            # x row tile
              + ti * n_pad * esz              # mask bias
              + H * n_pad * n_pad * esz       # triangle bias
              + ti * n_pad * C * x.dtype.itemsize)   # output tile
    weights = (C * 4 * h_tot + h_tot * C) * esz + (h_tot + C) * 4
    scratch = ti * n_pad * h_tot * esz + ti * n_pad * n_pad * 4
    vmem_limit = int(min(64 << 20, max(32 << 20, 4 * (2 * blocks + weights + scratch))))

    kernel = partial(_tri_attn_kernel, no_heads=H, c_hidden=Ch,
                     compute_dtype=compute_dtype)

    # TODO(synk): chunk_layer (eval-mode memory chunking) has identical math;
    # the kernel computes each row tile unchunked.
    out = pl.pallas_call(
        kernel,
        out_shape=jax.ShapeDtypeStruct((B, n_pad, n_pad, C), x.dtype),
        grid=(B, n_pad // ti),
        in_specs=[
            pl.BlockSpec((None, ti, n_pad, C), lambda b, i: (b, i, 0, 0)),    # xn row tile
            pl.BlockSpec((None, ti, 1, n_pad), lambda b, i: (b, i, 0, 0)),    # mask bias
            pl.BlockSpec((None, H, n_pad, n_pad), lambda b, i: (b, 0, 0, 0)), # triangle bias
            pl.BlockSpec((C, 4 * h_tot), lambda b, i: (0, 0)),                # fused Wq|Wk|Wv|Wg
            pl.BlockSpec((1, h_tot), lambda b, i: (0, 0)),                    # gating bias
            pl.BlockSpec((h_tot, C), lambda b, i: (0, 0)),                    # fused Wo
            pl.BlockSpec((1, C), lambda b, i: (0, 0)),                        # output bias
        ],
        out_specs=pl.BlockSpec((None, ti, n_pad, C), lambda b, i: (b, i, 0, 0)),
        scratch_shapes=[pltpu.VMEM((ti * n_pad, h_tot), compute_dtype)],
        compiler_params=pltpu.CompilerParams(
            dimension_semantics=("parallel", "arbitrary"),
            vmem_limit_bytes=vmem_limit),
    )(xn_c, mb_c, tri_c, w_qkvg, bg_f, wo_f, bo_f)

    out = out[:, :N, :N, :]
    if not starting:
        out = jnp.swapaxes(out, -2, -3)
    return out


# --------------------------- pure-JAX reference --------------------------------
def triangle_attention_ref(x, mask, params, *, starting, inf=INF,
                           compute_dtype=jnp.bfloat16):
    """Reference with the module's math, mirroring the kernel's mixed precision
    (bf16 MXU inputs, f32 accumulation / softmax) so comparisons are apples-to-apples."""
    if not starting:
        x = jnp.swapaxes(x, -2, -3)
        mask = jnp.swapaxes(mask, -1, -2)

    cd = compute_dtype
    wq, wk, wv = params["wq"], params["wk"], params["wv"]
    wg, bg = params["wg"], params["bg"]
    wo, bo = params["wo"], params["bo"]
    H, _, Ch = wq.shape

    xf = x.astype(jnp.float32)
    mu = jnp.mean(xf, axis=-1, keepdims=True)
    var = jnp.mean((xf - mu) ** 2, axis=-1, keepdims=True)
    xn = (xf - mu) * jax.lax.rsqrt(var + LN_EPS) * params["ln_w"] + params["ln_b"]

    mask_bias = inf * (mask.astype(jnp.float32) - 1.0)                       # [B, I, J]
    tri = jnp.einsum("bijc,ch->bhij", xn, params["w_tri"])
    tri = tri.astype(cd).astype(jnp.float32)                                 # [B, H, I, J]

    xc = xn.astype(cd)
    q = jnp.einsum("bijc,hcd->bihjd", xc, wq.astype(cd),
                   preferred_element_type=jnp.float32)
    k = jnp.einsum("bijc,hcd->bihjd", xc, wk.astype(cd),
                   preferred_element_type=jnp.float32)
    v = jnp.einsum("bijc,hcd->bihjd", xc, wv.astype(cd),
                   preferred_element_type=jnp.float32)
    g = jax.nn.sigmoid(jnp.einsum("bijc,hcd->bihjd", xc, wg.astype(cd),
                                  preferred_element_type=jnp.float32)
                       + bg[None, None].astype(jnp.float32))

    s = jnp.einsum("bihqd,bihkd->bihqk", q.astype(cd), k.astype(cd),
                   preferred_element_type=jnp.float32) / math.sqrt(Ch)
    s = s + mask_bias[:, :, None, None, :]
    s = s + tri[:, None, :, :, :]
    s = s - jnp.max(s, axis=-1, keepdims=True)
    p = jnp.exp(s)
    p = p / jnp.sum(p, axis=-1, keepdims=True)

    o = jnp.einsum("bihqk,bihkd->bihqd", p.astype(cd), v.astype(cd),
                   preferred_element_type=jnp.float32)
    o = (o * g).astype(cd)
    out = jnp.einsum("bihjd,hdc->bijc", o, wo.astype(cd),
                     preferred_element_type=jnp.float32) + bo[None, None].astype(jnp.float32)
    out = out.astype(x.dtype)
    if not starting:
        out = jnp.swapaxes(out, -2, -3)
    return out


# ------------------------------ param init -------------------------------------
def init_params(key, c_in, c_hidden, no_heads):
    ks = jax.random.split(key, 6)

    def glorot(k, shape, fan_in, fan_out):
        lim = math.sqrt(6.0 / (fan_in + fan_out))
        return jax.random.uniform(k, shape, jnp.float32, -lim, lim)

    # NOTE: OpenFold's init uses zero gating / zero output-projection weights;
    # we use deterministic random values so the synthetic test is nontrivial.
    return dict(
        ln_w=jnp.ones((c_in,), jnp.float32),
        ln_b=jnp.zeros((c_in,), jnp.float32),
        w_tri=jax.random.normal(ks[0], (c_in, no_heads), jnp.float32) / math.sqrt(c_in),
        wq=glorot(ks[1], (no_heads, c_in, c_hidden), c_in, c_hidden * no_heads),
        wk=glorot(ks[2], (no_heads, c_in, c_hidden), c_in, c_hidden * no_heads),
        wv=glorot(ks[3], (no_heads, c_in, c_hidden), c_in, c_hidden * no_heads),
        wg=glorot(ks[4], (no_heads, c_in, c_hidden), c_in, c_hidden * no_heads),
        bg=jnp.ones((no_heads, 1, c_hidden), jnp.float32),
        wo=glorot(ks[5], (no_heads, c_hidden, c_in), c_hidden * no_heads, c_in),
        bo=jnp.zeros((1, c_in), jnp.float32),
    )


# --------------------------------- main -----------------------------------------
if __name__ == "__main__":
    B, N, C_IN, C_HID, HEADS = 2, 16, 32, 16, 4   # I = J = N (square pair rep)

    key = jax.random.PRNGKey(0)
    kx, kp = jax.random.split(key)
    x = jax.random.normal(kx, (B, N, N, C_IN), jnp.float32)

    # Deterministic mask (module default is all-ones; zero out a few key columns).
    mask = jnp.ones((B, N, N), jnp.float32)
    mask = mask.at[:, :, -3:].set(0.0)

    params = init_params(kp, C_IN, C_HID, HEADS)

    for starting in (True, False):
        out = jax.block_until_ready(
            triangle_attention_pallas(x, mask, params, starting=starting))
        ref = jax.block_until_ready(
            triangle_attention_ref(x, mask, params, starting=starting))
        # Kernel and reference share the same mixed-precision strategy; residual
        # differences come from accumulation order and the approx EUP reciprocal.
        np.testing.assert_allclose(np.asarray(out, dtype=np.float32),
                                   np.asarray(ref, dtype=np.float32),
                                   rtol=1e-2, atol=1e-2)

    print("KERNEL_OK")
</pallas_src>

<mosaic_0001>
module attributes {stable_mosaic.version = 11 : i64} {
  func.func @_tri_attn_kernel(%arg0: i32, %arg1: i32, %arg2: memref<1x8x16x32xbf16, #tpu.memory_space<vmem>>, %arg3: memref<1x8x1x16xbf16, #tpu.memory_space<vmem>>, %arg4: memref<1x4x16x16xbf16, #tpu.memory_space<vmem>>, %arg5: memref<32x256xbf16, #tpu.memory_space<vmem>>, %arg6: memref<1x64xf32, #tpu.memory_space<vmem>>, %arg7: memref<64x32xbf16, #tpu.memory_space<vmem>>, %arg8: memref<1x32xf32, #tpu.memory_space<vmem>>, %arg9: memref<1x8x16x32xf32, #tpu.memory_space<vmem>>, %arg10: memref<128x64xbf16, #tpu.memory_space<vmem>>) attributes {dimension_semantics = [#tpu.dimension_semantics<parallel>, #tpu.dimension_semantics<arbitrary>], iteration_bounds = array<i64: 2, 2>, scalar_prefetch = 0 : i64, scratch_operands = 1 : i64, tpu.core_type = #tpu.core_type<tc>, window_params = [{transform_indices = @transform_0, window_bounds = array<i64: 1, 8, 16, 32>}, {transform_indices = @transform_1, window_bounds = array<i64: 1, 8, 1, 16>}, {transform_indices = @transform_2, window_bounds = array<i64: 1, 4, 16, 16>}, {pipeline_mode = #tpu.pipeline_mode<synchronous>, transform_indices = @transform_3, window_bounds = array<i64: 32, 256>}, {pipeline_mode = #tpu.pipeline_mode<synchronous>, transform_indices = @transform_4, window_bounds = array<i64: 1, 64>}, {pipeline_mode = #tpu.pipeline_mode<synchronous>, transform_indices = @transform_5, window_bounds = array<i64: 64, 32>}, {pipeline_mode = #tpu.pipeline_mode<synchronous>, transform_indices = @transform_6, window_bounds = array<i64: 1, 32>}, {transform_indices = @transform_7, window_bounds = array<i64: 1, 8, 16, 32>}]} {
    %c0 = arith.constant 0 : index
    %c0_0 = arith.constant 0 : index
    %c0_1 = arith.constant 0 : index
    %c0_2 = arith.constant 0 : index
    %0 = vector.load %arg2[%c0, %c0_0, %c0_1, %c0_2] : memref<1x8x16x32xbf16, #tpu.memory_space<vmem>>, vector<1x8x16x32xbf16>
    %1 = vector.shape_cast %0 : vector<1x8x16x32xbf16> to vector<8x16x32xbf16>
    %2 = vector.shape_cast %1 : vector<8x16x32xbf16> to vector<128x32xbf16>
    %c0_3 = arith.constant 0 : index
    %c0_4 = arith.constant 0 : index
    %3 = vector.load %arg5[%c0_3, %c0_4] : memref<32x256xbf16, #tpu.memory_space<vmem>>, vector<32x256xbf16>
    %cst = arith.constant dense<0.000000e+00> : vector<128x256xf32>
    %4 = tpu.matmul %2, %3, %cst {dimension_numbers = #tpu.dot_dimension_numbers<[1], [0], [0], [1], [0, 0, 1, 1], [], []>} : vector<128x32xbf16>, vector<32x256xbf16>, vector<128x256xf32> -> vector<128x256xf32>
    %5 = vector.extract_strided_slice %4 {offsets = [0, 0], sizes = [128, 64], strides = [1, 1]} : vector<128x256xf32> to vector<128x64xf32>
    %6 = arith.truncf %5 : vector<128x64xf32> to vector<128x64xbf16>
    %7 = vector.shape_cast %6 : vector<128x64xbf16> to vector<8x16x64xbf16>
    %8 = vector.extract_strided_slice %4 {offsets = [0, 64], sizes = [128, 64], strides = [1, 1]} : vector<128x256xf32> to vector<128x64xf32>
    %9 = arith.truncf %8 : vector<128x64xf32> to vector<128x64xbf16>
    %10 = vector.shape_cast %9 : vector<128x64xbf16> to vector<8x16x64xbf16>
    %11 = vector.extract_strided_slice %4 {offsets = [0, 128], sizes = [128, 64], strides = [1, 1]} : vector<128x256xf32> to vector<128x64xf32>
    %12 = arith.truncf %11 : vector<128x64xf32> to vector<128x64xbf16>
    %13 = vector.shape_cast %12 : vector<128x64xbf16> to vector<8x16x64xbf16>
    %14 = vector.extract_strided_slice %4 {offsets = [0, 192], sizes = [128, 64], strides = [1, 1]} : vector<128x256xf32> to vector<128x64xf32>
    %c0_5 = arith.constant 0 : index
    %c0_6 = arith.constant 0 : index
    %15 = vector.load %arg6[%c0_5, %c0_6] : memref<1x64xf32, #tpu.memory_space<vmem>>, vector<1x64xf32>
    %16 = vector.broadcast %15 : vector<1x64xf32> to vector<128x64xf32>
    %17 = arith.addf %14, %16 : vector<128x64xf32>
    %18 = arith.negf %17 : vector<128x64xf32>
    %19 = math.exp %18 : vector<128x64xf32>
    %cst_7 = arith.constant 1.000000e+00 : f32
    %20 = vector.broadcast %cst_7 : f32 to vector<128x64xf32>
    %21 = arith.addf %20, %19 : vector<128x64xf32>
    %22 = arith.divf %20, %21 : vector<128x64xf32>
    %c0_8 = arith.constant 0 : index
    %c0_9 = arith.constant 0 : index
    %c0_10 = arith.constant 0 : index
    %c0_11 = arith.constant 0 : index
    %23 = vector.load %arg3[%c0_8, %c0_9, %c0_10, %c0_11] : memref<1x8x1x16xbf16, #tpu.memory_space<vmem>>, vector<1x8x1x16xbf16>
    %24 = vector.shape_cast %23 : vector<1x8x1x16xbf16> to vector<8x1x16xbf16>
    %25 = arith.extf %24 : vector<8x1x16xbf16> to vector<8x1x16xf32>
    %26 = vector.extract_strided_slice %7 {offsets = [0, 0, 0], sizes = [8, 16, 16], strides = [1, 1, 1]} : vector<8x16x64xbf16> to vector<8x16x16xbf16>
    %27 = vector.extract_strided_slice %10 {offsets = [0, 0, 0], sizes = [8, 16, 16], strides = [1, 1, 1]} : vector<8x16x64xbf16> to vector<8x16x16xbf16>
    %28 = vector.extract_strided_slice %13 {offsets = [0, 0, 0], sizes = [8, 16, 16], strides = [1, 1, 1]} : vector<8x16x64xbf16> to vector<8x16x16xbf16>
    "tpu.trace_start"() <{level = 10 : i32, message = "tqd,tkd->tqk"}> : () -> ()
    %cst_12 = arith.constant dense<0.000000e+00> : vector<8x16x16xf32>
    %29 = tpu.matmul %26, %27, %cst_12 {dimension_numbers = #tpu.dot_dimension_numbers<[2], [2], [1], [1], [0, 0, 0, 1, 1, 1], [0], [0]>} : vector<8x16x16xbf16>, vector<8x16x16xbf16>, vector<8x16x16xf32> -> vector<8x16x16xf32>
    "tpu.trace_stop"() : () -> ()
    %cst_13 = arith.constant 2.500000e-01 : f32
    %30 = vector.broadcast %cst_13 : f32 to vector<8x16x16xf32>
    %31 = arith.mulf %29, %30 : vector<8x16x16xf32>
    %32 = vector.broadcast %25 : vector<8x1x16xf32> to vector<8x16x16xf32>
    %33 = arith.addf %31, %32 : vector<8x16x16xf32>
    %c0_14 = arith.constant 0 : index
    %c0_15 = arith.constant 0 : index
    %c0_16 = arith.constant 0 : index
    %c0_17 = arith.constant 0 : index
    %34 = vector.load %arg4[%c0_14, %c0_15, %c0_16, %c0_17] : memref<1x4x16x16xbf16, #tpu.memory_space<vmem>>, vector<1x1x16x16xbf16>
    %35 = vector.shape_cast %34 : vector<1x1x16x16xbf16> to vector<16x16xbf16>
    %36 = arith.extf %35 : vector<16x16xbf16> to vector<16x16xf32>
    %37 = vector.shape_cast %36 : vector<16x16xf32> to vector<1x16x16xf32>
    %38 = vector.broadcast %37 : vector<1x16x16xf32> to vector<8x16x16xf32>
    %39 = arith.addf %33, %38 : vector<8x16x16xf32>
    %cst_18 = arith.constant dense<0xFF800000> : vector<8x16xf32>
    %40 = vector.multi_reduction <maximumf>, %39, %cst_18 [2] : vector<8x16x16xf32> to vector<8x16xf32>
    %41 = vector.shape_cast %40 : vector<8x16xf32> to vector<8x16x1xf32>
    %42 = vector.broadcast %41 : vector<8x16x1xf32> to vector<8x16x16xf32>
    %43 = arith.subf %39, %42 : vector<8x16x16xf32>
    %44 = math.exp %43 : vector<8x16x16xf32>
    %cst_19 = arith.constant dense<0.000000e+00> : vector<8x16xf32>
    %45 = vector.multi_reduction <add>, %44, %cst_19 [2] : vector<8x16x16xf32> to vector<8x16xf32>
    %46 = vector.shape_cast %45 : vector<8x16xf32> to vector<8x16x1xf32>
    %47 = tpu.reciprocal %46 {approx = true} : vector<8x16x1xf32> -> vector<8x16x1xf32>
    %48 = vector.broadcast %47 : vector<8x16x1xf32> to vector<8x16x16xf32>
    %49 = arith.mulf %44, %48 : vector<8x16x16xf32>
    %50 = arith.truncf %49 : vector<8x16x16xf32> to vector<8x16x16xbf16>
    "tpu.trace_start"() <{level = 10 : i32, message = "tqk,tkd->tqd"}> : () -> ()
    %cst_20 = arith.constant dense<0.000000e+00> : vector<8x16x16xf32>
    %51 = tpu.matmul %50, %28, %cst_20 {dimension_numbers = #tpu.dot_dimension_numbers<[2], [1], [1], [2], [0, 0, 0, 1, 1, 2], [0], [0]>} : vector<8x16x16xbf16>, vector<8x16x16xbf16>, vector<8x16x16xf32> -> vector<8x16x16xf32>
    "tpu.trace_stop"() : () -> ()
    %52 = vector.shape_cast %51 : vector<8x16x16xf32> to vector<128x16xf32>
    %53 = vector.extract_strided_slice %22 {offsets = [0, 0], sizes = [128, 16], strides = [1, 1]} : vector<128x64xf32> to vector<128x16xf32>
    %54 = arith.mulf %52, %53 : vector<128x16xf32>
    %55 = arith.truncf %54 : vector<128x16xf32> to vector<128x16xbf16>
    %c0_21 = arith.constant 0 : index
    %c0_22 = arith.constant 0 : index
    %56 = vector.load %arg10[%c0_21, %c0_22] : memref<128x64xbf16, #tpu.memory_space<vmem>>, vector<128x16xbf16>
    tpu.vector_store %arg10[%c0_21, %c0_22], %55 {strides = array<i32>} : memref<128x64xbf16, #tpu.memory_space<vmem>>, vector<128x16xbf16>,
    %57 = vector.extract_strided_slice %7 {offsets = [0, 0, 16], sizes = [8, 16, 16], strides = [1, 1, 1]} : vector<8x16x64xbf16> to vector<8x16x16xbf16>
    %58 = vector.extract_strided_slice %10 {offsets = [0, 0, 16], sizes = [8, 16, 16], strides = [1, 1, 1]} : vector<8x16x64xbf16> to vector<8x16x16xbf16>
    %59 = vector.extract_strided_slice %13 {offsets = [0, 0, 16], sizes = [8, 16, 16], strides = [1, 1, 1]} : vector<8x16x64xbf16> to vector<8x16x16xbf16>
    "tpu.trace_start"() <{level = 10 : i32, message = "tqd,tkd->tqk"}> : () -> ()
    %cst_23 = arith.constant dense<0.000000e+00> : vector<8x16x16xf32>
    %60 = tpu.matmul %57, %58, %cst_23 {dimension_numbers = #tpu.dot_dimension_numbers<[2], [2], [1], [1], [0, 0, 0, 1, 1, 1], [0], [0]>} : vector<8x16x16xbf16>, vector<8x16x16xbf16>, vector<8x16x16xf32> -> vector<8x16x16xf32>
    "tpu.trace_stop"() : () -> ()
    %cst_24 = arith.constant 2.500000e-01 : f32
    %61 = vector.broadcast %cst_24 : f32 to vector<8x16x16xf32>
    %62 = arith.mulf %60, %61 : vector<8x16x16xf32>
    %63 = vector.broadcast %25 : vector<8x1x16xf32> to vector<8x16x16xf32>
    %64 = arith.addf %62, %63 : vector<8x16x16xf32>
    %c0_25 = arith.constant 0 : index
    %c1 = arith.constant 1 : index
    %c0_26 = arith.constant 0 : index
    %c0_27 = arith.constant 0 : index
    %65 = vector.load %arg4[%c0_25, %c1, %c0_26, %c0_27] : memref<1x4x16x16xbf16, #tpu.memory_space<vmem>>, vector<1x1x16x16xbf16>
    %66 = vector.shape_cast %65 : vector<1x1x16x16xbf16> to vector<16x16xbf16>
    %67 = arith.extf %66 : vector<16x16xbf16> to vector<16x16xf32>
    %68 = vector.shape_cast %67 : vector<16x16xf32> to vector<1x16x16xf32>
    %69 = vector.broadcast %68 : vector<1x16x16xf32> to vector<8x16x16xf32>
    %70 = arith.addf %64, %69 : vector<8x16x16xf32>
    %cst_28 = arith.constant dense<0xFF800000> : vector<8x16xf32>
    %71 = vector.multi_reduction <maximumf>, %70, %cst_28 [2] : vector<8x16x16xf32> to vector<8x16xf32>
    %72 = vector.shape_cast %71 : vector<8x16xf32> to vector<8x16x1xf32>
    %73 = vector.broadcast %72 : vector<8x16x1xf32> to vector<8x16x16xf32>
    %74 = arith.subf %70, %73 : vector<8x16x16xf32>
    %75 = math.exp %74 : vector<8x16x16xf32>
    %cst_29 = arith.constant dense<0.000000e+00> : vector<8x16xf32>
    %76 = vector.multi_reduction <add>, %75, %cst_29 [2] : vector<8x16x16xf32> to vector<8x16xf32>
    %77 = vector.shape_cast %76 : vector<8x16xf32> to vector<8x16x1xf32>
    %78 = tpu.reciprocal %77 {approx = true} : vector<8x16x1xf32> -> vector<8x16x1xf32>
    %79 = vector.broadcast %78 : vector<8x16x1xf32> to vector<8x16x16xf32>
    %80 = arith.mulf %75, %79 : vector<8x16x16xf32>
    %81 = arith.truncf %80 : vector<8x16x16xf32> to vector<8x16x16xbf16>
    "tpu.trace_start"() <{level = 10 : i32, message = "tqk,tkd->tqd"}> : () -> ()
    %cst_30 = arith.constant dense<0.000000e+00> : vector<8x16x16xf32>
    %82 = tpu.matmul %81, %59, %cst_30 {dimension_numbers = #tpu.dot_dimension_numbers<[2], [1], [1], [2], [0, 0, 0, 1, 1, 2], [0], [0]>} : vector<8x16x16xbf16>, vector<8x16x16xbf16>, vector<8x16x16xf32> -> vector<8x16x16xf32>
    "tpu.trace_stop"() : () -> ()
    %83 = vector.shape_cast %82 : vector<8x16x16xf32> to vector<128x16xf32>
    %84 = vector.extract_strided_slice %22 {offsets = [0, 16], sizes = [128, 16], strides = [1, 1]} : vector<128x64xf32> to vector<128x16xf32>
    %85 = arith.mulf %83, %84 : vector<128x16xf32>
    %86 = arith.truncf %85 : vector<128x16xf32> to vector<128x16xbf16>
    %c0_31 = arith.constant 0 : index
    %c16 = arith.constant 16 : index
    %87 = vector.load %arg10[%c0_31, %c16] : memref<128x64xbf16, #tpu.memory_space<vmem>>, vector<128x16xbf16>
    tpu.vector_store %arg10[%c0_31, %c16], %86 {strides = array<i32>} : memref<128x64xbf16, #tpu.memory_space<vmem>>, vector<128x16xbf16>,
    %88 = vector.extract_strided_slice %7 {offsets = [0, 0, 32], sizes = [8, 16, 16], strides = [1, 1, 1]} : vector<8x16x64xbf16> to vector<8x16x16xbf16>
    %89 = vector.extract_strided_slice %10 {offsets = [0, 0, 32], sizes = [8, 16, 16], strides = [1, 1, 1]} : vector<8x16x64xbf16> to vector<8x16x16xbf16>
    %90 = vector.extract_strided_slice %13 {offsets = [0, 0, 32], sizes = [8, 16, 16], strides = [1, 1, 1]} : vector<8x16x64xbf16> to vector<8x16x16xbf16>
    "tpu.trace_start"() <{level = 10 : i32, message = "tqd,tkd->tqk"}> : () -> ()
    %cst_32 = arith.constant dense<0.000000e+00> : vector<8x16x16xf32>
    %91 = tpu.matmul %88, %89, %cst_32 {dimension_numbers = #tpu.dot_dimension_numbers<[2], [2], [1], [1], [0, 0, 0, 1, 1, 1], [0], [0]>} : vector<8x16x16xbf16>, vector<8x16x16xbf16>, vector<8x16x16xf32> -> vector<8x16x16xf32>
    "tpu.trace_stop"() : () -> ()
    %cst_33 = arith.constant 2.500000e-01 : f32
    %92 = vector.broadcast %cst_33 : f32 to vector<8x16x16xf32>
    %93 = arith.mulf %91, %92 : vector<8x16x16xf32>
    %94 = vector.broadcast %25 : vector<8x1x16xf32> to vector<8x16x16xf32>
    %95 = arith.addf %93, %94 : vector<8x16x16xf32>
    %c0_34 = arith.constant 0 : index
    %c2 = arith.constant 2 : index
    %c0_35 = arith.constant 0 : index
    %c0_36 = arith.constant 0 : index
    %96 = vector.load %arg4[%c0_34, %c2, %c0_35, %c0_36] : memref<1x4x16x16xbf16, #tpu.memory_space<vmem>>, vector<1x1x16x16xbf16>
    %97 = vector.shape_cast %96 : vector<1x1x16x16xbf16> to vector<16x16xbf16>
    %98 = arith.extf %97 : vector<16x16xbf16> to vector<16x16xf32>
    %99 = vector.shape_cast %98 : vector<16x16xf32> to vector<1x16x16xf32>
    %100 = vector.broadcast %99 : vector<1x16x16xf32> to vector<8x16x16xf32>
    %101 = arith.addf %95, %100 : vector<8x16x16xf32>
    %cst_37 = arith.constant dense<0xFF800000> : vector<8x16xf32>
    %102 = vector.multi_reduction <maximumf>, %101, %cst_37 [2] : vector<8x16x16xf32> to vector<8x16xf32>
    %103 = vector.shape_cast %102 : vector<8x16xf32> to vector<8x16x1xf32>
    %104 = vector.broadcast %103 : vector<8x16x1xf32> to vector<8x16x16xf32>
    %105 = arith.subf %101, %104 : vector<8x16x16xf32>
    %106 = math.exp %105 : vector<8x16x16xf32>
    %cst_38 = arith.constant dense<0.000000e+00> : vector<8x16xf32>
    %107 = vector.multi_reduction <add>, %106, %cst_38 [2] : vector<8x16x16xf32> to vector<8x16xf32>
    %108 = vector.shape_cast %107 : vector<8x16xf32> to vector<8x16x1xf32>
    %109 = tpu.reciprocal %108 {approx = true} : vector<8x16x1xf32> -> vector<8x16x1xf32>
    %110 = vector.broadcast %109 : vector<8x16x1xf32> to vector<8x16x16xf32>
    %111 = arith.mulf %106, %110 : vector<8x16x16xf32>
    %112 = arith.truncf %111 : vector<8x16x16xf32> to vector<8x16x16xbf16>
    "tpu.trace_start"() <{level = 10 : i32, message = "tqk,tkd->tqd"}> : () -> ()
    %cst_39 = arith.constant dense<0.000000e+00> : vector<8x16x16xf32>
    %113 = tpu.matmul %112, %90, %cst_39 {dimension_numbers = #tpu.dot_dimension_numbers<[2], [1], [1], [2], [0, 0, 0, 1, 1, 2], [0], [0]>} : vector<8x16x16xbf16>, vector<8x16x16xbf16>, vector<8x16x16xf32> -> vector<8x16x16xf32>
    "tpu.trace_stop"() : () -> ()
    %114 = vector.shape_cast %113 : vector<8x16x16xf32> to vector<128x16xf32>
    %115 = vector.extract_strided_slice %22 {offsets = [0, 32], sizes = [128, 16], strides = [1, 1]} : vector<128x64xf32> to vector<128x16xf32>
    %116 = arith.mulf %114, %115 : vector<128x16xf32>
    %117 = arith.truncf %116 : vector<128x16xf32> to vector<128x16xbf16>
    %c0_40 = arith.constant 0 : index
    %c32 = arith.constant 32 : index
    %118 = vector.load %arg10[%c0_40, %c32] : memref<128x64xbf16, #tpu.memory_space<vmem>>, vector<128x16xbf16>
    tpu.vector_store %arg10[%c0_40, %c32], %117 {strides = array<i32>} : memref<128x64xbf16, #tpu.memory_space<vmem>>, vector<128x16xbf16>,
    %119 = vector.extract_strided_slice %7 {offsets = [0, 0, 48], sizes = [8, 16, 16], strides = [1, 1, 1]} : vector<8x16x64xbf16> to vector<8x16x16xbf16>
    %120 = vector.extract_strided_slice %10 {offsets = [0, 0, 48], sizes = [8, 16, 16], strides = [1, 1, 1]} : vector<8x16x64xbf16> to vector<8x16x16xbf16>
    %121 = vector.extract_strided_slice %13 {offsets = [0, 0, 48], sizes = [8, 16, 16], strides = [1, 1, 1]} : vector<8x16x64xbf16> to vector<8x16x16xbf16>
    "tpu.trace_start"() <{level = 10 : i32, message = "tqd,tkd->tqk"}> : () -> ()
    %cst_41 = arith.constant dense<0.000000e+00> : vector<8x16x16xf32>
    %122 = tpu.matmul %119, %120, %cst_41 {dimension_numbers = #tpu.dot_dimension_numbers<[2], [2], [1], [1], [0, 0, 0, 1, 1, 1], [0], [0]>} : vector<8x16x16xbf16>, vector<8x16x16xbf16>, vector<8x16x16xf32> -> vector<8x16x16xf32>
    "tpu.trace_stop"() : () -> ()
    %cst_42 = arith.constant 2.500000e-01 : f32
    %123 = vector.broadcast %cst_42 : f32 to vector<8x16x16xf32>
    %124 = arith.mulf %122, %123 : vector<8x16x16xf32>
    %125 = vector.broadcast %25 : vector<8x1x16xf32> to vector<8x16x16xf32>
    %126 = arith.addf %124, %125 : vector<8x16x16xf32>
    %c0_43 = arith.constant 0 : index
    %c3 = arith.constant 3 : index
    %c0_44 = arith.constant 0 : index
    %c0_45 = arith.constant 0 : index
    %127 = vector.load %arg4[%c0_43, %c3, %c0_44, %c0_45] : memref<1x4x16x16xbf16, #tpu.memory_space<vmem>>, vector<1x1x16x16xbf16>
    %128 = vector.shape_cast %127 : vector<1x1x16x16xbf16> to vector<16x16xbf16>
    %129 = arith.extf %128 : vector<16x16xbf16> to vector<16x16xf32>
    %130 = vector.shape_cast %129 : vector<16x16xf32> to vector<1x16x16xf32>
    %131 = vector.broadcast %130 : vector<1x16x16xf32> to vector<8x16x16xf32>
    %132 = arith.addf %126, %131 : vector<8x16x16xf32>
    %cst_46 = arith.constant dense<0xFF800000> : vector<8x16xf32>
    %133 = vector.multi_reduction <maximumf>, %132, %cst_46 [2] : vector<8x16x16xf32> to vector<8x16xf32>
    %134 = vector.shape_cast %133 : vector<8x16xf32> to vector<8x16x1xf32>
    %135 = vector.broadcast %134 : vector<8x16x1xf32> to vector<8x16x16xf32>
    %136 = arith.subf %132, %135 : vector<8x16x16xf32>
    %137 = math.exp %136 : vector<8x16x16xf32>
    %cst_47 = arith.constant dense<0.000000e+00> : vector<8x16xf32>
    %138 = vector.multi_reduction <add>, %137, %cst_47 [2] : vector<8x16x16xf32> to vector<8x16xf32>
    %139 = vector.shape_cast %138 : vector<8x16xf32> to vector<8x16x1xf32>
    %140 = tpu.reciprocal %139 {approx = true} : vector<8x16x1xf32> -> vector<8x16x1xf32>
    %141 = vector.broadcast %140 : vector<8x16x1xf32> to vector<8x16x16xf32>
    %142 = arith.mulf %137, %141 : vector<8x16x16xf32>
    %143 = arith.truncf %142 : vector<8x16x16xf32> to vector<8x16x16xbf16>
    "tpu.trace_start"() <{level = 10 : i32, message = "tqk,tkd->tqd"}> : () -> ()
    %cst_48 = arith.constant dense<0.000000e+00> : vector<8x16x16xf32>
    %144 = tpu.matmul %143, %121, %cst_48 {dimension_numbers = #tpu.dot_dimension_numbers<[2], [1], [1], [2], [0, 0, 0, 1, 1, 2], [0], [0]>} : vector<8x16x16xbf16>, vector<8x16x16xbf16>, vector<8x16x16xf32> -> vector<8x16x16xf32>
    "tpu.trace_stop"() : () -> ()
    %145 = vector.shape_cast %144 : vector<8x16x16xf32> to vector<128x16xf32>
    %146 = vector.extract_strided_slice %22 {offsets = [0, 48], sizes = [128, 16], strides = [1, 1]} : vector<128x64xf32> to vector<128x16xf32>
    %147 = arith.mulf %145, %146 : vector<128x16xf32>
    %148 = arith.truncf %147 : vector<128x16xf32> to vector<128x16xbf16>
    %c0_49 = arith.constant 0 : index
    %c48 = arith.constant 48 : index
    %149 = vector.load %arg10[%c0_49, %c48] : memref<128x64xbf16, #tpu.memory_space<vmem>>, vector<128x16xbf16>
    tpu.vector_store %arg10[%c0_49, %c48], %148 {strides = array<i32>} : memref<128x64xbf16, #tpu.memory_space<vmem>>, vector<128x16xbf16>,
    %c0_50 = arith.constant 0 : index
    %c0_51 = arith.constant 0 : index
    %150 = vector.load %arg10[%c0_50, %c0_51] : memref<128x64xbf16, #tpu.memory_space<vmem>>, vector<128x64xbf16>
    %c0_52 = arith.constant 0 : index
    %c0_53 = arith.constant 0 : index
    %151 = vector.load %arg7[%c0_52, %c0_53] : memref<64x32xbf16, #tpu.memory_space<vmem>>, vector<64x32xbf16>
    %cst_54 = arith.constant dense<0.000000e+00> : vector<128x32xf32>
    %152 = tpu.matmul %150, %151, %cst_54 {dimension_numbers = #tpu.dot_dimension_numbers<[1], [0], [0], [1], [0, 0, 1, 1], [], []>} : vector<128x64xbf16>, vector<64x32xbf16>, vector<128x32xf32> -> vector<128x32xf32>
    %c0_55 = arith.constant 0 : index
    %c0_56 = arith.constant 0 : index
    %153 = vector.load %arg8[%c0_55, %c0_56] : memref<1x32xf32, #tpu.memory_space<vmem>>, vector<1x32xf32>
    %154 = vector.broadcast %153 : vector<1x32xf32> to vector<128x32xf32>
    %155 = arith.addf %152, %154 : vector<128x32xf32>
    %156 = vector.shape_cast %155 : vector<128x32xf32> to vector<8x16x32xf32>
    %c0_57 = arith.constant 0 : index
    %c0_58 = arith.constant 0 : index
    %c0_59 = arith.constant 0 : index
    %c0_60 = arith.constant 0 : index
    %157 = vector.load %arg9[%c0_57, %c0_58, %c0_59, %c0_60] : memref<1x8x16x32xf32, #tpu.memory_space<vmem>>, vector<1x8x16x32xf32>
    %158 = vector.shape_cast %157 : vector<1x8x16x32xf32> to vector<8x16x32xf32>
    %159 = vector.shape_cast %156 : vector<8x16x32xf32> to vector<1x8x16x32xf32>
    tpu.vector_store %arg9[%c0_57, %c0_58, %c0_59, %c0_60], %159 {strides = array<i32>} : memref<1x8x16x32xf32, #tpu.memory_space<vmem>>, vector<1x8x16x32xf32>,
    return
  }
  func.func @transform_0(%arg0: i32, %arg1: i32) -> (i32, i32, i32, i32) {
    %c0_i32 = arith.constant 0 : i32
    %c0_i32_0 = arith.constant 0 : i32
    %c0_i32_1 = arith.constant 0 : i32
    return %arg0, %arg1, %c0_i32, %c0_i32_0 : i32, i32, i32, i32
  }
  func.func @transform_1(%arg0: i32, %arg1: i32) -> (i32, i32, i32, i32) {
    %c0_i32 = arith.constant 0 : i32
    %c0_i32_0 = arith.constant 0 : i32
    %c0_i32_1 = arith.constant 0 : i32
    return %arg0, %arg1, %c0_i32, %c0_i32_0 : i32, i32, i32, i32
  }
  func.func @transform_2(%arg0: i32, %arg1: i32) -> (i32, i32, i32, i32) {
    %c0_i32 = arith.constant 0 : i32
    %c0_i32_0 = arith.constant 0 : i32
    %c0_i32_1 = arith.constant 0 : i32
    %c0_i32_2 = arith.constant 0 : i32
    return %arg0, %c0_i32, %c0_i32_0, %c0_i32_1 : i32, i32, i32, i32
  }
  func.func @transform_3(%arg0: i32, %arg1: i32) -> (i32, i32) {
    %c0_i32 = arith.constant 0 : i32
    %c0_i32_0 = arith.constant 0 : i32
    %c0_i32_1 = arith.constant 0 : i32
    return %c0_i32, %c0_i32_0 : i32, i32
  }
  func.func @transform_4(%arg0: i32, %arg1: i32) -> (i32, i32) {
    %c0_i32 = arith.constant 0 : i32
    %c0_i32_0 = arith.constant 0 : i32
    %c0_i32_1 = arith.constant 0 : i32
    return %c0_i32, %c0_i32_0 : i32, i32
  }
  func.func @transform_5(%arg0: i32, %arg1: i32) -> (i32, i32) {
    %c0_i32 = arith.constant 0 : i32
    %c0_i32_0 = arith.constant 0 : i32
    %c0_i32_1 = arith.constant 0 : i32
    return %c0_i32, %c0_i32_0 : i32, i32
  }
  func.func @transform_6(%arg0: i32, %arg1: i32) -> (i32, i32) {
    %c0_i32 = arith.constant 0 : i32
    %c0_i32_0 = arith.constant 0 : i32
    %c0_i32_1 = arith.constant 0 : i32
    return %c0_i32, %c0_i32_0 : i32, i32
  }
  func.func @transform_7(%arg0: i32, %arg1: i32) -> (i32, i32, i32, i32) {
    %c0_i32 = arith.constant 0 : i32
    %c0_i32_0 = arith.constant 0 : i32
    %c0_i32_1 = arith.constant 0 : i32
    return %arg0, %arg1, %c0_i32, %c0_i32_0 : i32, i32, i32, i32
  }
}

</mosaic_0001>

<llo_original>
// kernel: tpu_custom_call.1
$region0: #{tpu_custom_call.1}
  #allocation0 [shape = 'u32[]', space=smem, size = 0x4, offset = 0x4, fixed_abs, tag = 'smem constant byte address 0x4 - core index']
  #allocation1 [shape = 'u32[144,128]{1,0:T(1,128)}', space=vmem, size = 0x12000, scoped, tag = 'internal scratch']
  #allocation2 [shape = 'bf16[128,64]{1,0:T(16,128)(2,1)}', space=vmem, size = 0x8000, scoped, tag = 'scratch operand']
  %s0 = inlined_call_operand.hbm [shape: bf16[2,16,16,32], index: 0, kind: input, shape index: {}]
  %s1 = inlined_call_operand.vmem [shape: bf16[2,16,1,16], index: 1, kind: input, shape index: {}]
  %s2 = inlined_call_operand.vmem [shape: bf16[2,4,16,16], index: 2, kind: input, shape index: {}]
  %s3 = inlined_call_operand.vmem [shape: bf16[32,256], index: 3, kind: input, shape index: {}]
  %s4 = inlined_call_operand.vmem [shape: f32[1,64], index: 4, kind: input, shape index: {}]
  %s5 = inlined_call_operand.vmem [shape: bf16[64,32], index: 5, kind: input, shape index: {}]
  %s6 = inlined_call_operand.vmem [shape: f32[1,32], index: 6, kind: input, shape index: {}]
  %s7 = inlined_call_operand.hbm [shape: f32[2,16,16,32], index: 7, kind: output, shape index: {}]
  %s8 = sld [smem:[#allocation0]]
  $region65: #{tpu_custom_call.1} parent=0
    _
  %s10 = ssub.s32 1, %s8
  %s11 = scalar_select 0, %s10, %s8
  $region1: #{tpu_custom_call.1} parent=0
    #allocation3 [shape = 'u8[65536]{0}', space=vmem, size = 0x10000, scoped, tag = 'input window, operand 0']
    #allocation4 [shape = 's32[2]{0}', space=sflag, size = 0x8, scoped, tag = 'scoped memory for tpu_custom_call.1']
    #allocation5 [shape = 's32[2]{0}', space=sflag, size = 0x8, scoped, tag = 'scoped memory for tpu_custom_call.1']
    #allocation6 [shape = 'u8[131072]{0}', space=vmem, size = 0x20000, scoped, tag = 'output window, operand 0']
    %12 = vsyncpa [#allocation4], 0
    %s13 = scalar_lea.sflag [#allocation4], 1
    %14 = vsyncpa %s13, 0
    %15 = vsyncpa [#allocation5], 0
    %s16 = scalar_lea.sflag [#allocation5], 1
    %17 = vsyncpa %s16, 0
    loop: start=0, step=1, limit=6
    $region2: #{tpu_custom_call.1} parent=1 // loop_pre_header
      _
    $region3: #{tpu_custom_call.1} parent=1 // loop_header
      %s19 = sphi 0, %s23
      %p20 = scmp.ge.s32.totalorder %s19, 6
      %s26 = sphi 0, %s38
      %s27 = sphi 0, %s34
      %s28 = sphi 0, %s26
      %s29 = sphi 0, %s27
      %s30 = sphi 0, %s28
      %s31 = sphi 0, %s29
      %s43 = sphi 0, %s45
      %s46 = sphi 0, %s43
      %s47 = sphi 0, %s46
      %s63 = sphi 0, %s47
      %s71 = sphi 0, %s73
      %s74 = sphi 0, %s71
      %s75 = sphi 0, %s74
      %s91 = sphi 0, %s75
      %s97 = sphi 0, %s99
      %s100 = sphi 0, %s97
      %s101 = sphi 0, %s100
      %s117 = sphi 0, %s101
      %s121 = sphi 0, %s121
      %s123 = sphi 0, %s121
      %s124 = sphi 0, %s123
      %s138 = sphi 0, %s124
      %s142 = sphi 0, %s142
      %s144 = sphi 0, %s142
      %s145 = sphi 0, %s144
      %s159 = sphi 0, %s145
      %s163 = sphi 0, %s163
      %s165 = sphi 0, %s163
      %s166 = sphi 0, %s165
      %s180 = sphi 0, %s166
      %s184 = sphi 0, %s184
      %s186 = sphi 0, %s184
      %s187 = sphi 0, %s186
      %s201 = sphi 0, %s187
      %s209 = sphi 0, %s211
      %s212 = sphi 0, %s209
      %s213 = sphi 0, %s212
      %s229 = sphi 0, %s213
    $region4: #{tpu_custom_call.1} parent=1 // loop_header_branch
      %22 = sbr.rel (%p20) target = $region8
    $region5: #{tpu_custom_call.1} parent=1 // loop_body
      %s24 = ssub.s32 %s19, 1
      %s25 = ssub.s32 %s19, 2
      %s32 = sadd.s32 1, %s27
      %p33 = scmp.ge.s32.totalorder %s32, 2
      %s34 = scalar_select %p33, 0, %s32
      %s35 = sadd.s32 1, %s26
      %s36 = scalar_select %p33, %s35, %s26
      %p37 = scmp.ge.s32.totalorder %s36, 2
      %s38 = scalar_select %p37, 0, %s36
      %s39 = ssub.s32 %s26, %s38
      %s40 = ssub.s32 %s27, %s34
      %s41 = sor.u32 %s39, %s40
      %p42 = scmp.eq.s32.totalorder %s41, 0
      %s44 = sadd.s32 %s43, 1
      %s45 = scalar_select %p42, %s43, %s44
      %p48 = pneg %p42
      %p49 = scmp.eq.s32.totalorder %s19, 3
      %p50 = por %p48, %p49
      %p51 = scmp.ne.s32.totalorder %s43, %s46
      %p52 = scmp.eq.s32.totalorder %s19, 0
      %p53 = por %p51, %p52
      %p54 = scmp.ne.s32.totalorder %s43, %s46
      %p55 = scmp.eq.s32.totalorder %s24, 3
      %p56 = por %p54, %p55
      %p57 = scmp.ne.s32.totalorder %s46, %s47
      %p58 = scmp.eq.s32.totalorder %s24, 0
      %p59 = por %p57, %p58
      %p60 = scmp.ne.s32.totalorder %s46, %s47
      %p61 = scmp.eq.s32.totalorder %s25, 3
      %p62 = por %p60, %p61
      %p64 = scmp.ne.s32.totalorder %s47, %s63
      %p65 = scmp.eq.s32.totalorder %s25, 0
      %p66 = por %p64, %p65
      %s67 = ssub.s32 %s26, %s38
      %s68 = ssub.s32 %s27, %s34
      %s69 = sor.u32 %s67, %s68
      %p70 = scmp.eq.s32.totalorder %s69, 0
      %s72 = sadd.s32 %s71, 1
      %s73 = scalar_select %p70, %s71, %s72
      %p76 = pneg %p70
      %p77 = scmp.eq.s32.totalorder %s19, 3
      %p78 = por %p76, %p77
      %p79 = scmp.ne.s32.totalorder %s71, %s74
      %p80 = scmp.eq.s32.totalorder %s19, 0
      %p81 = por %p79, %p80
      %p82 = scmp.ne.s32.totalorder %s71, %s74
      %p83 = scmp.eq.s32.totalorder %s24, 3
      %p84 = por %p82, %p83
      %p85 = scmp.ne.s32.totalorder %s74, %s75
      %p86 = scmp.eq.s32.totalorder %s24, 0
      %p87 = por %p85, %p86
      %p88 = scmp.ne.s32.totalorder %s74, %s75
      %p89 = scmp.eq.s32.totalorder %s25, 3
      %p90 = por %p88, %p89
      %p92 = scmp.ne.s32.totalorder %s75, %s91
      %p93 = scmp.eq.s32.totalorder %s25, 0
      %p94 = por %p92, %p93
      %s95 = ssub.s32 %s26, %s38
      %p96 = scmp.eq.s32.totalorder %s95, 0
      %s98 = sadd.s32 %s97, 1
      %s99 = scalar_select %p96, %s97, %s98
      %p102 = pneg %p96
      %p103 = scmp.eq.s32.totalorder %s19, 3
      %p104 = por %p102, %p103
      %p105 = scmp.ne.s32.totalorder %s97, %s100
      %p106 = scmp.eq.s32.totalorder %s19, 0
      %p107 = por %p105, %p106
      %p108 = scmp.ne.s32.totalorder %s97, %s100
      %p109 = scmp.eq.s32.totalorder %s24, 3
      %p110 = por %p108, %p109
      %p111 = scmp.ne.s32.totalorder %s100, %s101
      %p112 = scmp.eq.s32.totalorder %s24, 0
      %p113 = por %p111, %p112
      %p114 = scmp.ne.s32.totalorder %s100, %s101
      %p115 = scmp.eq.s32.totalorder %s25, 3
      %p116 = por %p114, %p115
      %p118 = scmp.ne.s32.totalorder %s101, %s117
      %p119 = scmp.eq.s32.totalorder %s25, 0
      %p120 = por %p118, %p119
      %s122 = sadd.s32 %s121, 1
      %p125 = scmp.eq.s32.totalorder %s19, 3
      %p126 = scmp.ne.s32.totalorder %s121, %s123
      %p127 = scmp.eq.s32.totalorder %s19, 0
      %p128 = por %p126, %p127
      %p129 = scmp.ne.s32.totalorder %s121, %s123
      %p130 = scmp.eq.s32.totalorder %s24, 3
      %p131 = por %p129, %p130
      %p132 = scmp.ne.s32.totalorder %s123, %s124
      %p133 = scmp.eq.s32.totalorder %s24, 0
      %p134 = por %p132, %p133
      %p135 = scmp.ne.s32.totalorder %s123, %s124
      %p136 = scmp.eq.s32.totalorder %s25, 3
      %p137 = por %p135, %p136
      %p139 = scmp.ne.s32.totalorder %s124, %s138
      %p140 = scmp.eq.s32.totalorder %s25, 0
      %p141 = por %p139, %p140
      %s143 = sadd.s32 %s142, 1
      %p146 = scmp.eq.s32.totalorder %s19, 3
      %p147 = scmp.ne.s32.totalorder %s142, %s144
      %p148 = scmp.eq.s32.totalorder %s19, 0
      %p149 = por %p147, %p148
      %p150 = scmp.ne.s32.totalorder %s142, %s144
      %p151 = scmp.eq.s32.totalorder %s24, 3
      %p152 = por %p150, %p151
      %p153 = scmp.ne.s32.totalorder %s144, %s145
      %p154 = scmp.eq.s32.totalorder %s24, 0
      %p155 = por %p153, %p154
      %p156 = scmp.ne.s32.totalorder %s144, %s145
      %p157 = scmp.eq.s32.totalorder %s25, 3
      %p158 = por %p156, %p157
      %p160 = scmp.ne.s32.totalorder %s145, %s159
      %p161 = scmp.eq.s32.totalorder %s25, 0
      %p162 = por %p160, %p161
      %s164 = sadd.s32 %s163, 1
      %p167 = scmp.eq.s32.totalorder %s19, 3
      %p168 = scmp.ne.s32.totalorder %s163, %s165
      %p169 = scmp.eq.s32.totalorder %s19, 0
      %p170 = por %p168, %p169
      %p171 = scmp.ne.s32.totalorder %s163, %s165
      %p172 = scmp.eq.s32.totalorder %s24, 3
      %p173 = por %p171, %p172
      %p174 = scmp.ne.s32.totalorder %s165, %s166
      %p175 = scmp.eq.s32.totalorder %s24, 0
      %p176 = por %p174, %p175
      %p177 = scmp.ne.s32.totalorder %s165, %s166
      %p178 = scmp.eq.s32.totalorder %s25, 3
      %p179 = por %p177, %p178
      %p181 = scmp.ne.s32.totalorder %s166, %s180
      %p182 = scmp.eq.s32.totalorder %s25, 0
      %p183 = por %p181, %p182
      %s185 = sadd.s32 %s184, 1
      %p188 = scmp.eq.s32.totalorder %s19, 3
      %p189 = scmp.ne.s32.totalorder %s184, %s186
      %p190 = scmp.eq.s32.totalorder %s19, 0
      %p191 = por %p189, %p190
      %p192 = scmp.ne.s32.totalorder %s184, %s186
      %p193 = scmp.eq.s32.totalorder %s24, 3
      %p194 = por %p192, %p193
      %p195 = scmp.ne.s32.totalorder %s186, %s187
      %p196 = scmp.eq.s32.totalorder %s24, 0
      %p197 = por %p195, %p196
      %p198 = scmp.ne.s32.totalorder %s186, %s187
      %p199 = scmp.eq.s32.totalorder %s25, 3
      %p200 = por %p198, %p199
      %p202 = scmp.ne.s32.totalorder %s187, %s201
      %p203 = scmp.eq.s32.totalorder %s25, 0
      %p204 = por %p202, %p203
      %s205 = ssub.s32 %s26, %s38
      %s206 = ssub.s32 %s27, %s34
      %s207 = sor.u32 %s205, %s206
      %p208 = scmp.eq.s32.totalorder %s207, 0
      %s210 = sadd.s32 %s209, 1
      %s211 = scalar_select %p208, %s209, %s210
      %p214 = pneg %p208
      %p215 = scmp.eq.s32.totalorder %s19, 3
      %p216 = por %p214, %p215
      %p217 = scmp.ne.s32.totalorder %s209, %s212
      %p218 = scmp.eq.s32.totalorder %s19, 0
      %p219 = por %p217, %p218
      %p220 = scmp.ne.s32.totalorder %s209, %s212
      %p221 = scmp.eq.s32.totalorder %s24, 3
      %p222 = por %p220, %p221
      %p223 = scmp.ne.s32.totalorder %s212, %s213
      %p224 = scmp.eq.s32.totalorder %s24, 0
      %p225 = por %p223, %p224
      %p226 = scmp.ne.s32.totalorder %s212, %s213
      %p227 = scmp.eq.s32.totalorder %s25, 3
      %p228 = por %p226, %p227
      %p230 = scmp.ne.s32.totalorder %s213, %s229
      %p231 = scmp.eq.s32.totalorder %s25, 0
      %p232 = por %p230, %p231
      %p233 = scmp.le.s32.totalorder 1, %s19
      %p234 = scmp.lt.s32.totalorder %s19, 5
      %p235 = pnand %p233, %p234
      %p236 = pneg %p235
      // Predicated region
      $region9: #{tpu_custom_call.1} parent=5 // pred_check
        _
      $region10: #{tpu_custom_call.1} parent=5 // pred_check_branch
        %238 = sbr.rel (%p235) target = $region12
      $region11: #{tpu_custom_call.1} parent=5 // pred_region
        %s239 = ssub.s32 %s19, 1
        // Predicated region
        $region13: #{tpu_custom_call.1} parent=11 // pred_check
          %p240 = pneg %p134
        $region14: #{tpu_custom_call.1} parent=11 // pred_check_branch
          %242 = sbr.rel (%p240) target = $region16
        $region15: #{tpu_custom_call.1} parent=11 // pred_region
          _
        $region16: #{tpu_custom_call.1} parent=11 // pred_fallthru
          _
        // Predicated region
        $region17: #{tpu_custom_call.1} parent=11 // pred_check
          %p243 = pneg %p155
        $region18: #{tpu_custom_call.1} parent=11 // pred_check_branch
          %245 = sbr.rel (%p243) target = $region20
        $region19: #{tpu_custom_call.1} parent=11 // pred_region
          _
        $region20: #{tpu_custom_call.1} parent=11 // pred_fallthru
          _
        // Predicated region
        $region21: #{tpu_custom_call.1} parent=11 // pred_check
          %p246 = pneg %p176
        $region22: #{tpu_custom_call.1} parent=11 // pred_check_branch
          %248 = sbr.rel (%p246) target = $region24
        $region23: #{tpu_custom_call.1} parent=11 // pred_region
          _
        $region24: #{tpu_custom_call.1} parent=11 // pred_fallthru
          _
        // Predicated region
        $region25: #{tpu_custom_call.1} parent=11 // pred_check
          %p249 = pneg %p197
        $region26: #{tpu_custom_call.1} parent=11 // pred_check_branch
          %251 = sbr.rel (%p249) target = $region28
        $region27: #{tpu_custom_call.1} parent=11 // pred_region
          _
        $region28: #{tpu_custom_call.1} parent=11 // pred_fallthru
          _
      $region12: #{tpu_custom_call.1} parent=5 // pred_fallthru
        _
      %p252 = scmp.lt.s32.totalorder %s19, 4
      // Predicated region
      $region29: #{tpu_custom_call.1} parent=5 // pred_check
        %p253 = pneg %p252
      $region30: #{tpu_custom_call.1} parent=5 // pred_check_branch
        %255 = sbr.rel (%p253) target = $region32
      $region31: #{tpu_custom_call.1} parent=5 // pred_region
        // Predicated region
        $region33: #{tpu_custom_call.1} parent=31 // pred_check
          %p256 = pneg %p53
        $region34: #{tpu_custom_call.1} parent=31 // pred_check_branch
          %258 = sbr.rel (%p256) target = $region36
        $region35: #{tpu_custom_call.1} parent=31 // pred_region
          %s259 = sand.u32 %s43, 1
          %s260 = scalar_lea.sflag [#allocation4], %s259
          %s261 = sand.u32 %s43, 1
          %s262 = smul.addr %s261, 64
          %s263 = scalar_lea.vmem [#allocation3], %s262
          %s264 = smul.u32 8, %s27
          %s266 = ssub.s32 1024, 1024
          %267 = vsyncadd %s260, %s266
          %s268 = smul.addr %s264, 2
          %s269 = smul.addr %s26, 32
          %s270 = sadd.s32 %s268, %s269
          %s271 = smul.addr %s270, 64
          %s272 = scalar_lea.hbm %s0, %s271
          %s273 = sshll.u32 %s263, 4
          %s274 = int_to_ptr.vmem [resolvable:$true] %s273
          %279 = dma.hbm_to_vmem [thread:$0]  %s272, 1024, %s274, %s260, 64, 64, 4
        $region36: #{tpu_custom_call.1} parent=31 // pred_fallthru
          _
        // Predicated region
        $region37: #{tpu_custom_call.1} parent=31 // pred_check
          %p280 = pneg %p81
        $region38: #{tpu_custom_call.1} parent=31 // pred_check_branch
          %282 = sbr.rel (%p280) target = $region40
        $region39: #{tpu_custom_call.1} parent=31 // pred_region
          %s283 = smul.u32 8, %s27
          %p284 = scmp.lt.s32.totalorder %s26, 1
          %s285 = scalar_select %p284, %s26, 1
          %p286 = scmp.lt.s32.totalorder %s283, 15
          %s287 = scalar_select %p286, %s283, 15
          %s288 = smul.addr %s285, 16
          %s289 = sadd.s32 %s287, %s288
          %s290 = scalar_lea.vmem %s1, %s289
          %s291 = smul.u32 8, %s27
        $region40: #{tpu_custom_call.1} parent=31 // pred_fallthru
          _
        // Predicated region
        $region41: #{tpu_custom_call.1} parent=31 // pred_check
          %p292 = pneg %p107
        $region42: #{tpu_custom_call.1} parent=31 // pred_check_branch
          %294 = sbr.rel (%p292) target = $region44
        $region43: #{tpu_custom_call.1} parent=31 // pred_region
          %p295 = scmp.lt.s32.totalorder %s26, 1
          %s296 = scalar_select %p295, %s26, 1
          %s297 = smul.addr %s296, 8
          %s298 = smul.addr %s297, 4
          %s299 = scalar_lea.vmem %s2, %s298
        $region44: #{tpu_custom_call.1} parent=31 // pred_fallthru
          _
      $region32: #{tpu_custom_call.1} parent=5 // pred_fallthru
        _
      %p300 = scmp.le.s32.totalorder 1, %s19
      %p301 = scmp.lt.s32.totalorder %s19, 5
      %p302 = pnand %p300, %p301
      %p303 = pneg %p302
      // Predicated region
      $region45: #{tpu_custom_call.1} parent=5 // pred_check
        _
      $region46: #{tpu_custom_call.1} parent=5 // pred_check_branch
        %305 = sbr.rel (%p302) target = $region48
      $region47: #{tpu_custom_call.1} parent=5 // pred_region
        %s306 = ssub.s32 %s19, 1
        %s307 = sand.u32 %s46, 1
        %s308 = scalar_lea.sflag [#allocation4], %s307
        %s309 = sand.u32 %s46, 1
        %s310 = smul.addr %s309, 64
        %s311 = scalar_lea.vmem [#allocation3], %s310
        // Predicated region
        $region49: #{tpu_custom_call.1} parent=47 // pred_check
          %p312 = pneg %p59
        $region50: #{tpu_custom_call.1} parent=47 // pred_check_branch
          %314 = sbr.rel (%p312) target = $region52
        $region51: #{tpu_custom_call.1} parent=47 // pred_region
          %315 = dma.done %s308, 1024
        $region52: #{tpu_custom_call.1} parent=47 // pred_fallthru
          _
        %s316 = sand.u32 %s46, 1
        %s317 = scalar_lea.sflag [#allocation4], %s316
        %s318 = sand.u32 %s46, 1
        %s319 = smul.addr %s318, 64
        %s320 = scalar_lea.vmem [#allocation3], %s319
        %p321 = pneg %p59
        %p322 = pneg %p56
        %s323 = smul.u32 8, %s29
        %p324 = scmp.lt.s32.totalorder %s28, 1
        %s325 = scalar_select %p324, %s28, 1
        %p326 = scmp.lt.s32.totalorder %s323, 15
        %s327 = scalar_select %p326, %s323, 15
        %s328 = smul.addr %s325, 16
        %s329 = sadd.s32 %s327, %s328
        %s330 = scalar_lea.vmem %s1, %s329
        %p331 = pneg %p87
        %p332 = pneg %p84
        %p333 = scmp.lt.s32.totalorder %s28, 1
        %s334 = scalar_select %p333, %s28, 1
        %s335 = smul.addr %s334, 8
        %s336 = smul.addr %s335, 4
        %s337 = scalar_lea.vmem %s2, %s336
        %p338 = pneg %p113
        %p339 = pneg %p110
        %p340 = pneg %p134
        %p341 = pneg %p131
        %p342 = pneg %p155
        %p343 = pneg %p152
        %p344 = pneg %p176
        %p345 = pneg %p173
        %p346 = pneg %p197
        %p347 = pneg %p194
        %p348 = pneg %p225
        %p349 = pneg %p222
        %s350 = sand.u32 %s212, 1
        %s351 = scalar_lea.sflag [#allocation5], %s350
        %s352 = sand.u32 %s212, 1
        %s353 = smul.addr %s352, 128
        %s354 = scalar_lea.vmem [#allocation6], %s353
        %s355 = smul.u32 8, %s29
        %s356 = smul.u32 8, %s29
        %p357 = scmp.lt.s32.totalorder %s28, 1
        %s358 = scalar_select %p357, %s28, 1
        %p359 = scmp.lt.s32.totalorder %s356, 15
        %s360 = scalar_select %p359, %s356, 15
        %s361 = smul.addr %s358, 16
        %s362 = sadd.s32 %s360, %s361
        %s363 = scalar_lea.vmem %s1, %s362
        %s364 = smul.u32 8, %s29
        %p365 = scmp.lt.s32.totalorder %s28, 1
        %s366 = scalar_select %p365, %s28, 1
        %s367 = smul.addr %s366, 8
        %s368 = smul.addr %s367, 4
        %s369 = scalar_lea.vmem %s2, %s368
        %s370 = smul.u32 8, %s29
        %v372 = vld [vmem:[%s311] sm:$0xf]
        %v373 = vld [vmem:[%s311 + $0x4] sm:$0xf]
        %v374 = vld [vmem:[%s311 + $0x8] sm:$0xf]
        %v375 = vld [vmem:[%s311 + $0xc] sm:$0xf]
        %v376 = vld [vmem:[%s311 + $0x10] sm:$0xf]
        %v377 = vld [vmem:[%s311 + $0x14] sm:$0xf]
        %v378 = vld [vmem:[%s311 + $0x18] sm:$0xf]
        %v379 = vld [vmem:[%s311 + $0x1c] sm:$0xf]
        %v380 = vld [vmem:[%s311 + $0x20] sm:$0xf]
        %v381 = vld [vmem:[%s311 + $0x24] sm:$0xf]
        %v382 = vld [vmem:[%s311 + $0x28] sm:$0xf]
        %v383 = vld [vmem:[%s311 + $0x2c] sm:$0xf]
        %v384 = vld [vmem:[%s311 + $0x30] sm:$0xf]
        %v385 = vld [vmem:[%s311 + $0x34] sm:$0xf]
        %v386 = vld [vmem:[%s311 + $0x38] sm:$0xf]
        %v387 = vld [vmem:[%s311 + $0x3c] sm:$0xf]
        %v388 = vld [vmem:[%s3] sm:$0xff]
        %v389 = vld [vmem:[%s3 + $0x8] sm:$0xff]
        %v390 = vld [vmem:[%s3 + $0x10] sm:$0xff]
        %v391 = vld [vmem:[%s3 + $0x18] sm:$0xff]
        %v408 = vunpack.c.l.b16 %v372
        %v409 = vunpack.c.l.b16 %v373
        %v410 = vunpack.c.l.b16 %v374
        %v411 = vunpack.c.l.b16 %v375
        %v412 = vunpack.c.l.b16 %v376
        %v413 = vunpack.c.l.b16 %v377
        %v414 = vunpack.c.l.b16 %v378
        %v415 = vunpack.c.l.b16 %v379
        %v416 = vunpack.c.l.b16 %v380
        %v417 = vunpack.c.l.b16 %v381
        %v418 = vunpack.c.l.b16 %v382
        %v419 = vunpack.c.l.b16 %v383
        %v420 = vunpack.c.l.b16 %v384
        %v421 = vunpack.c.l.b16 %v385
        %v422 = vunpack.c.l.b16 %v386
        %v423 = vunpack.c.l.b16 %v387
        %v424 = vpack.c.b16 %v409, %v408
        %v425 = vpack.c.b16 %v411, %v410
        %v426 = vpack.c.b16 %v413, %v412
        %v427 = vpack.c.b16 %v415, %v414
        %v428 = vpack.c.b16 %v417, %v416
        %v429 = vpack.c.b16 %v419, %v418
        %v430 = vpack.c.b16 %v421, %v420
        %v431 = vpack.c.b16 %v423, %v422
        %v436 = vunpack.c.l.b16 %v388
        %v437 = vunpack.c.h.b16 %v388
        %v438 = vunpack.c.l.b16 %v389
        %v439 = vunpack.c.h.b16 %v389
        %v440 = vunpack.c.l.b16 %v390
        %v441 = vunpack.c.h.b16 %v390
        %v442 = vunpack.c.l.b16 %v391
        %v443 = vunpack.c.h.b16 %v391
        %v444 = vpack.c.b16 %v438, %v436
        %v445 = vpack.c.b16 %v439, %v437
        %v446 = vpack.c.b16 %v442, %v440
        %v447 = vpack.c.b16 %v443, %v441
        %vm452 = vcmask 261120
        %v454 = vsel %vm452, %v424, 0
        %v457 = vsel %vm452, %v425, 0
        %v460 = vsel %vm452, %v426, 0
        %v463 = vsel %vm452, %v427, 0
        %v466 = vsel %vm452, %v428, 0
        %v469 = vsel %vm452, %v429, 0
        %v472 = vsel %vm452, %v430, 0
        %v475 = vsel %vm452, %v431, 0
        %477 = vmatprep.subr.bf16.mxu0 %v445
        %478 = vmatpush1.bf16.msra.mxu0 %v444
        %479 = vmatprep.subr.bf16.mxu0 %v447
        %480 = vmatpush1.bf16.msra.mxu0 %v446
        %481 = vmatprep.subr.bf16.mxu0 0
        %482 = vmatpush1.bf16.msra.mxu0 0
        %483 = vmatprep.subr.bf16.mxu0 0
        %484 = vmatpush1.bf16.msra.mxu0 0
        %485 = vmatprep.subr.bf16.mxu0 0
        %486 = vmatpush1.bf16.msra.mxu0 0
        %487 = vmatprep.subr.bf16.mxu0 0
        %488 = vmatpush1.bf16.msra.mxu0 0
        %489 = vmatprep.subr.bf16.mxu0 0
        %490 = vmatpush1.bf16.msra.mxu0 0
        %491 = vmatprep.subr.bf16.mxu0 0
        %492 = vmatpush1.bf16.msra.mxu0 0
        %493 = vmatprep.subr.bf16.mxu0 0
        %494 = vmatpush1.bf16.msra.mxu0 0
        %495 = vmatprep.subr.bf16.mxu0 0
        %496 = vmatpush1.bf16.msra.mxu0 0
        %497 = vmatprep.subr.bf16.mxu0 0
        %498 = vmatpush1.bf16.msra.mxu0 0
        %499 = vmatprep.subr.bf16.mxu0 0
        %500 = vmatpush1.bf16.msra.mxu0 0
        %501 = vmatprep.subr.bf16.mxu0 0
        %502 = vmatpush1.bf16.msra.mxu0 0
        %503 = vmatprep.subr.bf16.mxu0 0
        %504 = vmatpush1.bf16.msra.mxu0 0
        %505 = vmatprep.subr.bf16.mxu0 0
        %506 = vmatpush1.bf16.msra.mxu0 0
        %507 = vmatprep.subr.bf16.mxu0 0
        %508 = vmatpush1.bf16.msra.mxu0 0
        %509 = vmatprep.mubr.bf16.mxu0 0
        %510 = vmatmul.mubr.bf16.gmra.mrb[0].mxu0 %v454
        %v511 = vpop.f32.mrb[0].mxu0
        %v512 = vadd.f32 0.0, %v511
        %v513 = vpop.f32.mrb[0].mxu0
        %v514 = vadd.f32 0.0, %v513
        %v515 = vpop.f32.mrb[0].mxu0
        %v516 = vadd.f32 0.0, %v515
        %v517 = vpop.f32.mrb[0].mxu0
        %v518 = vadd.f32 0.0, %v517
        %519 = vmatprep.mubr.bf16.mxu0 0
        %520 = vmatmul.mubr.bf16.gmra.mrb[0].mxu0 %v457
        %v521 = vpop.f32.mrb[0].mxu0
        %v522 = vadd.f32 0.0, %v521
        %v523 = vpop.f32.mrb[0].mxu0
        %v524 = vadd.f32 0.0, %v523
        %v525 = vpop.f32.mrb[0].mxu0
        %v526 = vadd.f32 0.0, %v525
        %v527 = vpop.f32.mrb[0].mxu0
        %v528 = vadd.f32 0.0, %v527
        %529 = vmatprep.mubr.bf16.mxu0 0
        %530 = vmatmul.mubr.bf16.gmra.mrb[0].mxu0 %v460
        %v531 = vpop.f32.mrb[0].mxu0
        %v532 = vadd.f32 0.0, %v531
        %v533 = vpop.f32.mrb[0].mxu0
        %v534 = vadd.f32 0.0, %v533
        %v535 = vpop.f32.mrb[0].mxu0
        %v536 = vadd.f32 0.0, %v535
        %v537 = vpop.f32.mrb[0].mxu0
        %v538 = vadd.f32 0.0, %v537
        %539 = vmatprep.mubr.bf16.mxu0 0
        %540 = vmatmul.mubr.bf16.gmra.mrb[0].mxu0 %v463
        %v541 = vpop.f32.mrb[0].mxu0
        %v542 = vadd.f32 0.0, %v541
        %v543 = vpop.f32.mrb[0].mxu0
        %v544 = vadd.f32 0.0, %v543
        %v545 = vpop.f32.mrb[0].mxu0
        %v546 = vadd.f32 0.0, %v545
        %v547 = vpop.f32.mrb[0].mxu0
        %v548 = vadd.f32 0.0, %v547
        %549 = vmatprep.mubr.bf16.mxu0 0
        %550 = vmatmul.mubr.bf16.gmra.mrb[0].mxu0 %v466
        %v551 = vpop.f32.mrb[0].mxu0
        %v552 = vadd.f32 0.0, %v551
        %v553 = vpop.f32.mrb[0].mxu0
        %v554 = vadd.f32 0.0, %v553
        %v555 = vpop.f32.mrb[0].mxu0
        %v556 = vadd.f32 0.0, %v555
        %v557 = vpop.f32.mrb[0].mxu0
        %v558 = vadd.f32 0.0, %v557
        %559 = vmatprep.mubr.bf16.mxu0 0
        %560 = vmatmul.mubr.bf16.gmra.mrb[0].mxu0 %v469
        %v561 = vpop.f32.mrb[0].mxu0
        %v562 = vadd.f32 0.0, %v561
        %v563 = vpop.f32.mrb[0].mxu0
        %v564 = vadd.f32 0.0, %v563
        %v565 = vpop.f32.mrb[0].mxu0
        %v566 = vadd.f32 0.0, %v565
        %v567 = vpop.f32.mrb[0].mxu0
        %v568 = vadd.f32 0.0, %v567
        %569 = vmatprep.mubr.bf16.mxu0 0
        %570 = vmatmul.mubr.bf16.gmra.mrb[0].mxu0 %v472
        %v571 = vpop.f32.mrb[0].mxu0
        %v572 = vadd.f32 0.0, %v571
        %v573 = vpop.f32.mrb[0].mxu0
        %v574 = vadd.f32 0.0, %v573
        %v575 = vpop.f32.mrb[0].mxu0
        %v576 = vadd.f32 0.0, %v575
        %v577 = vpop.f32.mrb[0].mxu0
        %v578 = vadd.f32 0.0, %v577
        %579 = vmatprep.mubr.bf16.mxu0 0
        %580 = vmatmul.mubr.bf16.gmra.mrb[0].mxu0 %v475
        %v581 = vpop.f32.mrb[0].mxu0
        %v582 = vadd.f32 0.0, %v581
        %v583 = vpop.f32.mrb[0].mxu0
        %v584 = vadd.f32 0.0, %v583
        %v585 = vpop.f32.mrb[0].mxu0
        %v586 = vadd.f32 0.0, %v585
        %v587 = vpop.f32.mrb[0].mxu0
        %v588 = vadd.f32 0.0, %v587
        %589 = vdwg.mxu0
        %v590 = vpack.c.bf16 %v516, %v512
        %v591 = vpack.c.bf16 %v526, %v522
        %v592 = vpack.c.bf16 %v536, %v532
        %v593 = vpack.c.bf16 %v546, %v542
        %v594 = vpack.c.bf16 %v556, %v552
        %v595 = vpack.c.bf16 %v566, %v562
        %v596 = vpack.c.bf16 %v576, %v572
        %v597 = vpack.c.bf16 %v586, %v582
        %v598 = vpack.c.bf16 %v518, %v514
        %v599 = vpack.c.bf16 %v528, %v524
        %v600 = vpack.c.bf16 %v538, %v534
        %v601 = vpack.c.bf16 %v548, %v544
        %v602 = vpack.c.bf16 %v558, %v554
        %v603 = vpack.c.bf16 %v568, %v564
        %v604 = vpack.c.bf16 %v578, %v574
        %v605 = vpack.c.bf16 %v588, %v584
        %v606 = vld [vmem:[%s4] sm:$0x1]
        %v608 = vlaneseq
        %v609 = vshrl.u32 %v608, 7
        %v610 = vsub.s32 0, %v609
        %v611 = vrot.slane %v606, %v610
        %612 = vrot.lane.b32.xlu0 %v611, 64
        %v613 = vpop.permute.xlu0 %612
        %v615 = vadd.f32 %v514, %v613
        %v616 = vadd.f32 %v518, %v613
        %v617 = vadd.f32 %v524, %v613
        %v618 = vadd.f32 %v528, %v613
        %v619 = vadd.f32 %v534, %v613
        %v620 = vadd.f32 %v538, %v613
        %v621 = vadd.f32 %v544, %v613
        %v622 = vadd.f32 %v548, %v613
        %v623 = vadd.f32 %v554, %v613
        %v624 = vadd.f32 %v558, %v613
        %v625 = vadd.f32 %v564, %v613
        %v626 = vadd.f32 %v568, %v613
        %v627 = vadd.f32 %v574, %v613
        %v628 = vadd.f32 %v578, %v613
        %v629 = vadd.f32 %v584, %v613
        %v630 = vadd.f32 %v588, %v613
        %v631 = vxor.u32 %v615, 2147483648
        %v632 = vxor.u32 %v616, 2147483648
        %v633 = vxor.u32 %v617, 2147483648
        %v634 = vxor.u32 %v618, 2147483648
        %v635 = vxor.u32 %v619, 2147483648
        %v636 = vxor.u32 %v620, 2147483648
        %v637 = vxor.u32 %v621, 2147483648
        %v638 = vxor.u32 %v622, 2147483648
        %v639 = vxor.u32 %v623, 2147483648
        %v640 = vxor.u32 %v624, 2147483648
        %v641 = vxor.u32 %v625, 2147483648
        %v642 = vxor.u32 %v626, 2147483648
        %v643 = vxor.u32 %v627, 2147483648
        %v644 = vxor.u32 %v628, 2147483648
        %v645 = vxor.u32 %v629, 2147483648
        %v646 = vxor.u32 %v630, 2147483648
        %v647 = vmul.f32 %v631, 1.442695
        %v648 = vpow.pop %v647
        %v649 = vmul.f32 %v632, 1.442695
        %v650 = vpow.pop %v649
        %v651 = vmul.f32 %v633, 1.442695
        %v652 = vpow.pop %v651
        %v653 = vmul.f32 %v634, 1.442695
        %v654 = vpow.pop %v653
        %v655 = vmul.f32 %v635, 1.442695
        %v656 = vpow.pop %v655
        %v657 = vmul.f32 %v636, 1.442695
        %v658 = vpow.pop %v657
        %v659 = vmul.f32 %v637, 1.442695
        %v660 = vpow.pop %v659
        %v661 = vmul.f32 %v638, 1.442695
        %v662 = vpow.pop %v661
        %v663 = vmul.f32 %v639, 1.442695
        %v664 = vpow.pop %v663
        %v665 = vmul.f32 %v640, 1.442695
        %v666 = vpow.pop %v665
        %v667 = vmul.f32 %v641, 1.442695
        %v668 = vpow.pop %v667
        %v669 = vmul.f32 %v642, 1.442695
        %v670 = vpow.pop %v669
        %v671 = vmul.f32 %v643, 1.442695
        %v672 = vpow.pop %v671
        %v673 = vmul.f32 %v644, 1.442695
        %v674 = vpow.pop %v673
        %v675 = vmul.f32 %v645, 1.442695
        %v676 = vpow.pop %v675
        %v677 = vmul.f32 %v646, 1.442695
        %v678 = vpow.pop %v677
        %v679 = vadd.f32 %v648, 1.0
        %v680 = vadd.f32 %v650, 1.0
        %v681 = vadd.f32 %v652, 1.0
        %v682 = vadd.f32 %v654, 1.0
        %v683 = vadd.f32 %v656, 1.0
        %v684 = vadd.f32 %v658, 1.0
        %v685 = vadd.f32 %v660, 1.0
        %v686 = vadd.f32 %v662, 1.0
        %v687 = vadd.f32 %v664, 1.0
        %v688 = vadd.f32 %v666, 1.0
        %v689 = vadd.f32 %v668, 1.0
        %v690 = vadd.f32 %v670, 1.0
        %v691 = vadd.f32 %v672, 1.0
        %v692 = vadd.f32 %v674, 1.0
        %v693 = vadd.f32 %v676, 1.0
        %v694 = vadd.f32 %v678, 1.0
        %v695 = vrcp.pop %v679
        %v696 = vmul.f32 1.0, %v695
        %v697 = vrcp.pop %v680
        %v698 = vmul.f32 1.0, %v697
        %v699 = vrcp.pop %v681
        %v700 = vmul.f32 1.0, %v699
        %v701 = vrcp.pop %v682
        %v702 = vmul.f32 1.0, %v701
        %v703 = vrcp.pop %v683
        %v704 = vmul.f32 1.0, %v703
        %v705 = vrcp.pop %v684
        %v706 = vmul.f32 1.0, %v705
        %v707 = vrcp.pop %v685
        %v708 = vmul.f32 1.0, %v707
        %v709 = vrcp.pop %v686
        %v710 = vmul.f32 1.0, %v709
        %v711 = vrcp.pop %v687
        %v712 = vmul.f32 1.0, %v711
        %v713 = vrcp.pop %v688
        %v714 = vmul.f32 1.0, %v713
        %v715 = vrcp.pop %v689
        %v716 = vmul.f32 1.0, %v715
        %v717 = vrcp.pop %v690
        %v718 = vmul.f32 1.0, %v717
        %v719 = vrcp.pop %v691
        %v720 = vmul.f32 1.0, %v719
        %v721 = vrcp.pop %v692
        %v722 = vmul.f32 1.0, %v721
        %v723 = vrcp.pop %v693
        %v724 = vmul.f32 1.0, %v723
        %v725 = vrcp.pop %v694
        %v726 = vmul.f32 1.0, %v725
        %v727 = vld [vmem:[%s363] sm:$0x1]
        %v728 = vld [vmem:[%s363 + $0x1] sm:$0x1]
        %v729 = vld [vmem:[%s363 + $0x2] sm:$0x1]
        %v730 = vld [vmem:[%s363 + $0x3] sm:$0x1]
        %v731 = vld [vmem:[%s363 + $0x4] sm:$0x1]
        %v732 = vld [vmem:[%s363 + $0x5] sm:$0x1]
        %v733 = vld [vmem:[%s363 + $0x6] sm:$0x1]
        %v734 = vld [vmem:[%s363 + $0x7] sm:$0x1]
        %v735 = vunpack.c.l.bf16 %v727
        %v736 = vunpack.c.l.bf16 %v728
        %v737 = vunpack.c.l.bf16 %v729
        %v738 = vunpack.c.l.bf16 %v730
        %v739 = vunpack.c.l.bf16 %v731
        %v740 = vunpack.c.l.bf16 %v732
        %v741 = vunpack.c.l.bf16 %v733
        %v742 = vunpack.c.l.bf16 %v734
        %744 = vrot.lane.b32.xlu0 %v590, 64
        %v745 = vpop.permute.xlu0 %744
        %vm746 = vcmask 130048
        %v748 = vsel %vm746, %v590, 0
        %v751 = vsel %vm746, %v745, 0
        %753 = vmatprep.subr.bf16.mxu0 0
        %754 = vmatpush1.bf16.xpose.msra.mxu0 %v751
        %755 = vmatprep.subr.bf16.mxu0 0
        %756 = vmatpush1.bf16.xpose.msra.mxu0 0
        %757 = vmatprep.subr.bf16.mxu0 0
        %758 = vmatpush1.bf16.xpose.msra.mxu0 0
        %759 = vmatprep.subr.bf16.mxu0 0
        %760 = vmatpush1.bf16.xpose.msra.mxu0 0
        %761 = vmatprep.subr.bf16.mxu0 0
        %762 = vmatpush1.bf16.xpose.msra.mxu0 0
        %763 = vmatprep.subr.bf16.mxu0 0
        %764 = vmatpush1.bf16.xpose.msra.mxu0 0
        %765 = vmatprep.subr.bf16.mxu0 0
        %766 = vmatpush1.bf16.xpose.msra.mxu0 0
        %767 = vmatprep.subr.bf16.mxu0 0
        %768 = vmatpush1.bf16.xpose.msra.mxu0 0
        %769 = vmatprep.subr.bf16.mxu0 0
        %770 = vmatpush1.bf16.xpose.msra.mxu0 0
        %771 = vmatprep.subr.bf16.mxu0 0
        %772 = vmatpush1.bf16.xpose.msra.mxu0 0
        %773 = vmatprep.subr.bf16.mxu0 0
        %774 = vmatpush1.bf16.xpose.msra.mxu0 0
        %775 = vmatprep.subr.bf16.mxu0 0
        %776 = vmatpush1.bf16.xpose.msra.mxu0 0
        %777 = vmatprep.subr.bf16.mxu0 0
        %778 = vmatpush1.bf16.xpose.msra.mxu0 0
        %779 = vmatprep.subr.bf16.mxu0 0
        %780 = vmatpush1.bf16.xpose.msra.mxu0 0
        %781 = vmatprep.subr.bf16.mxu0 0
        %782 = vmatpush1.bf16.xpose.msra.mxu0 0
        %783 = vmatprep.subr.bf16.mxu0 0
        %784 = vmatpush1.bf16.xpose.msra.mxu0 0
        %785 = vmatprep.mubr.bf16.mxu0 0
        %786 = vmatmul.mubr.bf16.gmra.mrb[0].mxu0 %v748
        %v787 = vpop.f32.mrb[0].mxu0
        %v788 = vadd.f32 0.0, %v787
        %v789 = vpop.f32.mrb[0].mxu0
        %v790 = vpop.f32.mrb[0].mxu0
        %v791 = vadd.f32 0.0, %v790
        %v792 = vpop.f32.mrb[0].mxu0
        %793 = vdwg.mxu0
        %795 = vrot.lane.b32.xlu0 %v591, 64
        %v796 = vpop.permute.xlu0 %795
        %v798 = vsel %vm746, %v591, 0
        %v801 = vsel %vm746, %v796, 0
        %803 = vmatprep.subr.bf16.mxu0 0
        %804 = vmatpush1.bf16.xpose.msra.mxu0 %v801
        %805 = vmatprep.subr.bf16.mxu0 0
        %806 = vmatpush1.bf16.xpose.msra.mxu0 0
        %807 = vmatprep.subr.bf16.mxu0 0
        %808 = vmatpush1.bf16.xpose.msra.mxu0 0
        %809 = vmatprep.subr.bf16.mxu0 0
        %810 = vmatpush1.bf16.xpose.msra.mxu0 0
        %811 = vmatprep.subr.bf16.mxu0 0
        %812 = vmatpush1.bf16.xpose.msra.mxu0 0
        %813 = vmatprep.subr.bf16.mxu0 0
        %814 = vmatpush1.bf16.xpose.msra.mxu0 0
        %815 = vmatprep.subr.bf16.mxu0 0
        %816 = vmatpush1.bf16.xpose.msra.mxu0 0
        %817 = vmatprep.subr.bf16.mxu0 0
        %818 = vmatpush1.bf16.xpose.msra.mxu0 0
        %819 = vmatprep.subr.bf16.mxu0 0
        %820 = vmatpush1.bf16.xpose.msra.mxu0 0
        %821 = vmatprep.subr.bf16.mxu0 0
        %822 = vmatpush1.bf16.xpose.msra.mxu0 0
        %823 = vmatprep.subr.bf16.mxu0 0
        %824 = vmatpush1.bf16.xpose.msra.mxu0 0
        %825 = vmatprep.subr.bf16.mxu0 0
        %826 = vmatpush1.bf16.xpose.msra.mxu0 0
        %827 = vmatprep.subr.bf16.mxu0 0
        %828 = vmatpush1.bf16.xpose.msra.mxu0 0
        %829 = vmatprep.subr.bf16.mxu0 0
        %830 = vmatpush1.bf16.xpose.msra.mxu0 0
        %831 = vmatprep.subr.bf16.mxu0 0
        %832 = vmatpush1.bf16.xpose.msra.mxu0 0
        %833 = vmatprep.subr.bf16.mxu0 0
        %834 = vmatpush1.bf16.xpose.msra.mxu0 0
        %835 = vmatprep.mubr.bf16.mxu0 0
        %836 = vmatmul.mubr.bf16.gmra.mrb[0].mxu0 %v798
        %v837 = vpop.f32.mrb[0].mxu0
        %v838 = vadd.f32 0.0, %v837
        %v839 = vpop.f32.mrb[0].mxu0
        %v840 = vpop.f32.mrb[0].mxu0
        %v841 = vadd.f32 0.0, %v840
        %v842 = vpop.f32.mrb[0].mxu0
        %843 = vdwg.mxu0
        %845 = vrot.lane.b32.xlu0 %v592, 64
        %v846 = vpop.permute.xlu0 %845
        %v848 = vsel %vm746, %v592, 0
        %v851 = vsel %vm746, %v846, 0
        %853 = vmatprep.subr.bf16.mxu0 0
        %854 = vmatpush1.bf16.xpose.msra.mxu0 %v851
        %855 = vmatprep.subr.bf16.mxu0 0
        %856 = vmatpush1.bf16.xpose.msra.mxu0 0
        %857 = vmatprep.subr.bf16.mxu0 0
        %858 = vmatpush1.bf16.xpose.msra.mxu0 0
        %859 = vmatprep.subr.bf16.mxu0 0
        %860 = vmatpush1.bf16.xpose.msra.mxu0 0
        %861 = vmatprep.subr.bf16.mxu0 0
        %862 = vmatpush1.bf16.xpose.msra.mxu0 0
        %863 = vmatprep.subr.bf16.mxu0 0
        %864 = vmatpush1.bf16.xpose.msra.mxu0 0
        %865 = vmatprep.subr.bf16.mxu0 0
        %866 = vmatpush1.bf16.xpose.msra.mxu0 0
        %867 = vmatprep.subr.bf16.mxu0 0
        %868 = vmatpush1.bf16.xpose.msra.mxu0 0
        %869 = vmatprep.subr.bf16.mxu0 0
        %870 = vmatpush1.bf16.xpose.msra.mxu0 0
        %871 = vmatprep.subr.bf16.mxu0 0
        %872 = vmatpush1.bf16.xpose.msra.mxu0 0
        %873 = vmatprep.subr.bf16.mxu0 0
        %874 = vmatpush1.bf16.xpose.msra.mxu0 0
        %875 = vmatprep.subr.bf16.mxu0 0
        %876 = vmatpush1.bf16.xpose.msra.mxu0 0
        %877 = vmatprep.subr.bf16.mxu0 0
        %878 = vmatpush1.bf16.xpose.msra.mxu0 0
        %879 = vmatprep.subr.bf16.mxu0 0
        %880 = vmatpush1.bf16.xpose.msra.mxu0 0
        %881 = vmatprep.subr.bf16.mxu0 0
        %882 = vmatpush1.bf16.xpose.msra.mxu0 0
        %883 = vmatprep.subr.bf16.mxu0 0
        %884 = vmatpush1.bf16.xpose.msra.mxu0 0
        %885 = vmatprep.mubr.bf16.mxu0 0
        %886 = vmatmul.mubr.bf16.gmra.mrb[0].mxu0 %v848
        %v887 = vpop.f32.mrb[0].mxu0
        %v888 = vadd.f32 0.0, %v887
        %v889 = vpop.f32.mrb[0].mxu0
        %v890 = vpop.f32.mrb[0].mxu0
        %v891 = vadd.f32 0.0, %v890
        %v892 = vpop.f32.mrb[0].mxu0
        %893 = vdwg.mxu0
        %895 = vrot.lane.b32.xlu0 %v593, 64
        %v896 = vpop.permute.xlu0 %895
        %v898 = vsel %vm746, %v593, 0
        %v901 = vsel %vm746, %v896, 0
        %903 = vmatprep.subr.bf16.mxu0 0
        %904 = vmatpush1.bf16.xpose.msra.mxu0 %v901
        %905 = vmatprep.subr.bf16.mxu0 0
        %906 = vmatpush1.bf16.xpose.msra.mxu0 0
        %907 = vmatprep.subr.bf16.mxu0 0
        %908 = vmatpush1.bf16.xpose.msra.mxu0 0
        %909 = vmatprep.subr.bf16.mxu0 0
        %910 = vmatpush1.bf16.xpose.msra.mxu0 0
        %911 = vmatprep.subr.bf16.mxu0 0
        %912 = vmatpush1.bf16.xpose.msra.mxu0 0
        %913 = vmatprep.subr.bf16.mxu0 0
        %914 = vmatpush1.bf16.xpose.msra.mxu0 0
        %915 = vmatprep.subr.bf16.mxu0 0
        %916 = vmatpush1.bf16.xpose.msra.mxu0 0
        %917 = vmatprep.subr.bf16.mxu0 0
        %918 = vmatpush1.bf16.xpose.msra.mxu0 0
        %919 = vmatprep.subr.bf16.mxu0 0
        %920 = vmatpush1.bf16.xpose.msra.mxu0 0
        %921 = vmatprep.subr.bf16.mxu0 0
        %922 = vmatpush1.bf16.xpose.msra.mxu0 0
        %923 = vmatprep.subr.bf16.mxu0 0
        %924 = vmatpush1.bf16.xpose.msra.mxu0 0
        %925 = vmatprep.subr.bf16.mxu0 0
        %926 = vmatpush1.bf16.xpose.msra.mxu0 0
        %927 = vmatprep.subr.bf16.mxu0 0
        %928 = vmatpush1.bf16.xpose.msra.mxu0 0
        %929 = vmatprep.subr.bf16.mxu0 0
        %930 = vmatpush1.bf16.xpose.msra.mxu0 0
        %931 = vmatprep.subr.bf16.mxu0 0
        %932 = vmatpush1.bf16.xpose.msra.mxu0 0
        %933 = vmatprep.subr.bf16.mxu0 0
        %934 = vmatpush1.bf16.xpose.msra.mxu0 0
        %935 = vmatprep.mubr.bf16.mxu0 0
        %936 = vmatmul.mubr.bf16.gmra.mrb[0].mxu0 %v898
        %v937 = vpop.f32.mrb[0].mxu0
        %v938 = vadd.f32 0.0, %v937
        %v939 = vpop.f32.mrb[0].mxu0
        %v940 = vpop.f32.mrb[0].mxu0
        %v941 = vadd.f32 0.0, %v940
        %v942 = vpop.f32.mrb[0].mxu0
        %943 = vdwg.mxu0
        %945 = vrot.lane.b32.xlu0 %v594, 64
        %v946 = vpop.permute.xlu0 %945
        %v948 = vsel %vm746, %v594, 0
        %v951 = vsel %vm746, %v946, 0
        %953 = vmatprep.subr.bf16.mxu0 0
        %954 = vmatpush1.bf16.xpose.msra.mxu0 %v951
        %955 = vmatprep.subr.bf16.mxu0 0
        %956 = vmatpush1.bf16.xpose.msra.mxu0 0
        %957 = vmatprep.subr.bf16.mxu0 0
        %958 = vmatpush1.bf16.xpose.msra.mxu0 0
        %959 = vmatprep.subr.bf16.mxu0 0
        %960 = vmatpush1.bf16.xpose.msra.mxu0 0
        %961 = vmatprep.subr.bf16.mxu0 0
        %962 = vmatpush1.bf16.xpose.msra.mxu0 0
        %963 = vmatprep.subr.bf16.mxu0 0
        %964 = vmatpush1.bf16.xpose.msra.mxu0 0
        %965 = vmatprep.subr.bf16.mxu0 0
        %966 = vmatpush1.bf16.xpose.msra.mxu0 0
        %967 = vmatprep.subr.bf16.mxu0 0
        %968 = vmatpush1.bf16.xpose.msra.mxu0 0
        %969 = vmatprep.subr.bf16.mxu0 0
        %970 = vmatpush1.bf16.xpose.msra.mxu0 0
        %971 = vmatprep.subr.bf16.mxu0 0
        %972 = vmatpush1.bf16.xpose.msra.mxu0 0
        %973 = vmatprep.subr.bf16.mxu0 0
        %974 = vmatpush1.bf16.xpose.msra.mxu0 0
        %975 = vmatprep.subr.bf16.mxu0 0
        %976 = vmatpush1.bf16.xpose.msra.mxu0 0
        %977 = vmatprep.subr.bf16.mxu0 0
        %978 = vmatpush1.bf16.xpose.msra.mxu0 0
        %979 = vmatprep.subr.bf16.mxu0 0
        %980 = vmatpush1.bf16.xpose.msra.mxu0 0
        %981 = vmatprep.subr.bf16.mxu0 0
        %982 = vmatpush1.bf16.xpose.msra.mxu0 0
        %983 = vmatprep.subr.bf16.mxu0 0
        %984 = vmatpush1.bf16.xpose.msra.mxu0 0
        %985 = vmatprep.mubr.bf16.mxu0 0
        %986 = vmatmul.mubr.bf16.gmra.mrb[0].mxu0 %v948
        %v987 = vpop.f32.mrb[0].mxu0
        %v988 = vadd.f32 0.0, %v987
        %v989 = vpop.f32.mrb[0].mxu0
        %v990 = vpop.f32.mrb[0].mxu0
        %v991 = vadd.f32 0.0, %v990
        %v992 = vpop.f32.mrb[0].mxu0
        %993 = vdwg.mxu0
        %995 = vrot.lane.b32.xlu0 %v595, 64
        %v996 = vpop.permute.xlu0 %995
        %v998 = vsel %vm746, %v595, 0
        %v1001 = vsel %vm746, %v996, 0
        %1003 = vmatprep.subr.bf16.mxu0 0
        %1004 = vmatpush1.bf16.xpose.msra.mxu0 %v1001
        %1005 = vmatprep.subr.bf16.mxu0 0
        %1006 = vmatpush1.bf16.xpose.msra.mxu0 0
        %1007 = vmatprep.subr.bf16.mxu0 0
        %1008 = vmatpush1.bf16.xpose.msra.mxu0 0
        %1009 = vmatprep.subr.bf16.mxu0 0
        %1010 = vmatpush1.bf16.xpose.msra.mxu0 0
        %1011 = vmatprep.subr.bf16.mxu0 0
        %1012 = vmatpush1.bf16.xpose.msra.mxu0 0
        %1013 = vmatprep.subr.bf16.mxu0 0
        %1014 = vmatpush1.bf16.xpose.msra.mxu0 0
        %1015 = vmatprep.subr.bf16.mxu0 0
        %1016 = vmatpush1.bf16.xpose.msra.mxu0 0
        %1017 = vmatprep.subr.bf16.mxu0 0
        %1018 = vmatpush1.bf16.xpose.msra.mxu0 0
        %1019 = vmatprep.subr.bf16.mxu0 0
        %1020 = vmatpush1.bf16.xpose.msra.mxu0 0
        %1021 = vmatprep.subr.bf16.mxu0 0
        %1022 = vmatpush1.bf16.xpose.msra.mxu0 0
        %1023 = vmatprep.subr.bf16.mxu0 0
        %1024 = vmatpush1.bf16.xpose.msra.mxu0 0
        %1025 = vmatprep.subr.bf16.mxu0 0
        %1026 = vmatpush1.bf16.xpose.msra.mxu0 0
        %1027 = vmatprep.subr.bf16.mxu0 0
        %1028 = vmatpush1.bf16.xpose.msra.mxu0 0
        %1029 = vmatprep.subr.bf16.mxu0 0
        %1030 = vmatpush1.bf16.xpose.msra.mxu0 0
        %1031 = vmatprep.subr.bf16.mxu0 0
        %1032 = vmatpush1.bf16.xpose.msra.mxu0 0
        %1033 = vmatprep.subr.bf16.mxu0 0
        %1034 = vmatpush1.bf16.xpose.msra.mxu0 0
        %1035 = vmatprep.mubr.bf16.mxu0 0
        %1036 = vmatmul.mubr.bf16.gmra.mrb[0].mxu0 %v998
        %v1037 = vpop.f32.mrb[0].mxu0
        %v1038 = vadd.f32 0.0, %v1037
        %v1039 = vpop.f32.mrb[0].mxu0
        %v1040 = vpop.f32.mrb[0].mxu0
        %v1041 = vadd.f32 0.0, %v1040
        %v1042 = vpop.f32.mrb[0].mxu0
        %1043 = vdwg.mxu0
        %1045 = vrot.lane.b32.xlu0 %v596, 64
        %v1046 = vpop.permute.xlu0 %1045
        %v1048 = vsel %vm746, %v596, 0
        %v1051 = vsel %vm746, %v1046, 0
        %1053 = vmatprep.subr.bf16.mxu0 0
        %1054 = vmatpush1.bf16.xpose.msra.mxu0 %v1051
        %1055 = vmatprep.subr.bf16.mxu0 0
        %1056 = vmatpush1.bf16.xpose.msra.mxu0 0
        %1057 = vmatprep.subr.bf16.mxu0 0
        %1058 = vmatpush1.bf16.xpose.msra.mxu0 0
        %1059 = vmatprep.subr.bf16.mxu0 0
        %1060 = vmatpush1.bf16.xpose.msra.mxu0 0
        %1061 = vmatprep.subr.bf16.mxu0 0
        %1062 = vmatpush1.bf16.xpose.msra.mxu0 0
        %1063 = vmatprep.subr.bf16.mxu0 0
        %1064 = vmatpush1.bf16.xpose.msra.mxu0 0
        %1065 = vmatprep.subr.bf16.mxu0 0
        %1066 = vmatpush1.bf16.xpose.msra.mxu0 0
        %1067 = vmatprep.subr.bf16.mxu0 0
        %1068 = vmatpush1.bf16.xpose.msra.mxu0 0
        %1069 = vmatprep.subr.bf16.mxu0 0
        %1070 = vmatpush1.bf16.xpose.msra.mxu0 0
        %1071 = vmatprep.subr.bf16.mxu0 0
        %1072 = vmatpush1.bf16.xpose.msra.mxu0 0
        %1073 = vmatprep.subr.bf16.mxu0 0
        %1074 = vmatpush1.bf16.xpose.msra.mxu0 0
        %1075 = vmatprep.subr.bf16.mxu0 0
        %1076 = vmatpush1.bf16.xpose.msra.mxu0 0
        %1077 = vmatprep.subr.bf16.mxu0 0
        %1078 = vmatpush1.bf16.xpose.msra.mxu0 0
        %1079 = vmatprep.subr.bf16.mxu0 0
        %1080 = vmatpush1.bf16.xpose.msra.mxu0 0
        %1081 = vmatprep.subr.bf16.mxu0 0
        %1082 = vmatpush1.bf16.xpose.msra.mxu0 0
        %1083 = vmatprep.subr.bf16.mxu0 0
        %1084 = vmatpush1.bf16.xpose.msra.mxu0 0
        %1085 = vmatprep.mubr.bf16.mxu0 0
        %1086 = vmatmul.mubr.bf16.gmra.mrb[0].mxu0 %v1048
        %v1087 = vpop.f32.mrb[0].mxu0
        %v1088 = vadd.f32 0.0, %v1087
        %v1089 = vpop.f32.mrb[0].mxu0
        %v1090 = vpop.f32.mrb[0].mxu0
        %v1091 = vadd.f32 0.0, %v1090
        %v1092 = vpop.f32.mrb[0].mxu0
        %1093 = vdwg.mxu0
        %1095 = vrot.lane.b32.xlu0 %v597, 64
        %v1096 = vpop.permute.xlu0 %1095
        %v1098 = vsel %vm746, %v597, 0
        %v1101 = vsel %vm746, %v1096, 0
        %1103 = vmatprep.subr.bf16.mxu0 0
        %1104 = vmatpush1.bf16.xpose.msra.mxu0 %v1101
        %1105 = vmatprep.subr.bf16.mxu0 0
        %1106 = vmatpush1.bf16.xpose.msra.mxu0 0
        %1107 = vmatprep.subr.bf16.mxu0 0
        %1108 = vmatpush1.bf16.xpose.msra.mxu0 0
        %1109 = vmatprep.subr.bf16.mxu0 0
        %1110 = vmatpush1.bf16.xpose.msra.mxu0 0
        %1111 = vmatprep.subr.bf16.mxu0 0
        %1112 = vmatpush1.bf16.xpose.msra.mxu0 0
        %1113 = vmatprep.subr.bf16.mxu0 0
        %1114 = vmatpush1.bf16.xpose.msra.mxu0 0
        %1115 = vmatprep.subr.bf16.mxu0 0
        %1116 = vmatpush1.bf16.xpose.msra.mxu0 0
        %1117 = vmatprep.subr.bf16.mxu0 0
        %1118 = vmatpush1.bf16.xpose.msra.mxu0 0
        %1119 = vmatprep.subr.bf16.mxu0 0
        %1120 = vmatpush1.bf16.xpose.msra.mxu0 0
        %1121 = vmatprep.subr.bf16.mxu0 0
        %1122 = vmatpush1.bf16.xpose.msra.mxu0 0
        %1123 = vmatprep.subr.bf16.mxu0 0
        %1124 = vmatpush1.bf16.xpose.msra.mxu0 0
        %1125 = vmatprep.subr.bf16.mxu0 0
        %1126 = vmatpush1.bf16.xpose.msra.mxu0 0
        %1127 = vmatprep.subr.bf16.mxu0 0
        %1128 = vmatpush1.bf16.xpose.msra.mxu0 0
        %1129 = vmatprep.subr.bf16.mxu0 0
        %1130 = vmatpush1.bf16.xpose.msra.mxu0 0
        %1131 = vmatprep.subr.bf16.mxu0 0
        %1132 = vmatpush1.bf16.xpose.msra.mxu0 0
        %1133 = vmatprep.subr.bf16.mxu0 0
        %1134 = vmatpush1.bf16.xpose.msra.mxu0 0
        %1135 = vmatprep.mubr.bf16.mxu0 0
        %1136 = vmatmul.mubr.bf16.gmra.mrb[0].mxu0 %v1098
        %v1137 = vpop.f32.mrb[0].mxu0
        %v1138 = vadd.f32 0.0, %v1137
        %v1139 = vpop.f32.mrb[0].mxu0
        %v1140 = vpop.f32.mrb[0].mxu0
        %v1141 = vadd.f32 0.0, %v1140
        %v1142 = vpop.f32.mrb[0].mxu0
        %1143 = vdwg.mxu0
        %v1144 = vmul.f32 %v788, 0.25
        %v1145 = vmul.f32 %v791, 0.25
        %v1146 = vmul.f32 %v838, 0.25
        %v1147 = vmul.f32 %v841, 0.25
        %v1148 = vmul.f32 %v888, 0.25
        %v1149 = vmul.f32 %v891, 0.25
        %v1150 = vmul.f32 %v938, 0.25
        %v1151 = vmul.f32 %v941, 0.25
        %v1152 = vmul.f32 %v988, 0.25
        %v1153 = vmul.f32 %v991, 0.25
        %v1154 = vmul.f32 %v1038, 0.25
        %v1155 = vmul.f32 %v1041, 0.25
        %v1156 = vmul.f32 %v1088, 0.25
        %v1157 = vmul.f32 %v1091, 0.25
        %v1158 = vmul.f32 %v1138, 0.25
        %v1159 = vmul.f32 %v1141, 0.25
        %v1160 = vlaneseq
        %v1161 = vshrl.u32 %v1160, 7
        %v1162 = vsub.s32 0, %v1161
        %v1163 = vrot.slane %v735, %v1162
        %v1164 = vlaneseq
        %v1165 = vshrl.u32 %v1164, 7
        %v1166 = vsub.s32 0, %v1165
        %v1167 = vrot.slane %v736, %v1166
        %v1168 = vlaneseq
        %v1169 = vshrl.u32 %v1168, 7
        %v1170 = vsub.s32 0, %v1169
        %v1171 = vrot.slane %v737, %v1170
        %v1172 = vlaneseq
        %v1173 = vshrl.u32 %v1172, 7
        %v1174 = vsub.s32 0, %v1173
        %v1175 = vrot.slane %v738, %v1174
        %v1176 = vlaneseq
        %v1177 = vshrl.u32 %v1176, 7
        %v1178 = vsub.s32 0, %v1177
        %v1179 = vrot.slane %v739, %v1178
        %v1180 = vlaneseq
        %v1181 = vshrl.u32 %v1180, 7
        %v1182 = vsub.s32 0, %v1181
        %v1183 = vrot.slane %v740, %v1182
        %v1184 = vlaneseq
        %v1185 = vshrl.u32 %v1184, 7
        %v1186 = vsub.s32 0, %v1185
        %v1187 = vrot.slane %v741, %v1186
        %v1188 = vlaneseq
        %v1189 = vshrl.u32 %v1188, 7
        %v1190 = vsub.s32 0, %v1189
        %v1191 = vrot.slane %v742, %v1190
        %v1192 = vadd.f32 %v1144, %v1163
        %v1193 = vadd.f32 %v1145, %v1163
        %v1194 = vadd.f32 %v1146, %v1167
        %v1195 = vadd.f32 %v1147, %v1167
        %v1196 = vadd.f32 %v1148, %v1171
        %v1197 = vadd.f32 %v1149, %v1171
        %v1198 = vadd.f32 %v1150, %v1175
        %v1199 = vadd.f32 %v1151, %v1175
        %v1200 = vadd.f32 %v1152, %v1179
        %v1201 = vadd.f32 %v1153, %v1179
        %v1202 = vadd.f32 %v1154, %v1183
        %v1203 = vadd.f32 %v1155, %v1183
        %v1204 = vadd.f32 %v1156, %v1187
        %v1205 = vadd.f32 %v1157, %v1187
        %v1206 = vadd.f32 %v1158, %v1191
        %v1207 = vadd.f32 %v1159, %v1191
        %v1208 = vld [vmem:[%s369] sm:$0xf]
        %v1209 = vld [vmem:[%s369 + $0x4] sm:$0xf]
        %v1210 = vunpack.c.l.bf16 %v1208
        %v1211 = vunpack.c.l.bf16 %v1209
        %v1212 = vadd.f32 %v1192, %v1210
        %v1213 = vadd.f32 %v1193, %v1211
        %v1214 = vadd.f32 %v1194, %v1210
        %v1215 = vadd.f32 %v1195, %v1211
        %v1216 = vadd.f32 %v1196, %v1210
        %v1217 = vadd.f32 %v1197, %v1211
        %v1218 = vadd.f32 %v1198, %v1210
        %v1219 = vadd.f32 %v1199, %v1211
        %v1220 = vadd.f32 %v1200, %v1210
        %v1221 = vadd.f32 %v1201, %v1211
        %v1222 = vadd.f32 %v1202, %v1210
        %v1223 = vadd.f32 %v1203, %v1211
        %v1224 = vadd.f32 %v1204, %v1210
        %v1225 = vadd.f32 %v1205, %v1211
        %v1226 = vadd.f32 %v1206, %v1210
        %v1227 = vadd.f32 %v1207, %v1211
        %v1228 = vsel %vm746, %v1212, -inf
        %1229 = vmax.xlane.f32.xlu0 %v1228
        %v1230 = vpop.xlane.xlu0 %1229
        %v1231 = vsel %vm746, %v1213, -inf
        %1232 = vmax.xlane.f32.xlu0 %v1231
        %v1233 = vpop.xlane.xlu0 %1232
        %v1234 = vsel %vm746, %v1214, -inf
        %1235 = vmax.xlane.f32.xlu0 %v1234
        %v1236 = vpop.xlane.xlu0 %1235
        %v1237 = vsel %vm746, %v1215, -inf
        %1238 = vmax.xlane.f32.xlu0 %v1237
        %v1239 = vpop.xlane.xlu0 %1238
        %v1240 = vsel %vm746, %v1216, -inf
        %1241 = vmax.xlane.f32.xlu0 %v1240
        %v1242 = vpop.xlane.xlu0 %1241
        %v1243 = vsel %vm746, %v1217, -inf
        %1244 = vmax.xlane.f32.xlu0 %v1243
        %v1245 = vpop.xlane.xlu0 %1244
        %v1246 = vsel %vm746, %v1218, -inf
        %1247 = vmax.xlane.f32.xlu0 %v1246
        %v1248 = vpop.xlane.xlu0 %1247
        %v1249 = vsel %vm746, %v1219, -inf
        %1250 = vmax.xlane.f32.xlu0 %v1249
        %v1251 = vpop.xlane.xlu0 %1250
        %v1252 = vsel %vm746, %v1220, -inf
        %1253 = vmax.xlane.f32.xlu0 %v1252
        %v1254 = vpop.xlane.xlu0 %1253
        %v1255 = vsel %vm746, %v1221, -inf
        %1256 = vmax.xlane.f32.xlu0 %v1255
        %v1257 = vpop.xlane.xlu0 %1256
        %v1258 = vsel %vm746, %v1222, -inf
        %1259 = vmax.xlane.f32.xlu0 %v1258
        %v1260 = vpop.xlane.xlu0 %1259
        %v1261 = vsel %vm746, %v1223, -inf
        %1262 = vmax.xlane.f32.xlu0 %v1261
        %v1263 = vpop.xlane.xlu0 %1262
        %v1264 = vsel %vm746, %v1224, -inf
        %1265 = vmax.xlane.f32.xlu0 %v1264
        %v1266 = vpop.xlane.xlu0 %1265
        %v1267 = vsel %vm746, %v1225, -inf
        %1268 = vmax.xlane.f32.xlu0 %v1267
        %v1269 = vpop.xlane.xlu0 %1268
        %v1270 = vsel %vm746, %v1226, -inf
        %1271 = vmax.xlane.f32.xlu0 %v1270
        %v1272 = vpop.xlane.xlu0 %1271
        %v1273 = vsel %vm746, %v1227, -inf
        %1274 = vmax.xlane.f32.xlu0 %v1273
        %v1275 = vpop.xlane.xlu0 %1274
        %v1276 = vsub.f32 %v1212, %v1230
        %v1277 = vsub.f32 %v1213, %v1233
        %v1278 = vsub.f32 %v1214, %v1236
        %v1279 = vsub.f32 %v1215, %v1239
        %v1280 = vsub.f32 %v1216, %v1242
        %v1281 = vsub.f32 %v1217, %v1245
        %v1282 = vsub.f32 %v1218, %v1248
        %v1283 = vsub.f32 %v1219, %v1251
        %v1284 = vsub.f32 %v1220, %v1254
        %v1285 = vsub.f32 %v1221, %v1257
        %v1286 = vsub.f32 %v1222, %v1260
        %v1287 = vsub.f32 %v1223, %v1263
        %v1288 = vsub.f32 %v1224, %v1266
        %v1289 = vsub.f32 %v1225, %v1269
        %v1290 = vsub.f32 %v1226, %v1272
        %v1291 = vsub.f32 %v1227, %v1275
        %v1292 = vmul.f32 %v1276, 1.442695
        %v1293 = vpow.pop %v1292
        %v1294 = vmul.f32 %v1277, 1.442695
        %v1295 = vpow.pop %v1294
        %v1296 = vmul.f32 %v1278, 1.442695
        %v1297 = vpow.pop %v1296
        %v1298 = vmul.f32 %v1279, 1.442695
        %v1299 = vpow.pop %v1298
        %v1300 = vmul.f32 %v1280, 1.442695
        %v1301 = vpow.pop %v1300
        %v1302 = vmul.f32 %v1281, 1.442695
        %v1303 = vpow.pop %v1302
        %v1304 = vmul.f32 %v1282, 1.442695
        %v1305 = vpow.pop %v1304
        %v1306 = vmul.f32 %v1283, 1.442695
        %v1307 = vpow.pop %v1306
        %v1308 = vmul.f32 %v1284, 1.442695
        %v1309 = vpow.pop %v1308
        %v1310 = vmul.f32 %v1285, 1.442695
        %v1311 = vpow.pop %v1310
        %v1312 = vmul.f32 %v1286, 1.442695
        %v1313 = vpow.pop %v1312
        %v1314 = vmul.f32 %v1287, 1.442695
        %v1315 = vpow.pop %v1314
        %v1316 = vmul.f32 %v1288, 1.442695
        %v1317 = vpow.pop %v1316
        %v1318 = vmul.f32 %v1289, 1.442695
        %v1319 = vpow.pop %v1318
        %v1320 = vmul.f32 %v1290, 1.442695
        %v1321 = vpow.pop %v1320
        %v1322 = vmul.f32 %v1291, 1.442695
        %v1323 = vpow.pop %v1322
        %v1324 = vsel %vm746, %v1293, 0.0
        %1325 = vadd.xlane.f32.xlu0 %v1324
        %v1326 = vpop.xlane.xlu0 %1325
        %v1327 = vsel %vm746, %v1295, 0.0
        %1328 = vadd.xlane.f32.xlu0 %v1327
        %v1329 = vpop.xlane.xlu0 %1328
        %v1330 = vsel %vm746, %v1297, 0.0
        %1331 = vadd.xlane.f32.xlu0 %v1330
        %v1332 = vpop.xlane.xlu0 %1331
        %v1333 = vsel %vm746, %v1299, 0.0
        %1334 = vadd.xlane.f32.xlu0 %v1333
        %v1335 = vpop.xlane.xlu0 %1334
        %v1336 = vsel %vm746, %v1301, 0.0
        %1337 = vadd.xlane.f32.xlu0 %v1336
        %v1338 = vpop.xlane.xlu0 %1337
        %v1339 = vsel %vm746, %v1303, 0.0
        %1340 = vadd.xlane.f32.xlu0 %v1339
        %v1341 = vpop.xlane.xlu0 %1340
        %v1342 = vsel %vm746, %v1305, 0.0
        %1343 = vadd.xlane.f32.xlu0 %v1342
        %v1344 = vpop.xlane.xlu0 %1343
        %v1345 = vsel %vm746, %v1307, 0.0
        %1346 = vadd.xlane.f32.xlu0 %v1345
        %v1347 = vpop.xlane.xlu0 %1346
        %v1348 = vsel %vm746, %v1309, 0.0
        %1349 = vadd.xlane.f32.xlu0 %v1348
        %v1350 = vpop.xlane.xlu0 %1349
        %v1351 = vsel %vm746, %v1311, 0.0
        %1352 = vadd.xlane.f32.xlu0 %v1351
        %v1353 = vpop.xlane.xlu0 %1352
        %v1354 = vsel %vm746, %v1313, 0.0
        %1355 = vadd.xlane.f32.xlu0 %v1354
        %v1356 = vpop.xlane.xlu0 %1355
        %v1357 = vsel %vm746, %v1315, 0.0
        %1358 = vadd.xlane.f32.xlu0 %v1357
        %v1359 = vpop.xlane.xlu0 %1358
        %v1360 = vsel %vm746, %v1317, 0.0
        %1361 = vadd.xlane.f32.xlu0 %v1360
        %v1362 = vpop.xlane.xlu0 %1361
        %v1363 = vsel %vm746, %v1319, 0.0
        %1364 = vadd.xlane.f32.xlu0 %v1363
        %v1365 = vpop.xlane.xlu0 %1364
        %v1366 = vsel %vm746, %v1321, 0.0
        %1367 = vadd.xlane.f32.xlu0 %v1366
        %v1368 = vpop.xlane.xlu0 %1367
        %v1369 = vsel %vm746, %v1323, 0.0
        %1370 = vadd.xlane.f32.xlu0 %v1369
        %v1371 = vpop.xlane.xlu0 %1370
        %v1372 = vrcp.pop %v1326
        %v1373 = vrcp.pop %v1329
        %v1374 = vrcp.pop %v1332
        %v1375 = vrcp.pop %v1335
        %v1376 = vrcp.pop %v1338
        %v1377 = vrcp.pop %v1341
        %v1378 = vrcp.pop %v1344
        %v1379 = vrcp.pop %v1347
        %v1380 = vrcp.pop %v1350
        %v1381 = vrcp.pop %v1353
        %v1382 = vrcp.pop %v1356
        %v1383 = vrcp.pop %v1359
        %v1384 = vrcp.pop %v1362
        %v1385 = vrcp.pop %v1365
        %v1386 = vrcp.pop %v1368
        %v1387 = vrcp.pop %v1371
        %v1388 = vmul.f32 %v1293, %v1372
        %v1389 = vmul.f32 %v1295, %v1373
        %v1390 = vmul.f32 %v1297, %v1374
        %v1391 = vmul.f32 %v1299, %v1375
        %v1392 = vmul.f32 %v1301, %v1376
        %v1393 = vmul.f32 %v1303, %v1377
        %v1394 = vmul.f32 %v1305, %v1378
        %v1395 = vmul.f32 %v1307, %v1379
        %v1396 = vmul.f32 %v1309, %v1380
        %v1397 = vmul.f32 %v1311, %v1381
        %v1398 = vmul.f32 %v1313, %v1382
        %v1399 = vmul.f32 %v1315, %v1383
        %v1400 = vmul.f32 %v1317, %v1384
        %v1401 = vmul.f32 %v1319, %v1385
        %v1402 = vmul.f32 %v1321, %v1386
        %v1403 = vmul.f32 %v1323, %v1387
        %v1404 = vpack.c.bf16 %v1389, %v1388
        %v1405 = vpack.c.bf16 %v1391, %v1390
        %v1406 = vpack.c.bf16 %v1393, %v1392
        %v1407 = vpack.c.bf16 %v1395, %v1394
        %v1408 = vpack.c.bf16 %v1397, %v1396
        %v1409 = vpack.c.bf16 %v1399, %v1398
        %v1410 = vpack.c.bf16 %v1401, %v1400
        %v1411 = vpack.c.bf16 %v1403, %v1402
        %v1413 = vsel %vm746, %v1404, 0
        %1415 = vmatprep.subr.bf16.mxu0 0
        %1416 = vmatpush1.bf16.msra.mxu0 %v598
        %1417 = vmatprep.subr.bf16.mxu0 0
        %1418 = vmatpush1.bf16.msra.mxu0 0
        %1419 = vmatprep.subr.bf16.mxu0 0
        %1420 = vmatpush1.bf16.msra.mxu0 0
        %1421 = vmatprep.subr.bf16.mxu0 0
        %1422 = vmatpush1.bf16.msra.mxu0 0
        %1423 = vmatprep.subr.bf16.mxu0 0
        %1424 = vmatpush1.bf16.msra.mxu0 0
        %1425 = vmatprep.subr.bf16.mxu0 0
        %1426 = vmatpush1.bf16.msra.mxu0 0
        %1427 = vmatprep.subr.bf16.mxu0 0
        %1428 = vmatpush1.bf16.msra.mxu0 0
        %1429 = vmatprep.subr.bf16.mxu0 0
        %1430 = vmatpush1.bf16.msra.mxu0 0
        %1431 = vmatprep.subr.bf16.mxu0 0
        %1432 = vmatpush1.bf16.msra.mxu0 0
        %1433 = vmatprep.subr.bf16.mxu0 0
        %1434 = vmatpush1.bf16.msra.mxu0 0
        %1435 = vmatprep.subr.bf16.mxu0 0
        %1436 = vmatpush1.bf16.msra.mxu0 0
        %1437 = vmatprep.subr.bf16.mxu0 0
        %1438 = vmatpush1.bf16.msra.mxu0 0
        %1439 = vmatprep.subr.bf16.mxu0 0
        %1440 = vmatpush1.bf16.msra.mxu0 0
        %1441 = vmatprep.subr.bf16.mxu0 0
        %1442 = vmatpush1.bf16.msra.mxu0 0
        %1443 = vmatprep.subr.bf16.mxu0 0
        %1444 = vmatpush1.bf16.msra.mxu0 0
        %1445 = vmatprep.subr.bf16.mxu0 0
        %1446 = vmatpush1.bf16.msra.mxu0 0
        %1447 = vmatprep.mubr.bf16.mxu0 0
        %1448 = vmatmul.mubr.bf16.gmra.mrb[0].mxu0 %v1413
        %v1449 = vpop.f32.mrb[0].mxu0
        %v1450 = vadd.f32 0.0, %v1449
        %v1451 = vpop.f32.mrb[0].mxu0
        %v1452 = vpop.f32.mrb[0].mxu0
        %v1453 = vadd.f32 0.0, %v1452
        %v1454 = vpop.f32.mrb[0].mxu0
        %1455 = vdwg.mxu0
        %v1457 = vsel %vm746, %v1405, 0
        %1459 = vmatprep.subr.bf16.mxu0 0
        %1460 = vmatpush1.bf16.msra.mxu0 %v599
        %1461 = vmatprep.subr.bf16.mxu0 0
        %1462 = vmatpush1.bf16.msra.mxu0 0
        %1463 = vmatprep.subr.bf16.mxu0 0
        %1464 = vmatpush1.bf16.msra.mxu0 0
        %1465 = vmatprep.subr.bf16.mxu0 0
        %1466 = vmatpush1.bf16.msra.mxu0 0
        %1467 = vmatprep.subr.bf16.mxu0 0
        %1468 = vmatpush1.bf16.msra.mxu0 0
        %1469 = vmatprep.subr.bf16.mxu0 0
        %1470 = vmatpush1.bf16.msra.mxu0 0
        %1471 = vmatprep.subr.bf16.mxu0 0
        %1472 = vmatpush1.bf16.msra.mxu0 0
        %1473 = vmatprep.subr.bf16.mxu0 0
        %1474 = vmatpush1.bf16.msra.mxu0 0
        %1475 = vmatprep.subr.bf16.mxu0 0
        %1476 = vmatpush1.bf16.msra.mxu0 0
        %1477 = vmatprep.subr.bf16.mxu0 0
        %1478 = vmatpush1.bf16.msra.mxu0 0
        %1479 = vmatprep.subr.bf16.mxu0 0
        %1480 = vmatpush1.bf16.msra.mxu0 0
        %1481 = vmatprep.subr.bf16.mxu0 0
        %1482 = vmatpush1.bf16.msra.mxu0 0
        %1483 = vmatprep.subr.bf16.mxu0 0
        %1484 = vmatpush1.bf16.msra.mxu0 0
        %1485 = vmatprep.subr.bf16.mxu0 0
        %1486 = vmatpush1.bf16.msra.mxu0 0
        %1487 = vmatprep.subr.bf16.mxu0 0
        %1488 = vmatpush1.bf16.msra.mxu0 0
        %1489 = vmatprep.subr.bf16.mxu0 0
        %1490 = vmatpush1.bf16.msra.mxu0 0
        %1491 = vmatprep.mubr.bf16.mxu0 0
        %1492 = vmatmul.mubr.bf16.gmra.mrb[0].mxu0 %v1457
        %v1493 = vpop.f32.mrb[0].mxu0
        %v1494 = vadd.f32 0.0, %v1493
        %v1495 = vpop.f32.mrb[0].mxu0
        %v1496 = vpop.f32.mrb[0].mxu0
        %v1497 = vadd.f32 0.0, %v1496
        %v1498 = vpop.f32.mrb[0].mxu0
        %1499 = vdwg.mxu0
        %v1501 = vsel %vm746, %v1406, 0
        %1503 = vmatprep.subr.bf16.mxu0 0
        %1504 = vmatpush1.bf16.msra.mxu0 %v600
        %1505 = vmatprep.subr.bf16.mxu0 0
        %1506 = vmatpush1.bf16.msra.mxu0 0
        %1507 = vmatprep.subr.bf16.mxu0 0
        %1508 = vmatpush1.bf16.msra.mxu0 0
        %1509 = vmatprep.subr.bf16.mxu0 0
        %1510 = vmatpush1.bf16.msra.mxu0 0
        %1511 = vmatprep.subr.bf16.mxu0 0
        %1512 = vmatpush1.bf16.msra.mxu0 0
        %1513 = vmatprep.subr.bf16.mxu0 0
        %1514 = vmatpush1.bf16.msra.mxu0 0
        %1515 = vmatprep.subr.bf16.mxu0 0
        %1516 = vmatpush1.bf16.msra.mxu0 0
        %1517 = vmatprep.subr.bf16.mxu0 0
        %1518 = vmatpush1.bf16.msra.mxu0 0
        %1519 = vmatprep.subr.bf16.mxu0 0
        %1520 = vmatpush1.bf16.msra.mxu0 0
        %1521 = vmatprep.subr.bf16.mxu0 0
        %1522 = vmatpush1.bf16.msra.mxu0 0
        %1523 = vmatprep.subr.bf16.mxu0 0
        %1524 = vmatpush1.bf16.msra.mxu0 0
        %1525 = vmatprep.subr.bf16.mxu0 0
        %1526 = vmatpush1.bf16.msra.mxu0 0
        %1527 = vmatprep.subr.bf16.mxu0 0
        %1528 = vmatpush1.bf16.msra.mxu0 0
        %1529 = vmatprep.subr.bf16.mxu0 0
        %1530 = vmatpush1.bf16.msra.mxu0 0
        %1531 = vmatprep.subr.bf16.mxu0 0
        %1532 = vmatpush1.bf16.msra.mxu0 0
        %1533 = vmatprep.subr.bf16.mxu0 0
        %1534 = vmatpush1.bf16.msra.mxu0 0
        %1535 = vmatprep.mubr.bf16.mxu0 0
        %1536 = vmatmul.mubr.bf16.gmra.mrb[0].mxu0 %v1501
        %v1537 = vpop.f32.mrb[0].mxu0
        %v1538 = vadd.f32 0.0, %v1537
        %v1539 = vpop.f32.mrb[0].mxu0
        %v1540 = vpop.f32.mrb[0].mxu0
        %v1541 = vadd.f32 0.0, %v1540
        %v1542 = vpop.f32.mrb[0].mxu0
        %1543 = vdwg.mxu0
        %v1545 = vsel %vm746, %v1407, 0
        %1547 = vmatprep.subr.bf16.mxu0 0
        %1548 = vmatpush1.bf16.msra.mxu0 %v601
        %1549 = vmatprep.subr.bf16.mxu0 0
        %1550 = vmatpush1.bf16.msra.mxu0 0
        %1551 = vmatprep.subr.bf16.mxu0 0
        %1552 = vmatpush1.bf16.msra.mxu0 0
        %1553 = vmatprep.subr.bf16.mxu0 0
        %1554 = vmatpush1.bf16.msra.mxu0 0
        %1555 = vmatprep.subr.bf16.mxu0 0
        %1556 = vmatpush1.bf16.msra.mxu0 0
        %1557 = vmatprep.subr.bf16.mxu0 0
        %1558 = vmatpush1.bf16.msra.mxu0 0
        %1559 = vmatprep.subr.bf16.mxu0 0
        %1560 = vmatpush1.bf16.msra.mxu0 0
        %1561 = vmatprep.subr.bf16.mxu0 0
        %1562 = vmatpush1.bf16.msra.mxu0 0
        %1563 = vmatprep.subr.bf16.mxu0 0
        %1564 = vmatpush1.bf16.msra.mxu0 0
        %1565 = vmatprep.subr.bf16.mxu0 0
        %1566 = vmatpush1.bf16.msra.mxu0 0
        %1567 = vmatprep.subr.bf16.mxu0 0
        %1568 = vmatpush1.bf16.msra.mxu0 0
        %1569 = vmatprep.subr.bf16.mxu0 0
        %1570 = vmatpush1.bf16.msra.mxu0 0
        %1571 = vmatprep.subr.bf16.mxu0 0
        %1572 = vmatpush1.bf16.msra.mxu0 0
        %1573 = vmatprep.subr.bf16.mxu0 0
        %1574 = vmatpush1.bf16.msra.mxu0 0
        %1575 = vmatprep.subr.bf16.mxu0 0
        %1576 = vmatpush1.bf16.msra.mxu0 0
        %1577 = vmatprep.subr.bf16.mxu0 0
        %1578 = vmatpush1.bf16.msra.mxu0 0
        %1579 = vmatprep.mubr.bf16.mxu0 0
        %1580 = vmatmul.mubr.bf16.gmra.mrb[0].mxu0 %v1545
        %v1581 = vpop.f32.mrb[0].mxu0
        %v1582 = vadd.f32 0.0, %v1581
        %v1583 = vpop.f32.mrb[0].mxu0
        %v1584 = vpop.f32.mrb[0].mxu0
        %v1585 = vadd.f32 0.0, %v1584
        %v1586 = vpop.f32.mrb[0].mxu0
        %1587 = vdwg.mxu0
        %v1589 = vsel %vm746, %v1408, 0
        %1591 = vmatprep.subr.bf16.mxu0 0
        %1592 = vmatpush1.bf16.msra.mxu0 %v602
        %1593 = vmatprep.subr.bf16.mxu0 0
        %1594 = vmatpush1.bf16.msra.mxu0 0
        %1595 = vmatprep.subr.bf16.mxu0 0
        %1596 = vmatpush1.bf16.msra.mxu0 0
        %1597 = vmatprep.subr.bf16.mxu0 0
        %1598 = vmatpush1.bf16.msra.mxu0 0
        %1599 = vmatprep.subr.bf16.mxu0 0
        %1600 = vmatpush1.bf16.msra.mxu0 0
        %1601 = vmatprep.subr.bf16.mxu0 0
        %1602 = vmatpush1.bf16.msra.mxu0 0
        %1603 = vmatprep.subr.bf16.mxu0 0
        %1604 = vmatpush1.bf16.msra.mxu0 0
        %1605 = vmatprep.subr.bf16.mxu0 0
        %1606 = vmatpush1.bf16.msra.mxu0 0
        %1607 = vmatprep.subr.bf16.mxu0 0
        %1608 = vmatpush1.bf16.msra.mxu0 0
        %1609 = vmatprep.subr.bf16.mxu0 0
        %1610 = vmatpush1.bf16.msra.mxu0 0
        %1611 = vmatprep.subr.bf16.mxu0 0
        %1612 = vmatpush1.bf16.msra.mxu0 0
        %1613 = vmatprep.subr.bf16.mxu0 0
        %1614 = vmatpush1.bf16.msra.mxu0 0
        %1615 = vmatprep.subr.bf16.mxu0 0
        %1616 = vmatpush1.bf16.msra.mxu0 0
        %1617 = vmatprep.subr.bf16.mxu0 0
        %1618 = vmatpush1.bf16.msra.mxu0 0
        %1619 = vmatprep.subr.bf16.mxu0 0
        %1620 = vmatpush1.bf16.msra.mxu0 0
        %1621 = vmatprep.subr.bf16.mxu0 0
        %1622 = vmatpush1.bf16.msra.mxu0 0
        %1623 = vmatprep.mubr.bf16.mxu0 0
        %1624 = vmatmul.mubr.bf16.gmra.mrb[0].mxu0 %v1589
        %v1625 = vpop.f32.mrb[0].mxu0
        %v1626 = vadd.f32 0.0, %v1625
        %v1627 = vpop.f32.mrb[0].mxu0
        %v1628 = vpop.f32.mrb[0].mxu0
        %v1629 = vadd.f32 0.0, %v1628
        %v1630 = vpop.f32.mrb[0].mxu0
        %1631 = vdwg.mxu0
        %v1633 = vsel %vm746, %v1409, 0
        %1635 = vmatprep.subr.bf16.mxu0 0
        %1636 = vmatpush1.bf16.msra.mxu0 %v603
        %1637 = vmatprep.subr.bf16.mxu0 0
        %1638 = vmatpush1.bf16.msra.mxu0 0
        %1639 = vmatprep.subr.bf16.mxu0 0
        %1640 = vmatpush1.bf16.msra.mxu0 0
        %1641 = vmatprep.subr.bf16.mxu0 0
        %1642 = vmatpush1.bf16.msra.mxu0 0
        %1643 = vmatprep.subr.bf16.mxu0 0
        %1644 = vmatpush1.bf16.msra.mxu0 0
        %1645 = vmatprep.subr.bf16.mxu0 0
        %1646 = vmatpush1.bf16.msra.mxu0 0
        %1647 = vmatprep.subr.bf16.mxu0 0
        %1648 = vmatpush1.bf16.msra.mxu0 0
        %1649 = vmatprep.subr.bf16.mxu0 0
        %1650 = vmatpush1.bf16.msra.mxu0 0
        %1651 = vmatprep.subr.bf16.mxu0 0
        %1652 = vmatpush1.bf16.msra.mxu0 0
        %1653 = vmatprep.subr.bf16.mxu0 0
        %1654 = vmatpush1.bf16.msra.mxu0 0
        %1655 = vmatprep.subr.bf16.mxu0 0
        %1656 = vmatpush1.bf16.msra.mxu0 0
        %1657 = vmatprep.subr.bf16.mxu0 0
        %1658 = vmatpush1.bf16.msra.mxu0 0
        %1659 = vmatprep.subr.bf16.mxu0 0
        %1660 = vmatpush1.bf16.msra.mxu0 0
        %1661 = vmatprep.subr.bf16.mxu0 0
        %1662 = vmatpush1.bf16.msra.mxu0 0
        %1663 = vmatprep.subr.bf16.mxu0 0
        %1664 = vmatpush1.bf16.msra.mxu0 0
        %1665 = vmatprep.subr.bf16.mxu0 0
        %1666 = vmatpush1.bf16.msra.mxu0 0
        %1667 = vmatprep.mubr.bf16.mxu0 0
        %1668 = vmatmul.mubr.bf16.gmra.mrb[0].mxu0 %v1633
        %v1669 = vpop.f32.mrb[0].mxu0
        %v1670 = vadd.f32 0.0, %v1669
        %v1671 = vpop.f32.mrb[0].mxu0
        %v1672 = vpop.f32.mrb[0].mxu0
        %v1673 = vadd.f32 0.0, %v1672
        %v1674 = vpop.f32.mrb[0].mxu0
        %1675 = vdwg.mxu0
        %v1677 = vsel %vm746, %v1410, 0
        %1679 = vmatprep.subr.bf16.mxu0 0
        %1680 = vmatpush1.bf16.msra.mxu0 %v604
        %1681 = vmatprep.subr.bf16.mxu0 0
        %1682 = vmatpush1.bf16.msra.mxu0 0
        %1683 = vmatprep.subr.bf16.mxu0 0
        %1684 = vmatpush1.bf16.msra.mxu0 0
        %1685 = vmatprep.subr.bf16.mxu0 0
        %1686 = vmatpush1.bf16.msra.mxu0 0
        %1687 = vmatprep.subr.bf16.mxu0 0
        %1688 = vmatpush1.bf16.msra.mxu0 0
        %1689 = vmatprep.subr.bf16.mxu0 0
        %1690 = vmatpush1.bf16.msra.mxu0 0
        %1691 = vmatprep.subr.bf16.mxu0 0
        %1692 = vmatpush1.bf16.msra.mxu0 0
        %1693 = vmatprep.subr.bf16.mxu0 0
        %1694 = vmatpush1.bf16.msra.mxu0 0
        %1695 = vmatprep.subr.bf16.mxu0 0
        %1696 = vmatpush1.bf16.msra.mxu0 0
        %1697 = vmatprep.subr.bf16.mxu0 0
        %1698 = vmatpush1.bf16.msra.mxu0 0
        %1699 = vmatprep.subr.bf16.mxu0 0
        %1700 = vmatpush1.bf16.msra.mxu0 0
        %1701 = vmatprep.subr.bf16.mxu0 0
        %1702 = vmatpush1.bf16.msra.mxu0 0
        %1703 = vmatprep.subr.bf16.mxu0 0
        %1704 = vmatpush1.bf16.msra.mxu0 0
        %1705 = vmatprep.subr.bf16.mxu0 0
        %1706 = vmatpush1.bf16.msra.mxu0 0
        %1707 = vmatprep.subr.bf16.mxu0 0
        %1708 = vmatpush1.bf16.msra.mxu0 0
        %1709 = vmatprep.subr.bf16.mxu0 0
        %1710 = vmatpush1.bf16.msra.mxu0 0
        %1711 = vmatprep.mubr.bf16.mxu0 0
        %1712 = vmatmul.mubr.bf16.gmra.mrb[0].mxu0 %v1677
        %v1713 = vpop.f32.mrb[0].mxu0
        %v1714 = vadd.f32 0.0, %v1713
        %v1715 = vpop.f32.mrb[0].mxu0
        %v1716 = vpop.f32.mrb[0].mxu0
        %v1717 = vadd.f32 0.0, %v1716
        %v1718 = vpop.f32.mrb[0].mxu0
        %1719 = vdwg.mxu0
        %v1721 = vsel %vm746, %v1411, 0
        %1723 = vmatprep.subr.bf16.mxu0 0
        %1724 = vmatpush1.bf16.msra.mxu0 %v605
        %1725 = vmatprep.subr.bf16.mxu0 0
        %1726 = vmatpush1.bf16.msra.mxu0 0
        %1727 = vmatprep.subr.bf16.mxu0 0
        %1728 = vmatpush1.bf16.msra.mxu0 0
        %1729 = vmatprep.subr.bf16.mxu0 0
        %1730 = vmatpush1.bf16.msra.mxu0 0
        %1731 = vmatprep.subr.bf16.mxu0 0
        %1732 = vmatpush1.bf16.msra.mxu0 0
        %1733 = vmatprep.subr.bf16.mxu0 0
        %1734 = vmatpush1.bf16.msra.mxu0 0
        %1735 = vmatprep.subr.bf16.mxu0 0
        %1736 = vmatpush1.bf16.msra.mxu0 0
        %1737 = vmatprep.subr.bf16.mxu0 0
        %1738 = vmatpush1.bf16.msra.mxu0 0
        %1739 = vmatprep.subr.bf16.mxu0 0
        %1740 = vmatpush1.bf16.msra.mxu0 0
        %1741 = vmatprep.subr.bf16.mxu0 0
        %1742 = vmatpush1.bf16.msra.mxu0 0
        %1743 = vmatprep.subr.bf16.mxu0 0
        %1744 = vmatpush1.bf16.msra.mxu0 0
        %1745 = vmatprep.subr.bf16.mxu0 0
        %1746 = vmatpush1.bf16.msra.mxu0 0
        %1747 = vmatprep.subr.bf16.mxu0 0
        %1748 = vmatpush1.bf16.msra.mxu0 0
        %1749 = vmatprep.subr.bf16.mxu0 0
        %1750 = vmatpush1.bf16.msra.mxu0 0
        %1751 = vmatprep.subr.bf16.mxu0 0
        %1752 = vmatpush1.bf16.msra.mxu0 0
        %1753 = vmatprep.subr.bf16.mxu0 0
        %1754 = vmatpush1.bf16.msra.mxu0 0
        %1755 = vmatprep.mubr.bf16.mxu0 0
        %1756 = vmatmul.mubr.bf16.gmra.mrb[0].mxu0 %v1721
        %v1757 = vpop.f32.mrb[0].mxu0
        %v1758 = vadd.f32 0.0, %v1757
        %v1759 = vpop.f32.mrb[0].mxu0
        %v1760 = vpop.f32.mrb[0].mxu0
        %v1761 = vadd.f32 0.0, %v1760
        %v1762 = vpop.f32.mrb[0].mxu0
        %1763 = vdwg.mxu0
        %1780 = vrot.lane.b32.xlu0 %v696, 64
        %v1781 = vpop.permute.xlu0 %1780
        %1782 = vrot.lane.b32.xlu0 %v698, 64
        %v1783 = vpop.permute.xlu0 %1782
        %1784 = vrot.lane.b32.xlu0 %v700, 64
        %v1785 = vpop.permute.xlu0 %1784
        %1786 = vrot.lane.b32.xlu0 %v702, 64
        %v1787 = vpop.permute.xlu0 %1786
        %1788 = vrot.lane.b32.xlu0 %v704, 64
        %v1789 = vpop.permute.xlu0 %1788
        %1790 = vrot.lane.b32.xlu0 %v706, 64
        %v1791 = vpop.permute.xlu0 %1790
        %1792 = vrot.lane.b32.xlu0 %v708, 64
        %v1793 = vpop.permute.xlu0 %1792
        %1794 = vrot.lane.b32.xlu0 %v710, 64
        %v1795 = vpop.permute.xlu0 %1794
        %1796 = vrot.lane.b32.xlu0 %v712, 64
        %v1797 = vpop.permute.xlu0 %1796
        %1798 = vrot.lane.b32.xlu0 %v714, 64
        %v1799 = vpop.permute.xlu0 %1798
        %1800 = vrot.lane.b32.xlu0 %v716, 64
        %v1801 = vpop.permute.xlu0 %1800
        %1802 = vrot.lane.b32.xlu0 %v718, 64
        %v1803 = vpop.permute.xlu0 %1802
        %1804 = vrot.lane.b32.xlu0 %v720, 64
        %v1805 = vpop.permute.xlu0 %1804
        %1806 = vrot.lane.b32.xlu0 %v722, 64
        %v1807 = vpop.permute.xlu0 %1806
        %1808 = vrot.lane.b32.xlu0 %v724, 64
        %v1809 = vpop.permute.xlu0 %1808
        %1810 = vrot.lane.b32.xlu0 %v726, 64
        %v1811 = vpop.permute.xlu0 %1810
        %v1828 = vmul.f32 %v1450, %v1781
        %v1829 = vmul.f32 %v1453, %v1783
        %v1830 = vmul.f32 %v1494, %v1785
        %v1831 = vmul.f32 %v1497, %v1787
        %v1832 = vmul.f32 %v1538, %v1789
        %v1833 = vmul.f32 %v1541, %v1791
        %v1834 = vmul.f32 %v1582, %v1793
        %v1835 = vmul.f32 %v1585, %v1795
        %v1836 = vmul.f32 %v1626, %v1797
        %v1837 = vmul.f32 %v1629, %v1799
        %v1838 = vmul.f32 %v1670, %v1801
        %v1839 = vmul.f32 %v1673, %v1803
        %v1840 = vmul.f32 %v1714, %v1805
        %v1841 = vmul.f32 %v1717, %v1807
        %v1842 = vmul.f32 %v1758, %v1809
        %v1843 = vmul.f32 %v1761, %v1811
        %v1844 = vpack.c.bf16 %v1829, %v1828
        %v1845 = vpack.c.bf16 %v1831, %v1830
        %v1846 = vpack.c.bf16 %v1833, %v1832
        %v1847 = vpack.c.bf16 %v1835, %v1834
        %v1848 = vpack.c.bf16 %v1837, %v1836
        %v1849 = vpack.c.bf16 %v1839, %v1838
        %v1850 = vpack.c.bf16 %v1841, %v1840
        %v1851 = vpack.c.bf16 %v1843, %v1842
        %1852 = vst.msk [vmem:[#allocation2] sm:$0xff] %vm746, %v1844
        %1853 = vst.msk [vmem:[#allocation2 + $0x8] sm:$0xff] %vm746, %v1845
        %1854 = vst.msk [vmem:[#allocation2 + $0x10] sm:$0xff] %vm746, %v1846
        %1855 = vst.msk [vmem:[#allocation2 + $0x18] sm:$0xff] %vm746, %v1847
        %1856 = vst.msk [vmem:[#allocation2 + $0x20] sm:$0xff] %vm746, %v1848
        %1857 = vst.msk [vmem:[#allocation2 + $0x28] sm:$0xff] %vm746, %v1849
        %1858 = vst.msk [vmem:[#allocation2 + $0x30] sm:$0xff] %vm746, %v1850
        %1859 = vst.msk [vmem:[#allocation2 + $0x38] sm:$0xff] %vm746, %v1851
        %1860 = vrot.lane.b32.xlu0 %v590, 112
        %v1861 = vpop.permute.xlu0 %1860
        %1862 = vrot.lane.b32.xlu0 %v590, 48
        %v1863 = vpop.permute.xlu0 %1862
        %v1865 = vsel %vm746, %v1861, 0
        %v1868 = vsel %vm746, %v1863, 0
        %1870 = vmatprep.subr.bf16.mxu0 0
        %1871 = vmatpush1.bf16.xpose.msra.mxu0 %v1868
        %1872 = vmatprep.subr.bf16.mxu0 0
        %1873 = vmatpush1.bf16.xpose.msra.mxu0 0
        %1874 = vmatprep.subr.bf16.mxu0 0
        %1875 = vmatpush1.bf16.xpose.msra.mxu0 0
        %1876 = vmatprep.subr.bf16.mxu0 0
        %1877 = vmatpush1.bf16.xpose.msra.mxu0 0
        %1878 = vmatprep.subr.bf16.mxu0 0
        %1879 = vmatpush1.bf16.xpose.msra.mxu0 0
        %1880 = vmatprep.subr.bf16.mxu0 0
        %1881 = vmatpush1.bf16.xpose.msra.mxu0 0
        %1882 = vmatprep.subr.bf16.mxu0 0
        %1883 = vmatpush1.bf16.xpose.msra.mxu0 0
        %1884 = vmatprep.subr.bf16.mxu0 0
        %1885 = vmatpush1.bf16.xpose.msra.mxu0 0
        %1886 = vmatprep.subr.bf16.mxu0 0
        %1887 = vmatpush1.bf16.xpose.msra.mxu0 0
        %1888 = vmatprep.subr.bf16.mxu0 0
        %1889 = vmatpush1.bf16.xpose.msra.mxu0 0
        %1890 = vmatprep.subr.bf16.mxu0 0
        %1891 = vmatpush1.bf16.xpose.msra.mxu0 0
        %1892 = vmatprep.subr.bf16.mxu0 0
        %1893 = vmatpush1.bf16.xpose.msra.mxu0 0
        %1894 = vmatprep.subr.bf16.mxu0 0
        %1895 = vmatpush1.bf16.xpose.msra.mxu0 0
        %1896 = vmatprep.subr.bf16.mxu0 0
        %1897 = vmatpush1.bf16.xpose.msra.mxu0 0
        %1898 = vmatprep.subr.bf16.mxu0 0
        %1899 = vmatpush1.bf16.xpose.msra.mxu0 0
        %1900 = vmatprep.subr.bf16.mxu0 0
        %1901 = vmatpush1.bf16.xpose.msra.mxu0 0
        %1902 = vmatprep.mubr.bf16.mxu0 0
        %1903 = vmatmul.mubr.bf16.gmra.mrb[0].mxu0 %v1865
        %v1904 = vpop.f32.mrb[0].mxu0
        %v1905 = vadd.f32 0.0, %v1904
        %v1906 = vpop.f32.mrb[0].mxu0
        %v1907 = vpop.f32.mrb[0].mxu0
        %v1908 = vadd.f32 0.0, %v1907
        %v1909 = vpop.f32.mrb[0].mxu0
        %1910 = vdwg.mxu0
        %1911 = vrot.lane.b32.xlu0 %v591, 112
        %v1912 = vpop.permute.xlu0 %1911
        %1913 = vrot.lane.b32.xlu0 %v591, 48
        %v1914 = vpop.permute.xlu0 %1913
        %v1916 = vsel %vm746, %v1912, 0
        %v1919 = vsel %vm746, %v1914, 0
        %1921 = vmatprep.subr.bf16.mxu0 0
        %1922 = vmatpush1.bf16.xpose.msra.mxu0 %v1919
        %1923 = vmatprep.subr.bf16.mxu0 0
        %1924 = vmatpush1.bf16.xpose.msra.mxu0 0
        %1925 = vmatprep.subr.bf16.mxu0 0
        %1926 = vmatpush1.bf16.xpose.msra.mxu0 0
        %1927 = vmatprep.subr.bf16.mxu0 0
        %1928 = vmatpush1.bf16.xpose.msra.mxu0 0
        %1929 = vmatprep.subr.bf16.mxu0 0
        %1930 = vmatpush1.bf16.xpose.msra.mxu0 0
        %1931 = vmatprep.subr.bf16.mxu0 0
        %1932 = vmatpush1.bf16.xpose.msra.mxu0 0
        %1933 = vmatprep.subr.bf16.mxu0 0
        %1934 = vmatpush1.bf16.xpose.msra.mxu0 0
        %1935 = vmatprep.subr.bf16.mxu0 0
        %1936 = vmatpush1.bf16.xpose.msra.mxu0 0
        %1937 = vmatprep.subr.bf16.mxu0 0
        %1938 = vmatpush1.bf16.xpose.msra.mxu0 0
        %1939 = vmatprep.subr.bf16.mxu0 0
        %1940 = vmatpush1.bf16.xpose.msra.mxu0 0
        %1941 = vmatprep.subr.bf16.mxu0 0
        %1942 = vmatpush1.bf16.xpose.msra.mxu0 0
        %1943 = vmatprep.subr.bf16.mxu0 0
        %1944 = vmatpush1.bf16.xpose.msra.mxu0 0
        %1945 = vmatprep.subr.bf16.mxu0 0
        %1946 = vmatpush1.bf16.xpose.msra.mxu0 0
        %1947 = vmatprep.subr.bf16.mxu0 0
        %1948 = vmatpush1.bf16.xpose.msra.mxu0 0
        %1949 = vmatprep.subr.bf16.mxu0 0
        %1950 = vmatpush1.bf16.xpose.msra.mxu0 0
        %1951 = vmatprep.subr.bf16.mxu0 0
        %1952 = vmatpush1.bf16.xpose.msra.mxu0 0
        %1953 = vmatprep.mubr.bf16.mxu0 0
        %1954 = vmatmul.mubr.bf16.gmra.mrb[0].mxu0 %v1916
        %v1955 = vpop.f32.mrb[0].mxu0
        %v1956 = vadd.f32 0.0, %v1955
        %v1957 = vpop.f32.mrb[0].mxu0
        %v1958 = vpop.f32.mrb[0].mxu0
        %v1959 = vadd.f32 0.0, %v1958
        %v1960 = vpop.f32.mrb[0].mxu0
        %1961 = vdwg.mxu0
        %1962 = vrot.lane.b32.xlu0 %v592, 112
        %v1963 = vpop.permute.xlu0 %1962
        %1964 = vrot.lane.b32.xlu0 %v592, 48
        %v1965 = vpop.permute.xlu0 %1964
        %v1967 = vsel %vm746, %v1963, 0
        %v1970 = vsel %vm746, %v1965, 0
        %1972 = vmatprep.subr.bf16.mxu0 0
        %1973 = vmatpush1.bf16.xpose.msra.mxu0 %v1970
        %1974 = vmatprep.subr.bf16.mxu0 0
        %1975 = vmatpush1.bf16.xpose.msra.mxu0 0
        %1976 = vmatprep.subr.bf16.mxu0 0
        %1977 = vmatpush1.bf16.xpose.msra.mxu0 0
        %1978 = vmatprep.subr.bf16.mxu0 0
        %1979 = vmatpush1.bf16.xpose.msra.mxu0 0
        %1980 = vmatprep.subr.bf16.mxu0 0
        %1981 = vmatpush1.bf16.xpose.msra.mxu0 0
        %1982 = vmatprep.subr.bf16.mxu0 0
        %1983 = vmatpush1.bf16.xpose.msra.mxu0 0
        %1984 = vmatprep.subr.bf16.mxu0 0
        %1985 = vmatpush1.bf16.xpose.msra.mxu0 0
        %1986 = vmatprep.subr.bf16.mxu0 0
        %1987 = vmatpush1.bf16.xpose.msra.mxu0 0
        %1988 = vmatprep.subr.bf16.mxu0 0
        %1989 = vmatpush1.bf16.xpose.msra.mxu0 0
        %1990 = vmatprep.subr.bf16.mxu0 0
        %1991 = vmatpush1.bf16.xpose.msra.mxu0 0
        %1992 = vmatprep.subr.bf16.mxu0 0
        %1993 = vmatpush1.bf16.xpose.msra.mxu0 0
        %1994 = vmatprep.subr.bf16.mxu0 0
        %1995 = vmatpush1.bf16.xpose.msra.mxu0 0
        %1996 = vmatprep.subr.bf16.mxu0 0
        %1997 = vmatpush1.bf16.xpose.msra.mxu0 0
        %1998 = vmatprep.subr.bf16.mxu0 0
        %1999 = vmatpush1.bf16.xpose.msra.mxu0 0
        %2000 = vmatprep.subr.bf16.mxu0 0
        %2001 = vmatpush1.bf16.xpose.msra.mxu0 0
        %2002 = vmatprep.subr.bf16.mxu0 0
        %2003 = vmatpush1.bf16.xpose.msra.mxu0 0
        %2004 = vmatprep.mubr.bf16.mxu0 0
        %2005 = vmatmul.mubr.bf16.gmra.mrb[0].mxu0 %v1967
        %v2006 = vpop.f32.mrb[0].mxu0
        %v2007 = vadd.f32 0.0, %v2006
        %v2008 = vpop.f32.mrb[0].mxu0
        %v2009 = vpop.f32.mrb[0].mxu0
        %v2010 = vadd.f32 0.0, %v2009
        %v2011 = vpop.f32.mrb[0].mxu0
        %2012 = vdwg.mxu0
        %2013 = vrot.lane.b32.xlu0 %v593, 112
        %v2014 = vpop.permute.xlu0 %2013
        %2015 = vrot.lane.b32.xlu0 %v593, 48
        %v2016 = vpop.permute.xlu0 %2015
        %v2018 = vsel %vm746, %v2014, 0
        %v2021 = vsel %vm746, %v2016, 0
        %2023 = vmatprep.subr.bf16.mxu0 0
        %2024 = vmatpush1.bf16.xpose.msra.mxu0 %v2021
        %2025 = vmatprep.subr.bf16.mxu0 0
        %2026 = vmatpush1.bf16.xpose.msra.mxu0 0
        %2027 = vmatprep.subr.bf16.mxu0 0
        %2028 = vmatpush1.bf16.xpose.msra.mxu0 0
        %2029 = vmatprep.subr.bf16.mxu0 0
        %2030 = vmatpush1.bf16.xpose.msra.mxu0 0
        %2031 = vmatprep.subr.bf16.mxu0 0
        %2032 = vmatpush1.bf16.xpose.msra.mxu0 0
        %2033 = vmatprep.subr.bf16.mxu0 0
        %2034 = vmatpush1.bf16.xpose.msra.mxu0 0
        %2035 = vmatprep.subr.bf16.mxu0 0
        %2036 = vmatpush1.bf16.xpose.msra.mxu0 0
        %2037 = vmatprep.subr.bf16.mxu0 0
        %2038 = vmatpush1.bf16.xpose.msra.mxu0 0
        %2039 = vmatprep.subr.bf16.mxu0 0
        %2040 = vmatpush1.bf16.xpose.msra.mxu0 0
        %2041 = vmatprep.subr.bf16.mxu0 0
        %2042 = vmatpush1.bf16.xpose.msra.mxu0 0
        %2043 = vmatprep.subr.bf16.mxu0 0
        %2044 = vmatpush1.bf16.xpose.msra.mxu0 0
        %2045 = vmatprep.subr.bf16.mxu0 0
        %2046 = vmatpush1.bf16.xpose.msra.mxu0 0
        %2047 = vmatprep.subr.bf16.mxu0 0
        %2048 = vmatpush1.bf16.xpose.msra.mxu0 0
        %2049 = vmatprep.subr.bf16.mxu0 0
        %2050 = vmatpush1.bf16.xpose.msra.mxu0 0
        %2051 = vmatprep.subr.bf16.mxu0 0
        %2052 = vmatpush1.bf16.xpose.msra.mxu0 0
        %2053 = vmatprep.subr.bf16.mxu0 0
        %2054 = vmatpush1.bf16.xpose.msra.mxu0 0
        %2055 = vmatprep.mubr.bf16.mxu0 0
        %2056 = vmatmul.mubr.bf16.gmra.mrb[0].mxu0 %v2018
        %v2057 = vpop.f32.mrb[0].mxu0
        %v2058 = vadd.f32 0.0, %v2057
        %v2059 = vpop.f32.mrb[0].mxu0
        %v2060 = vpop.f32.mrb[0].mxu0
        %v2061 = vadd.f32 0.0, %v2060
        %v2062 = vpop.f32.mrb[0].mxu0
        %2063 = vdwg.mxu0
        %2064 = vrot.lane.b32.xlu0 %v594, 112
        %v2065 = vpop.permute.xlu0 %2064
        %2066 = vrot.lane.b32.xlu0 %v594, 48
        %v2067 = vpop.permute.xlu0 %2066
        %v2069 = vsel %vm746, %v2065, 0
        %v2072 = vsel %vm746, %v2067, 0
        %2074 = vmatprep.subr.bf16.mxu0 0
        %2075 = vmatpush1.bf16.xpose.msra.mxu0 %v2072
        %2076 = vmatprep.subr.bf16.mxu0 0
        %2077 = vmatpush1.bf16.xpose.msra.mxu0 0
        %2078 = vmatprep.subr.bf16.mxu0 0
        %2079 = vmatpush1.bf16.xpose.msra.mxu0 0
        %2080 = vmatprep.subr.bf16.mxu0 0
        %2081 = vmatpush1.bf16.xpose.msra.mxu0 0
        %2082 = vmatprep.subr.bf16.mxu0 0
        %2083 = vmatpush1.bf16.xpose.msra.mxu0 0
        %2084 = vmatprep.subr.bf16.mxu0 0
        %2085 = vmatpush1.bf16.xpose.msra.mxu0 0
        %2086 = vmatprep.subr.bf16.mxu0 0
        %2087 = vmatpush1.bf16.xpose.msra.mxu0 0
        %2088 = vmatprep.subr.bf16.mxu0 0
        %2089 = vmatpush1.bf16.xpose.msra.mxu0 0
        %2090 = vmatprep.subr.bf16.mxu0 0
        %2091 = vmatpush1.bf16.xpose.msra.mxu0 0
        %2092 = vmatprep.subr.bf16.mxu0 0
        %2093 = vmatpush1.bf16.xpose.msra.mxu0 0
        %2094 = vmatprep.subr.bf16.mxu0 0
        %2095 = vmatpush1.bf16.xpose.msra.mxu0 0
        %2096 = vmatprep.subr.bf16.mxu0 0
        %2097 = vmatpush1.bf16.xpose.msra.mxu0 0
        %2098 = vmatprep.subr.bf16.mxu0 0
        %2099 = vmatpush1.bf16.xpose.msra.mxu0 0
        %2100 = vmatprep.subr.bf16.mxu0 0
        %2101 = vmatpush1.bf16.xpose.msra.mxu0 0
        %2102 = vmatprep.subr.bf16.mxu0 0
        %2103 = vmatpush1.bf16.xpose.msra.mxu0 0
        %2104 = vmatprep.subr.bf16.mxu0 0
        %2105 = vmatpush1.bf16.xpose.msra.mxu0 0
        %2106 = vmatprep.mubr.bf16.mxu0 0
        %2107 = vmatmul.mubr.bf16.gmra.mrb[0].mxu0 %v2069
        %v2108 = vpop.f32.mrb[0].mxu0
        %v2109 = vadd.f32 0.0, %v2108
        %v2110 = vpop.f32.mrb[0].mxu0
        %v2111 = vpop.f32.mrb[0].mxu0
        %v2112 = vadd.f32 0.0, %v2111
        %v2113 = vpop.f32.mrb[0].mxu0
        %2114 = vdwg.mxu0
        %2115 = vrot.lane.b32.xlu0 %v595, 112
        %v2116 = vpop.permute.xlu0 %2115
        %2117 = vrot.lane.b32.xlu0 %v595, 48
        %v2118 = vpop.permute.xlu0 %2117
        %v2120 = vsel %vm746, %v2116, 0
        %v2123 = vsel %vm746, %v2118, 0
        %2125 = vmatprep.subr.bf16.mxu0 0
        %2126 = vmatpush1.bf16.xpose.msra.mxu0 %v2123
        %2127 = vmatprep.subr.bf16.mxu0 0
        %2128 = vmatpush1.bf16.xpose.msra.mxu0 0
        %2129 = vmatprep.subr.bf16.mxu0 0
        %2130 = vmatpush1.bf16.xpose.msra.mxu0 0
        %2131 = vmatprep.subr.bf16.mxu0 0
        %2132 = vmatpush1.bf16.xpose.msra.mxu0 0
        %2133 = vmatprep.subr.bf16.mxu0 0
        %2134 = vmatpush1.bf16.xpose.msra.mxu0 0
        %2135 = vmatprep.subr.bf16.mxu0 0
        %2136 = vmatpush1.bf16.xpose.msra.mxu0 0
        %2137 = vmatprep.subr.bf16.mxu0 0
        %2138 = vmatpush1.bf16.xpose.msra.mxu0 0
        %2139 = vmatprep.subr.bf16.mxu0 0
        %2140 = vmatpush1.bf16.xpose.msra.mxu0 0
        %2141 = vmatprep.subr.bf16.mxu0 0
        %2142 = vmatpush1.bf16.xpose.msra.mxu0 0
        %2143 = vmatprep.subr.bf16.mxu0 0
        %2144 = vmatpush1.bf16.xpose.msra.mxu0 0
        %2145 = vmatprep.subr.bf16.mxu0 0
        %2146 = vmatpush1.bf16.xpose.msra.mxu0 0
        %2147 = vmatprep.subr.bf16.mxu0 0
        %2148 = vmatpush1.bf16.xpose.msra.mxu0 0
        %2149 = vmatprep.subr.bf16.mxu0 0
        %2150 = vmatpush1.bf16.xpose.msra.mxu0 0
        %2151 = vmatprep.subr.bf16.mxu0 0
        %2152 = vmatpush1.bf16.xpose.msra.mxu0 0
        %2153 = vmatprep.subr.bf16.mxu0 0
        %2154 = vmatpush1.bf16.xpose.msra.mxu0 0
        %2155 = vmatprep.subr.bf16.mxu0 0
        %2156 = vmatpush1.bf16.xpose.msra.mxu0 0
        %2157 = vmatprep.mubr.bf16.mxu0 0
        %2158 = vmatmul.mubr.bf16.gmra.mrb[0].mxu0 %v2120
        %v2159 = vpop.f32.mrb[0].mxu0
        %v2160 = vadd.f32 0.0, %v2159
        %v2161 = vpop.f32.mrb[0].mxu0
        %v2162 = vpop.f32.mrb[0].mxu0
        %v2163 = vadd.f32 0.0, %v2162
        %v2164 = vpop.f32.mrb[0].mxu0
        %2165 = vdwg.mxu0
        %2166 = vrot.lane.b32.xlu0 %v596, 112
        %v2167 = vpop.permute.xlu0 %2166
        %2168 = vrot.lane.b32.xlu0 %v596, 48
        %v2169 = vpop.permute.xlu0 %2168
        %v2171 = vsel %vm746, %v2167, 0
        %v2174 = vsel %vm746, %v2169, 0
        %2176 = vmatprep.subr.bf16.mxu0 0
        %2177 = vmatpush1.bf16.xpose.msra.mxu0 %v2174
        %2178 = vmatprep.subr.bf16.mxu0 0
        %2179 = vmatpush1.bf16.xpose.msra.mxu0 0
        %2180 = vmatprep.subr.bf16.mxu0 0
        %2181 = vmatpush1.bf16.xpose.msra.mxu0 0
        %2182 = vmatprep.subr.bf16.mxu0 0
        %2183 = vmatpush1.bf16.xpose.msra.mxu0 0
        %2184 = vmatprep.subr.bf16.mxu0 0
        %2185 = vmatpush1.bf16.xpose.msra.mxu0 0
        %2186 = vmatprep.subr.bf16.mxu0 0
        %2187 = vmatpush1.bf16.xpose.msra.mxu0 0
        %2188 = vmatprep.subr.bf16.mxu0 0
        %2189 = vmatpush1.bf16.xpose.msra.mxu0 0
        %2190 = vmatprep.subr.bf16.mxu0 0
        %2191 = vmatpush1.bf16.xpose.msra.mxu0 0
        %2192 = vmatprep.subr.bf16.mxu0 0
        %2193 = vmatpush1.bf16.xpose.msra.mxu0 0
        %2194 = vmatprep.subr.bf16.mxu0 0
        %2195 = vmatpush1.bf16.xpose.msra.mxu0 0
        %2196 = vmatprep.subr.bf16.mxu0 0
        %2197 = vmatpush1.bf16.xpose.msra.mxu0 0
        %2198 = vmatprep.subr.bf16.mxu0 0
        %2199 = vmatpush1.bf16.xpose.msra.mxu0 0
        %2200 = vmatprep.subr.bf16.mxu0 0
        %2201 = vmatpush1.bf16.xpose.msra.mxu0 0
        %2202 = vmatprep.subr.bf16.mxu0 0
        %2203 = vmatpush1.bf16.xpose.msra.mxu0 0
        %2204 = vmatprep.subr.bf16.mxu0 0
        %2205 = vmatpush1.bf16.xpose.msra.mxu0 0
        %2206 = vmatprep.subr.bf16.mxu0 0
        %2207 = vmatpush1.bf16.xpose.msra.mxu0 0
        %2208 = vmatprep.mubr.bf16.mxu0 0
        %2209 = vmatmul.mubr.bf16.gmra.mrb[0].mxu0 %v2171
        %v2210 = vpop.f32.mrb[0].mxu0
        %v2211 = vadd.f32 0.0, %v2210
        %v2212 = vpop.f32.mrb[0].mxu0
        %v2213 = vpop.f32.mrb[0].mxu0
        %v2214 = vadd.f32 0.0, %v2213
        %v2215 = vpop.f32.mrb[0].mxu0
        %2216 = vdwg.mxu0
        %2217 = vrot.lane.b32.xlu0 %v597, 112
        %v2218 = vpop.permute.xlu0 %2217
        %2219 = vrot.lane.b32.xlu0 %v597, 48
        %v2220 = vpop.permute.xlu0 %2219
        %v2222 = vsel %vm746, %v2218, 0
        %v2225 = vsel %vm746, %v2220, 0
        %2227 = vmatprep.subr.bf16.mxu0 0
        %2228 = vmatpush1.bf16.xpose.msra.mxu0 %v2225
        %2229 = vmatprep.subr.bf16.mxu0 0
        %2230 = vmatpush1.bf16.xpose.msra.mxu0 0
        %2231 = vmatprep.subr.bf16.mxu0 0
        %2232 = vmatpush1.bf16.xpose.msra.mxu0 0
        %2233 = vmatprep.subr.bf16.mxu0 0
        %2234 = vmatpush1.bf16.xpose.msra.mxu0 0
        %2235 = vmatprep.subr.bf16.mxu0 0
        %2236 = vmatpush1.bf16.xpose.msra.mxu0 0
        %2237 = vmatprep.subr.bf16.mxu0 0
        %2238 = vmatpush1.bf16.xpose.msra.mxu0 0
        %2239 = vmatprep.subr.bf16.mxu0 0
        %2240 = vmatpush1.bf16.xpose.msra.mxu0 0
        %2241 = vmatprep.subr.bf16.mxu0 0
        %2242 = vmatpush1.bf16.xpose.msra.mxu0 0
        %2243 = vmatprep.subr.bf16.mxu0 0
        %2244 = vmatpush1.bf16.xpose.msra.mxu0 0
        %2245 = vmatprep.subr.bf16.mxu0 0
        %2246 = vmatpush1.bf16.xpose.msra.mxu0 0
        %2247 = vmatprep.subr.bf16.mxu0 0
        %2248 = vmatpush1.bf16.xpose.msra.mxu0 0
        %2249 = vmatprep.subr.bf16.mxu0 0
        %2250 = vmatpush1.bf16.xpose.msra.mxu0 0
        %2251 = vmatprep.subr.bf16.mxu0 0
        %2252 = vmatpush1.bf16.xpose.msra.mxu0 0
        %2253 = vmatprep.subr.bf16.mxu0 0
        %2254 = vmatpush1.bf16.xpose.msra.mxu0 0
        %2255 = vmatprep.subr.bf16.mxu0 0
        %2256 = vmatpush1.bf16.xpose.msra.mxu0 0
        %2257 = vmatprep.subr.bf16.mxu0 0
        %2258 = vmatpush1.bf16.xpose.msra.mxu0 0
        %2259 = vmatprep.mubr.bf16.mxu0 0
        %2260 = vmatmul.mubr.bf16.gmra.mrb[0].mxu0 %v2222
        %v2261 = vpop.f32.mrb[0].mxu0
        %v2262 = vadd.f32 0.0, %v2261
        %v2263 = vpop.f32.mrb[0].mxu0
        %v2264 = vpop.f32.mrb[0].mxu0
        %v2265 = vadd.f32 0.0, %v2264
        %v2266 = vpop.f32.mrb[0].mxu0
        %2267 = vdwg.mxu0
        %v2268 = vmul.f32 %v1905, 0.25
        %v2269 = vmul.f32 %v1908, 0.25
        %v2270 = vmul.f32 %v1956, 0.25
        %v2271 = vmul.f32 %v1959, 0.25
        %v2272 = vmul.f32 %v2007, 0.25
        %v2273 = vmul.f32 %v2010, 0.25
        %v2274 = vmul.f32 %v2058, 0.25
        %v2275 = vmul.f32 %v2061, 0.25
        %v2276 = vmul.f32 %v2109, 0.25
        %v2277 = vmul.f32 %v2112, 0.25
        %v2278 = vmul.f32 %v2160, 0.25
        %v2279 = vmul.f32 %v2163, 0.25
        %v2280 = vmul.f32 %v2211, 0.25
        %v2281 = vmul.f32 %v2214, 0.25
        %v2282 = vmul.f32 %v2262, 0.25
        %v2283 = vmul.f32 %v2265, 0.25
        %v2284 = vadd.f32 %v2268, %v1163
        %v2285 = vadd.f32 %v2269, %v1163
        %v2286 = vadd.f32 %v2270, %v1167
        %v2287 = vadd.f32 %v2271, %v1167
        %v2288 = vadd.f32 %v2272, %v1171
        %v2289 = vadd.f32 %v2273, %v1171
        %v2290 = vadd.f32 %v2274, %v1175
        %v2291 = vadd.f32 %v2275, %v1175
        %v2292 = vadd.f32 %v2276, %v1179
        %v2293 = vadd.f32 %v2277, %v1179
        %v2294 = vadd.f32 %v2278, %v1183
        %v2295 = vadd.f32 %v2279, %v1183
        %v2296 = vadd.f32 %v2280, %v1187
        %v2297 = vadd.f32 %v2281, %v1187
        %v2298 = vadd.f32 %v2282, %v1191
        %v2299 = vadd.f32 %v2283, %v1191
        %s2300 = scalar_lea.vmem %s369, 8
        %v2301 = vld [vmem:[%s2300] sm:$0xf]
        %v2302 = vld [vmem:[%s2300 + $0x4] sm:$0xf]
        %v2303 = vunpack.c.l.bf16 %v2301
        %v2304 = vunpack.c.l.bf16 %v2302
        %v2305 = vadd.f32 %v2284, %v2303
        %v2306 = vadd.f32 %v2285, %v2304
        %v2307 = vadd.f32 %v2286, %v2303
        %v2308 = vadd.f32 %v2287, %v2304
        %v2309 = vadd.f32 %v2288, %v2303
        %v2310 = vadd.f32 %v2289, %v2304
        %v2311 = vadd.f32 %v2290, %v2303
        %v2312 = vadd.f32 %v2291, %v2304
        %v2313 = vadd.f32 %v2292, %v2303
        %v2314 = vadd.f32 %v2293, %v2304
        %v2315 = vadd.f32 %v2294, %v2303
        %v2316 = vadd.f32 %v2295, %v2304
        %v2317 = vadd.f32 %v2296, %v2303
        %v2318 = vadd.f32 %v2297, %v2304
        %v2319 = vadd.f32 %v2298, %v2303
        %v2320 = vadd.f32 %v2299, %v2304
        %v2321 = vsel %vm746, %v2305, -inf
        %2322 = vmax.xlane.f32.xlu0 %v2321
        %v2323 = vpop.xlane.xlu0 %2322
        %v2324 = vsel %vm746, %v2306, -inf
        %2325 = vmax.xlane.f32.xlu0 %v2324
        %v2326 = vpop.xlane.xlu0 %2325
        %v2327 = vsel %vm746, %v2307, -inf
        %2328 = vmax.xlane.f32.xlu0 %v2327
        %v2329 = vpop.xlane.xlu0 %2328
        %v2330 = vsel %vm746, %v2308, -inf
        %2331 = vmax.xlane.f32.xlu0 %v2330
        %v2332 = vpop.xlane.xlu0 %2331
        %v2333 = vsel %vm746, %v2309, -inf
        %2334 = vmax.xlane.f32.xlu0 %v2333
        %v2335 = vpop.xlane.xlu0 %2334
        %v2336 = vsel %vm746, %v2310, -inf
        %2337 = vmax.xlane.f32.xlu0 %v2336
        %v2338 = vpop.xlane.xlu0 %2337
        %v2339 = vsel %vm746, %v2311, -inf
        %2340 = vmax.xlane.f32.xlu0 %v2339
        %v2341 = vpop.xlane.xlu0 %2340
        %v2342 = vsel %vm746, %v2312, -inf
        %2343 = vmax.xlane.f32.xlu0 %v2342
        %v2344 = vpop.xlane.xlu0 %2343
        %v2345 = vsel %vm746, %v2313, -inf
        %2346 = vmax.xlane.f32.xlu0 %v2345
        %v2347 = vpop.xlane.xlu0 %2346
        %v2348 = vsel %vm746, %v2314, -inf
        %2349 = vmax.xlane.f32.xlu0 %v2348
        %v2350 = vpop.xlane.xlu0 %2349
        %v2351 = vsel %vm746, %v2315, -inf
        %2352 = vmax.xlane.f32.xlu0 %v2351
        %v2353 = vpop.xlane.xlu0 %2352
        %v2354 = vsel %vm746, %v2316, -inf
        %2355 = vmax.xlane.f32.xlu0 %v2354
        %v2356 = vpop.xlane.xlu0 %2355
        %v2357 = vsel %vm746, %v2317, -inf
        %2358 = vmax.xlane.f32.xlu0 %v2357
        %v2359 = vpop.xlane.xlu0 %2358
        %v2360 = vsel %vm746, %v2318, -inf
        %2361 = vmax.xlane.f32.xlu0 %v2360
        %v2362 = vpop.xlane.xlu0 %2361
        %v2363 = vsel %vm746, %v2319, -inf
        %2364 = vmax.xlane.f32.xlu0 %v2363
        %v2365 = vpop.xlane.xlu0 %2364
        %v2366 = vsel %vm746, %v2320, -inf
        %2367 = vmax.xlane.f32.xlu0 %v2366
        %v2368 = vpop.xlane.xlu0 %2367
        %v2369 = vsub.f32 %v2305, %v2323
        %v2370 = vsub.f32 %v2306, %v2326
        %v2371 = vsub.f32 %v2307, %v2329
        %v2372 = vsub.f32 %v2308, %v2332
        %v2373 = vsub.f32 %v2309, %v2335
        %v2374 = vsub.f32 %v2310, %v2338
        %v2375 = vsub.f32 %v2311, %v2341
        %v2376 = vsub.f32 %v2312, %v2344
        %v2377 = vsub.f32 %v2313, %v2347
        %v2378 = vsub.f32 %v2314, %v2350
        %v2379 = vsub.f32 %v2315, %v2353
        %v2380 = vsub.f32 %v2316, %v2356
        %v2381 = vsub.f32 %v2317, %v2359
        %v2382 = vsub.f32 %v2318, %v2362
        %v2383 = vsub.f32 %v2319, %v2365
        %v2384 = vsub.f32 %v2320, %v2368
        %v2385 = vmul.f32 %v2369, 1.442695
        %v2386 = vpow.pop %v2385
        %v2387 = vmul.f32 %v2370, 1.442695
        %v2388 = vpow.pop %v2387
        %v2389 = vmul.f32 %v2371, 1.442695
        %v2390 = vpow.pop %v2389
        %v2391 = vmul.f32 %v2372, 1.442695
        %v2392 = vpow.pop %v2391
        %v2393 = vmul.f32 %v2373, 1.442695
        %v2394 = vpow.pop %v2393
        %v2395 = vmul.f32 %v2374, 1.442695
        %v2396 = vpow.pop %v2395
        %v2397 = vmul.f32 %v2375, 1.442695
        %v2398 = vpow.pop %v2397
        %v2399 = vmul.f32 %v2376, 1.442695
        %v2400 = vpow.pop %v2399
        %v2401 = vmul.f32 %v2377, 1.442695
        %v2402 = vpow.pop %v2401
        %v2403 = vmul.f32 %v2378, 1.442695
        %v2404 = vpow.pop %v2403
        %v2405 = vmul.f32 %v2379, 1.442695
        %v2406 = vpow.pop %v2405
        %v2407 = vmul.f32 %v2380, 1.442695
        %v2408 = vpow.pop %v2407
        %v2409 = vmul.f32 %v2381, 1.442695
        %v2410 = vpow.pop %v2409
        %v2411 = vmul.f32 %v2382, 1.442695
        %v2412 = vpow.pop %v2411
        %v2413 = vmul.f32 %v2383, 1.442695
        %v2414 = vpow.pop %v2413
        %v2415 = vmul.f32 %v2384, 1.442695
        %v2416 = vpow.pop %v2415
        %v2417 = vsel %vm746, %v2386, 0.0
        %2418 = vadd.xlane.f32.xlu0 %v2417
        %v2419 = vpop.xlane.xlu0 %2418
        %v2420 = vsel %vm746, %v2388, 0.0
        %2421 = vadd.xlane.f32.xlu0 %v2420
        %v2422 = vpop.xlane.xlu0 %2421
        %v2423 = vsel %vm746, %v2390, 0.0
        %2424 = vadd.xlane.f32.xlu0 %v2423
        %v2425 = vpop.xlane.xlu0 %2424
        %v2426 = vsel %vm746, %v2392, 0.0
        %2427 = vadd.xlane.f32.xlu0 %v2426
        %v2428 = vpop.xlane.xlu0 %2427
        %v2429 = vsel %vm746, %v2394, 0.0
        %2430 = vadd.xlane.f32.xlu0 %v2429
        %v2431 = vpop.xlane.xlu0 %2430
        %v2432 = vsel %vm746, %v2396, 0.0
        %2433 = vadd.xlane.f32.xlu0 %v2432
        %v2434 = vpop.xlane.xlu0 %2433
        %v2435 = vsel %vm746, %v2398, 0.0
        %2436 = vadd.xlane.f32.xlu0 %v2435
        %v2437 = vpop.xlane.xlu0 %2436
        %v2438 = vsel %vm746, %v2400, 0.0
        %2439 = vadd.xlane.f32.xlu0 %v2438
        %v2440 = vpop.xlane.xlu0 %2439
        %v2441 = vsel %vm746, %v2402, 0.0
        %2442 = vadd.xlane.f32.xlu0 %v2441
        %v2443 = vpop.xlane.xlu0 %2442
        %v2444 = vsel %vm746, %v2404, 0.0
        %2445 = vadd.xlane.f32.xlu0 %v2444
        %v2446 = vpop.xlane.xlu0 %2445
        %v2447 = vsel %vm746, %v2406, 0.0
        %2448 = vadd.xlane.f32.xlu0 %v2447
        %v2449 = vpop.xlane.xlu0 %2448
        %v2450 = vsel %vm746, %v2408, 0.0
        %2451 = vadd.xlane.f32.xlu0 %v2450
        %v2452 = vpop.xlane.xlu0 %2451
        %v2453 = vsel %vm746, %v2410, 0.0
        %2454 = vadd.xlane.f32.xlu0 %v2453
        %v2455 = vpop.xlane.xlu0 %2454
        %v2456 = vsel %vm746, %v2412, 0.0
        %2457 = vadd.xlane.f32.xlu0 %v2456
        %v2458 = vpop.xlane.xlu0 %2457
        %v2459 = vsel %vm746, %v2414, 0.0
        %2460 = vadd.xlane.f32.xlu0 %v2459
        %v2461 = vpop.xlane.xlu0 %2460
        %v2462 = vsel %vm746, %v2416, 0.0
        %2463 = vadd.xlane.f32.xlu0 %v2462
        %v2464 = vpop.xlane.xlu0 %2463
        %v2465 = vrcp.pop %v2419
        %v2466 = vrcp.pop %v2422
        %v2467 = vrcp.pop %v2425
        %v2468 = vrcp.pop %v2428
        %v2469 = vrcp.pop %v2431
        %v2470 = vrcp.pop %v2434
        %v2471 = vrcp.pop %v2437
        %v2472 = vrcp.pop %v2440
        %v2473 = vrcp.pop %v2443
        %v2474 = vrcp.pop %v2446
        %v2475 = vrcp.pop %v2449
        %v2476 = vrcp.pop %v2452
        %v2477 = vrcp.pop %v2455
        %v2478 = vrcp.pop %v2458
        %v2479 = vrcp.pop %v2461
        %v2480 = vrcp.pop %v2464
        %v2481 = vmul.f32 %v2386, %v2465
        %v2482 = vmul.f32 %v2388, %v2466
        %v2483 = vmul.f32 %v2390, %v2467
        %v2484 = vmul.f32 %v2392, %v2468
        %v2485 = vmul.f32 %v2394, %v2469
        %v2486 = vmul.f32 %v2396, %v2470
        %v2487 = vmul.f32 %v2398, %v2471
        %v2488 = vmul.f32 %v2400, %v2472
        %v2489 = vmul.f32 %v2402, %v2473
        %v2490 = vmul.f32 %v2404, %v2474
        %v2491 = vmul.f32 %v2406, %v2475
        %v2492 = vmul.f32 %v2408, %v2476
        %v2493 = vmul.f32 %v2410, %v2477
        %v2494 = vmul.f32 %v2412, %v2478
        %v2495 = vmul.f32 %v2414, %v2479
        %v2496 = vmul.f32 %v2416, %v2480
        %v2497 = vpack.c.bf16 %v2482, %v2481
        %v2498 = vpack.c.bf16 %v2484, %v2483
        %v2499 = vpack.c.bf16 %v2486, %v2485
        %v2500 = vpack.c.bf16 %v2488, %v2487
        %v2501 = vpack.c.bf16 %v2490, %v2489
        %v2502 = vpack.c.bf16 %v2492, %v2491
        %v2503 = vpack.c.bf16 %v2494, %v2493
        %v2504 = vpack.c.bf16 %v2496, %v2495
        %2506 = vrot.lane.b32.xlu0 %v598, 112
        %v2507 = vpop.permute.xlu0 %2506
        %v2510 = vsel %vm746, %v2497, 0
        %2512 = vmatprep.subr.bf16.mxu0 0
        %2513 = vmatpush1.bf16.msra.mxu0 %v2507
        %2514 = vmatprep.subr.bf16.mxu0 0
        %2515 = vmatpush1.bf16.msra.mxu0 0
        %2516 = vmatprep.subr.bf16.mxu0 0
        %2517 = vmatpush1.bf16.msra.mxu0 0
        %2518 = vmatprep.subr.bf16.mxu0 0
        %2519 = vmatpush1.bf16.msra.mxu0 0
        %2520 = vmatprep.subr.bf16.mxu0 0
        %2521 = vmatpush1.bf16.msra.mxu0 0
        %2522 = vmatprep.subr.bf16.mxu0 0
        %2523 = vmatpush1.bf16.msra.mxu0 0
        %2524 = vmatprep.subr.bf16.mxu0 0
        %2525 = vmatpush1.bf16.msra.mxu0 0
        %2526 = vmatprep.subr.bf16.mxu0 0
        %2527 = vmatpush1.bf16.msra.mxu0 0
        %2528 = vmatprep.subr.bf16.mxu0 0
        %2529 = vmatpush1.bf16.msra.mxu0 0
        %2530 = vmatprep.subr.bf16.mxu0 0
        %2531 = vmatpush1.bf16.msra.mxu0 0
        %2532 = vmatprep.subr.bf16.mxu0 0
        %2533 = vmatpush1.bf16.msra.mxu0 0
        %2534 = vmatprep.subr.bf16.mxu0 0
        %2535 = vmatpush1.bf16.msra.mxu0 0
        %2536 = vmatprep.subr.bf16.mxu0 0
        %2537 = vmatpush1.bf16.msra.mxu0 0
        %2538 = vmatprep.subr.bf16.mxu0 0
        %2539 = vmatpush1.bf16.msra.mxu0 0
        %2540 = vmatprep.subr.bf16.mxu0 0
        %2541 = vmatpush1.bf16.msra.mxu0 0
        %2542 = vmatprep.subr.bf16.mxu0 0
        %2543 = vmatpush1.bf16.msra.mxu0 0
        %2544 = vmatprep.mubr.bf16.mxu0 0
        %2545 = vmatmul.mubr.bf16.gmra.mrb[0].mxu0 %v2510
        %v2546 = vpop.f32.mrb[0].mxu0
        %v2547 = vadd.f32 0.0, %v2546
        %v2548 = vpop.f32.mrb[0].mxu0
        %v2549 = vpop.f32.mrb[0].mxu0
        %v2550 = vadd.f32 0.0, %v2549
        %v2551 = vpop.f32.mrb[0].mxu0
        %2552 = vdwg.mxu0
        %2554 = vrot.lane.b32.xlu0 %v599, 112
        %v2555 = vpop.permute.xlu0 %2554
        %v2558 = vsel %vm746, %v2498, 0
        %2560 = vmatprep.subr.bf16.mxu0 0
        %2561 = vmatpush1.bf16.msra.mxu0 %v2555
        %2562 = vmatprep.subr.bf16.mxu0 0
        %2563 = vmatpush1.bf16.msra.mxu0 0
        %2564 = vmatprep.subr.bf16.mxu0 0
        %2565 = vmatpush1.bf16.msra.mxu0 0
        %2566 = vmatprep.subr.bf16.mxu0 0
        %2567 = vmatpush1.bf16.msra.mxu0 0
        %2568 = vmatprep.subr.bf16.mxu0 0
        %2569 = vmatpush1.bf16.msra.mxu0 0
        %2570 = vmatprep.subr.bf16.mxu0 0
        %2571 = vmatpush1.bf16.msra.mxu0 0
        %2572 = vmatprep.subr.bf16.mxu0 0
        %2573 = vmatpush1.bf16.msra.mxu0 0
        %2574 = vmatprep.subr.bf16.mxu0 0
        %2575 = vmatpush1.bf16.msra.mxu0 0
        %2576 = vmatprep.subr.bf16.mxu0 0
        %2577 = vmatpush1.bf16.msra.mxu0 0
        %2578 = vmatprep.subr.bf16.mxu0 0
        %2579 = vmatpush1.bf16.msra.mxu0 0
        %2580 = vmatprep.subr.bf16.mxu0 0
        %2581 = vmatpush1.bf16.msra.mxu0 0
        %2582 = vmatprep.subr.bf16.mxu0 0
        %2583 = vmatpush1.bf16.msra.mxu0 0
        %2584 = vmatprep.subr.bf16.mxu0 0
        %2585 = vmatpush1.bf16.msra.mxu0 0
        %2586 = vmatprep.subr.bf16.mxu0 0
        %2587 = vmatpush1.bf16.msra.mxu0 0
        %2588 = vmatprep.subr.bf16.mxu0 0
        %2589 = vmatpush1.bf16.msra.mxu0 0
        %2590 = vmatprep.subr.bf16.mxu0 0
        %2591 = vmatpush1.bf16.msra.mxu0 0
        %2592 = vmatprep.mubr.bf16.mxu0 0
        %2593 = vmatmul.mubr.bf16.gmra.mrb[0].mxu0 %v2558
        %v2594 = vpop.f32.mrb[0].mxu0
        %v2595 = vadd.f32 0.0, %v2594
        %v2596 = vpop.f32.mrb[0].mxu0
        %v2597 = vpop.f32.mrb[0].mxu0
        %v2598 = vadd.f32 0.0, %v2597
        %v2599 = vpop.f32.mrb[0].mxu0
        %2600 = vdwg.mxu0
        %2602 = vrot.lane.b32.xlu0 %v600, 112
        %v2603 = vpop.permute.xlu0 %2602
        %v2606 = vsel %vm746, %v2499, 0
        %2608 = vmatprep.subr.bf16.mxu0 0
        %2609 = vmatpush1.bf16.msra.mxu0 %v2603
        %2610 = vmatprep.subr.bf16.mxu0 0
        %2611 = vmatpush1.bf16.msra.mxu0 0
        %2612 = vmatprep.subr.bf16.mxu0 0
        %2613 = vmatpush1.bf16.msra.mxu0 0
        %2614 = vmatprep.subr.bf16.mxu0 0
        %2615 = vmatpush1.bf16.msra.mxu0 0
        %2616 = vmatprep.subr.bf16.mxu0 0
        %2617 = vmatpush1.bf16.msra.mxu0 0
        %2618 = vmatprep.subr.bf16.mxu0 0
        %2619 = vmatpush1.bf16.msra.mxu0 0
        %2620 = vmatprep.subr.bf16.mxu0 0
        %2621 = vmatpush1.bf16.msra.mxu0 0
        %2622 = vmatprep.subr.bf16.mxu0 0
        %2623 = vmatpush1.bf16.msra.mxu0 0
        %2624 = vmatprep.subr.bf16.mxu0 0
        %2625 = vmatpush1.bf16.msra.mxu0 0
        %2626 = vmatprep.subr.bf16.mxu0 0
        %2627 = vmatpush1.bf16.msra.mxu0 0
        %2628 = vmatprep.subr.bf16.mxu0 0
        %2629 = vmatpush1.bf16.msra.mxu0 0
        %2630 = vmatprep.subr.bf16.mxu0 0
        %2631 = vmatpush1.bf16.msra.mxu0 0
        %2632 = vmatprep.subr.bf16.mxu0 0
        %2633 = vmatpush1.bf16.msra.mxu0 0
        %2634 = vmatprep.subr.bf16.mxu0 0
        %2635 = vmatpush1.bf16.msra.mxu0 0
        %2636 = vmatprep.subr.bf16.mxu0 0
        %2637 = vmatpush1.bf16.msra.mxu0 0
        %2638 = vmatprep.subr.bf16.mxu0 0
        %2639 = vmatpush1.bf16.msra.mxu0 0
        %2640 = vmatprep.mubr.bf16.mxu0 0
        %2641 = vmatmul.mubr.bf16.gmra.mrb[0].mxu0 %v2606
        %v2642 = vpop.f32.mrb[0].mxu0
        %v2643 = vadd.f32 0.0, %v2642
        %v2644 = vpop.f32.mrb[0].mxu0
        %v2645 = vpop.f32.mrb[0].mxu0
        %v2646 = vadd.f32 0.0, %v2645
        %v2647 = vpop.f32.mrb[0].mxu0
        %2648 = vdwg.mxu0
        %2650 = vrot.lane.b32.xlu0 %v601, 112
        %v2651 = vpop.permute.xlu0 %2650
        %v2654 = vsel %vm746, %v2500, 0
        %2656 = vmatprep.subr.bf16.mxu0 0
        %2657 = vmatpush1.bf16.msra.mxu0 %v2651
        %2658 = vmatprep.subr.bf16.mxu0 0
        %2659 = vmatpush1.bf16.msra.mxu0 0
        %2660 = vmatprep.subr.bf16.mxu0 0
        %2661 = vmatpush1.bf16.msra.mxu0 0
        %2662 = vmatprep.subr.bf16.mxu0 0
        %2663 = vmatpush1.bf16.msra.mxu0 0
        %2664 = vmatprep.subr.bf16.mxu0 0
        %2665 = vmatpush1.bf16.msra.mxu0 0
        %2666 = vmatprep.subr.bf16.mxu0 0
        %2667 = vmatpush1.bf16.msra.mxu0 0
        %2668 = vmatprep.subr.bf16.mxu0 0
        %2669 = vmatpush1.bf16.msra.mxu0 0
        %2670 = vmatprep.subr.bf16.mxu0 0
        %2671 = vmatpush1.bf16.msra.mxu0 0
        %2672 = vmatprep.subr.bf16.mxu0 0
        %2673 = vmatpush1.bf16.msra.mxu0 0
        %2674 = vmatprep.subr.bf16.mxu0 0
        %2675 = vmatpush1.bf16.msra.mxu0 0
        %2676 = vmatprep.subr.bf16.mxu0 0
        %2677 = vmatpush1.bf16.msra.mxu0 0
        %2678 = vmatprep.subr.bf16.mxu0 0
        %2679 = vmatpush1.bf16.msra.mxu0 0
        %2680 = vmatprep.subr.bf16.mxu0 0
        %2681 = vmatpush1.bf16.msra.mxu0 0
        %2682 = vmatprep.subr.bf16.mxu0 0
        %2683 = vmatpush1.bf16.msra.mxu0 0
        %2684 = vmatprep.subr.bf16.mxu0 0
        %2685 = vmatpush1.bf16.msra.mxu0 0
        %2686 = vmatprep.subr.bf16.mxu0 0
        %2687 = vmatpush1.bf16.msra.mxu0 0
        %2688 = vmatprep.mubr.bf16.mxu0 0
        %2689 = vmatmul.mubr.bf16.gmra.mrb[0].mxu0 %v2654
        %v2690 = vpop.f32.mrb[0].mxu0
        %v2691 = vadd.f32 0.0, %v2690
        %v2692 = vpop.f32.mrb[0].mxu0
        %v2693 = vpop.f32.mrb[0].mxu0
        %v2694 = vadd.f32 0.0, %v2693
        %v2695 = vpop.f32.mrb[0].mxu0
        %2696 = vdwg.mxu0
        %2698 = vrot.lane.b32.xlu0 %v602, 112
        %v2699 = vpop.permute.xlu0 %2698
        %v2702 = vsel %vm746, %v2501, 0
        %2704 = vmatprep.subr.bf16.mxu0 0
        %2705 = vmatpush1.bf16.msra.mxu0 %v2699
        %2706 = vmatprep.subr.bf16.mxu0 0
        %2707 = vmatpush1.bf16.msra.mxu0 0
        %2708 = vmatprep.subr.bf16.mxu0 0
        %2709 = vmatpush1.bf16.msra.mxu0 0
        %2710 = vmatprep.subr.bf16.mxu0 0
        %2711 = vmatpush1.bf16.msra.mxu0 0
        %2712 = vmatprep.subr.bf16.mxu0 0
        %2713 = vmatpush1.bf16.msra.mxu0 0
        %2714 = vmatprep.subr.bf16.mxu0 0
        %2715 = vmatpush1.bf16.msra.mxu0 0
        %2716 = vmatprep.subr.bf16.mxu0 0
        %2717 = vmatpush1.bf16.msra.mxu0 0
        %2718 = vmatprep.subr.bf16.mxu0 0
        %2719 = vmatpush1.bf16.msra.mxu0 0
        %2720 = vmatprep.subr.bf16.mxu0 0
        %2721 = vmatpush1.bf16.msra.mxu0 0
        %2722 = vmatprep.subr.bf16.mxu0 0
        %2723 = vmatpush1.bf16.msra.mxu0 0
        %2724 = vmatprep.subr.bf16.mxu0 0
        %2725 = vmatpush1.bf16.msra.mxu0 0
        %2726 = vmatprep.subr.bf16.mxu0 0
        %2727 = vmatpush1.bf16.msra.mxu0 0
        %2728 = vmatprep.subr.bf16.mxu0 0
        %2729 = vmatpush1.bf16.msra.mxu0 0
        %2730 = vmatprep.subr.bf16.mxu0 0
        %2731 = vmatpush1.bf16.msra.mxu0 0
        %2732 = vmatprep.subr.bf16.mxu0 0
        %2733 = vmatpush1.bf16.msra.mxu0 0
        %2734 = vmatprep.subr.bf16.mxu0 0
        %2735 = vmatpush1.bf16.msra.mxu0 0
        %2736 = vmatprep.mubr.bf16.mxu0 0
        %2737 = vmatmul.mubr.bf16.gmra.mrb[0].mxu0 %v2702
        %v2738 = vpop.f32.mrb[0].mxu0
        %v2739 = vadd.f32 0.0, %v2738
        %v2740 = vpop.f32.mrb[0].mxu0
        %v2741 = vpop.f32.mrb[0].mxu0
        %v2742 = vadd.f32 0.0, %v2741
        %v2743 = vpop.f32.mrb[0].mxu0
        %2744 = vdwg.mxu0
        %2746 = vrot.lane.b32.xlu0 %v603, 112
        %v2747 = vpop.permute.xlu0 %2746
        %v2750 = vsel %vm746, %v2502, 0
        %2752 = vmatprep.subr.bf16.mxu0 0
        %2753 = vmatpush1.bf16.msra.mxu0 %v2747
        %2754 = vmatprep.subr.bf16.mxu0 0
        %2755 = vmatpush1.bf16.msra.mxu0 0
        %2756 = vmatprep.subr.bf16.mxu0 0
        %2757 = vmatpush1.bf16.msra.mxu0 0
        %2758 = vmatprep.subr.bf16.mxu0 0
        %2759 = vmatpush1.bf16.msra.mxu0 0
        %2760 = vmatprep.subr.bf16.mxu0 0
        %2761 = vmatpush1.bf16.msra.mxu0 0
        %2762 = vmatprep.subr.bf16.mxu0 0
        %2763 = vmatpush1.bf16.msra.mxu0 0
        %2764 = vmatprep.subr.bf16.mxu0 0
        %2765 = vmatpush1.bf16.msra.mxu0 0
        %2766 = vmatprep.subr.bf16.mxu0 0
        %2767 = vmatpush1.bf16.msra.mxu0 0
        %2768 = vmatprep.subr.bf16.mxu0 0
        %2769 = vmatpush1.bf16.msra.mxu0 0
        %2770 = vmatprep.subr.bf16.mxu0 0
        %2771 = vmatpush1.bf16.msra.mxu0 0
        %2772 = vmatprep.subr.bf16.mxu0 0
        %2773 = vmatpush1.bf16.msra.mxu0 0
        %2774 = vmatprep.subr.bf16.mxu0 0
        %2775 = vmatpush1.bf16.msra.mxu0 0
        %2776 = vmatprep.subr.bf16.mxu0 0
        %2777 = vmatpush1.bf16.msra.mxu0 0
        %2778 = vmatprep.subr.bf16.mxu0 0
        %2779 = vmatpush1.bf16.msra.mxu0 0
        %2780 = vmatprep.subr.bf16.mxu0 0
        %2781 = vmatpush1.bf16.msra.mxu0 0
        %2782 = vmatprep.subr.bf16.mxu0 0
        %2783 = vmatpush1.bf16.msra.mxu0 0
        %2784 = vmatprep.mubr.bf16.mxu0 0
        %2785 = vmatmul.mubr.bf16.gmra.mrb[0].mxu0 %v2750
        %v2786 = vpop.f32.mrb[0].mxu0
        %v2787 = vadd.f32 0.0, %v2786
        %v2788 = vpop.f32.mrb[0].mxu0
        %v2789 = vpop.f32.mrb[0].mxu0
        %v2790 = vadd.f32 0.0, %v2789
        %v2791 = vpop.f32.mrb[0].mxu0
        %2792 = vdwg.mxu0
        %2794 = vrot.lane.b32.xlu0 %v604, 112
        %v2795 = vpop.permute.xlu0 %2794
        %v2798 = vsel %vm746, %v2503, 0
        %2800 = vmatprep.subr.bf16.mxu0 0
        %2801 = vmatpush1.bf16.msra.mxu0 %v2795
        %2802 = vmatprep.subr.bf16.mxu0 0
        %2803 = vmatpush1.bf16.msra.mxu0 0
        %2804 = vmatprep.subr.bf16.mxu0 0
        %2805 = vmatpush1.bf16.msra.mxu0 0
        %2806 = vmatprep.subr.bf16.mxu0 0
        %2807 = vmatpush1.bf16.msra.mxu0 0
        %2808 = vmatprep.subr.bf16.mxu0 0
        %2809 = vmatpush1.bf16.msra.mxu0 0
        %2810 = vmatprep.subr.bf16.mxu0 0
        %2811 = vmatpush1.bf16.msra.mxu0 0
        %2812 = vmatprep.subr.bf16.mxu0 0
        %2813 = vmatpush1.bf16.msra.mxu0 0
        %2814 = vmatprep.subr.bf16.mxu0 0
        %2815 = vmatpush1.bf16.msra.mxu0 0
        %2816 = vmatprep.subr.bf16.mxu0 0
        %2817 = vmatpush1.bf16.msra.mxu0 0
        %2818 = vmatprep.subr.bf16.mxu0 0
        %2819 = vmatpush1.bf16.msra.mxu0 0
        %2820 = vmatprep.subr.bf16.mxu0 0
        %2821 = vmatpush1.bf16.msra.mxu0 0
        %2822 = vmatprep.subr.bf16.mxu0 0
        %2823 = vmatpush1.bf16.msra.mxu0 0
        %2824 = vmatprep.subr.bf16.mxu0 0
        %2825 = vmatpush1.bf16.msra.mxu0 0
        %2826 = vmatprep.subr.bf16.mxu0 0
        %2827 = vmatpush1.bf16.msra.mxu0 0
        %2828 = vmatprep.subr.bf16.mxu0 0
        %2829 = vmatpush1.bf16.msra.mxu0 0
        %2830 = vmatprep.subr.bf16.mxu0 0
        %2831 = vmatpush1.bf16.msra.mxu0 0
        %2832 = vmatprep.mubr.bf16.mxu0 0
        %2833 = vmatmul.mubr.bf16.gmra.mrb[0].mxu0 %v2798
        %v2834 = vpop.f32.mrb[0].mxu0
        %v2835 = vadd.f32 0.0, %v2834
        %v2836 = vpop.f32.mrb[0].mxu0
        %v2837 = vpop.f32.mrb[0].mxu0
        %v2838 = vadd.f32 0.0, %v2837
        %v2839 = vpop.f32.mrb[0].mxu0
        %2840 = vdwg.mxu0
        %2842 = vrot.lane.b32.xlu0 %v605, 112
        %v2843 = vpop.permute.xlu0 %2842
        %v2846 = vsel %vm746, %v2504, 0
        %2848 = vmatprep.subr.bf16.mxu0 0
        %2849 = vmatpush1.bf16.msra.mxu0 %v2843
        %2850 = vmatprep.subr.bf16.mxu0 0
        %2851 = vmatpush1.bf16.msra.mxu0 0
        %2852 = vmatprep.subr.bf16.mxu0 0
        %2853 = vmatpush1.bf16.msra.mxu0 0
        %2854 = vmatprep.subr.bf16.mxu0 0
        %2855 = vmatpush1.bf16.msra.mxu0 0
        %2856 = vmatprep.subr.bf16.mxu0 0
        %2857 = vmatpush1.bf16.msra.mxu0 0
        %2858 = vmatprep.subr.bf16.mxu0 0
        %2859 = vmatpush1.bf16.msra.mxu0 0
        %2860 = vmatprep.subr.bf16.mxu0 0
        %2861 = vmatpush1.bf16.msra.mxu0 0
        %2862 = vmatprep.subr.bf16.mxu0 0
        %2863 = vmatpush1.bf16.msra.mxu0 0
        %2864 = vmatprep.subr.bf16.mxu0 0
        %2865 = vmatpush1.bf16.msra.mxu0 0
        %2866 = vmatprep.subr.bf16.mxu0 0
        %2867 = vmatpush1.bf16.msra.mxu0 0
        %2868 = vmatprep.subr.bf16.mxu0 0
        %2869 = vmatpush1.bf16.msra.mxu0 0
        %2870 = vmatprep.subr.bf16.mxu0 0
        %2871 = vmatpush1.bf16.msra.mxu0 0
        %2872 = vmatprep.subr.bf16.mxu0 0
        %2873 = vmatpush1.bf16.msra.mxu0 0
        %2874 = vmatprep.subr.bf16.mxu0 0
        %2875 = vmatpush1.bf16.msra.mxu0 0
        %2876 = vmatprep.subr.bf16.mxu0 0
        %2877 = vmatpush1.bf16.msra.mxu0 0
        %2878 = vmatprep.subr.bf16.mxu0 0
        %2879 = vmatpush1.bf16.msra.mxu0 0
        %2880 = vmatprep.mubr.bf16.mxu0 0
        %2881 = vmatmul.mubr.bf16.gmra.mrb[0].mxu0 %v2846
        %v2882 = vpop.f32.mrb[0].mxu0
        %v2883 = vadd.f32 0.0, %v2882
        %v2884 = vpop.f32.mrb[0].mxu0
        %v2885 = vpop.f32.mrb[0].mxu0
        %v2886 = vadd.f32 0.0, %v2885
        %v2887 = vpop.f32.mrb[0].mxu0
        %2888 = vdwg.mxu0
        %2889 = vrot.lane.b32.xlu0 %v696, 48
        %v2890 = vpop.permute.xlu0 %2889
        %2891 = vrot.lane.b32.xlu0 %v698, 48
        %v2892 = vpop.permute.xlu0 %2891
        %2893 = vrot.lane.b32.xlu0 %v700, 48
        %v2894 = vpop.permute.xlu0 %2893
        %2895 = vrot.lane.b32.xlu0 %v702, 48
        %v2896 = vpop.permute.xlu0 %2895
        %2897 = vrot.lane.b32.xlu0 %v704, 48
        %v2898 = vpop.permute.xlu0 %2897
        %2899 = vrot.lane.b32.xlu0 %v706, 48
        %v2900 = vpop.permute.xlu0 %2899
        %2901 = vrot.lane.b32.xlu0 %v708, 48
        %v2902 = vpop.permute.xlu0 %2901
        %2903 = vrot.lane.b32.xlu0 %v710, 48
        %v2904 = vpop.permute.xlu0 %2903
        %2905 = vrot.lane.b32.xlu0 %v712, 48
        %v2906 = vpop.permute.xlu0 %2905
        %2907 = vrot.lane.b32.xlu0 %v714, 48
        %v2908 = vpop.permute.xlu0 %2907
        %2909 = vrot.lane.b32.xlu0 %v716, 48
        %v2910 = vpop.permute.xlu0 %2909
        %2911 = vrot.lane.b32.xlu0 %v718, 48
        %v2912 = vpop.permute.xlu0 %2911
        %2913 = vrot.lane.b32.xlu0 %v720, 48
        %v2914 = vpop.permute.xlu0 %2913
        %2915 = vrot.lane.b32.xlu0 %v722, 48
        %v2916 = vpop.permute.xlu0 %2915
        %2917 = vrot.lane.b32.xlu0 %v724, 48
        %v2918 = vpop.permute.xlu0 %2917
        %2919 = vrot.lane.b32.xlu0 %v726, 48
        %v2920 = vpop.permute.xlu0 %2919
        %v2937 = vmul.f32 %v2547, %v2890
        %v2938 = vmul.f32 %v2550, %v2892
        %v2939 = vmul.f32 %v2595, %v2894
        %v2940 = vmul.f32 %v2598, %v2896
        %v2941 = vmul.f32 %v2643, %v2898
        %v2942 = vmul.f32 %v2646, %v2900
        %v2943 = vmul.f32 %v2691, %v2902
        %v2944 = vmul.f32 %v2694, %v2904
        %v2945 = vmul.f32 %v2739, %v2906
        %v2946 = vmul.f32 %v2742, %v2908
        %v2947 = vmul.f32 %v2787, %v2910
        %v2948 = vmul.f32 %v2790, %v2912
        %v2949 = vmul.f32 %v2835, %v2914
        %v2950 = vmul.f32 %v2838, %v2916
        %v2951 = vmul.f32 %v2883, %v2918
        %v2952 = vmul.f32 %v2886, %v2920
        %v2953 = vpack.c.bf16 %v2938, %v2937
        %v2954 = vpack.c.bf16 %v2940, %v2939
        %v2955 = vpack.c.bf16 %v2942, %v2941
        %v2956 = vpack.c.bf16 %v2944, %v2943
        %v2957 = vpack.c.bf16 %v2946, %v2945
        %v2958 = vpack.c.bf16 %v2948, %v2947
        %v2959 = vpack.c.bf16 %v2950, %v2949
        %v2960 = vpack.c.bf16 %v2952, %v2951
        %2969 = vrot.lane.b32.xlu0 %v2953, 16
        %v2970 = vpop.permute.xlu0 %2969
        %2971 = vrot.lane.b32.xlu0 %v2954, 16
        %v2972 = vpop.permute.xlu0 %2971
        %2973 = vrot.lane.b32.xlu0 %v2955, 16
        %v2974 = vpop.permute.xlu0 %2973
        %2975 = vrot.lane.b32.xlu0 %v2956, 16
        %v2976 = vpop.permute.xlu0 %2975
        %2977 = vrot.lane.b32.xlu0 %v2957, 16
        %v2978 = vpop.permute.xlu0 %2977
        %2979 = vrot.lane.b32.xlu0 %v2958, 16
        %v2980 = vpop.permute.xlu0 %2979
        %2981 = vrot.lane.b32.xlu0 %v2959, 16
        %v2982 = vpop.permute.xlu0 %2981
        %2983 = vrot.lane.b32.xlu0 %v2960, 16
        %v2984 = vpop.permute.xlu0 %2983
        %vm2993 = vcmask 261248
        %2994 = vst.msk [vmem:[#allocation2] sm:$0xff] %vm2993, %v2970
        %2995 = vst.msk [vmem:[#allocation2 + $0x8] sm:$0xff] %vm2993, %v2972
        %2996 = vst.msk [vmem:[#allocation2 + $0x10] sm:$0xff] %vm2993, %v2974
        %2997 = vst.msk [vmem:[#allocation2 + $0x18] sm:$0xff] %vm2993, %v2976
        %2998 = vst.msk [vmem:[#allocation2 + $0x20] sm:$0xff] %vm2993, %v2978
        %2999 = vst.msk [vmem:[#allocation2 + $0x28] sm:$0xff] %vm2993, %v2980
        %3000 = vst.msk [vmem:[#allocation2 + $0x30] sm:$0xff] %vm2993, %v2982
        %3001 = vst.msk [vmem:[#allocation2 + $0x38] sm:$0xff] %vm2993, %v2984
        %3002 = vrot.lane.b32.xlu0 %v590, 96
        %v3003 = vpop.permute.xlu0 %3002
        %3004 = vrot.lane.b32.xlu0 %v590, 32
        %v3005 = vpop.permute.xlu0 %3004
        %v3007 = vsel %vm746, %v3003, 0
        %v3010 = vsel %vm746, %v3005, 0
        %3012 = vmatprep.subr.bf16.mxu0 0
        %3013 = vmatpush1.bf16.xpose.msra.mxu0 %v3010
        %3014 = vmatprep.subr.bf16.mxu0 0
        %3015 = vmatpush1.bf16.xpose.msra.mxu0 0
        %3016 = vmatprep.subr.bf16.mxu0 0
        %3017 = vmatpush1.bf16.xpose.msra.mxu0 0
        %3018 = vmatprep.subr.bf16.mxu0 0
        %3019 = vmatpush1.bf16.xpose.msra.mxu0 0
        %3020 = vmatprep.subr.bf16.mxu0 0
        %3021 = vmatpush1.bf16.xpose.msra.mxu0 0
        %3022 = vmatprep.subr.bf16.mxu0 0
        %3023 = vmatpush1.bf16.xpose.msra.mxu0 0
        %3024 = vmatprep.subr.bf16.mxu0 0
        %3025 = vmatpush1.bf16.xpose.msra.mxu0 0
        %3026 = vmatprep.subr.bf16.mxu0 0
        %3027 = vmatpush1.bf16.xpose.msra.mxu0 0
        %3028 = vmatprep.subr.bf16.mxu0 0
        %3029 = vmatpush1.bf16.xpose.msra.mxu0 0
        %3030 = vmatprep.subr.bf16.mxu0 0
        %3031 = vmatpush1.bf16.xpose.msra.mxu0 0
        %3032 = vmatprep.subr.bf16.mxu0 0
        %3033 = vmatpush1.bf16.xpose.msra.mxu0 0
        %3034 = vmatprep.subr.bf16.mxu0 0
        %3035 = vmatpush1.bf16.xpose.msra.mxu0 0
        %3036 = vmatprep.subr.bf16.mxu0 0
        %3037 = vmatpush1.bf16.xpose.msra.mxu0 0
        %3038 = vmatprep.subr.bf16.mxu0 0
        %3039 = vmatpush1.bf16.xpose.msra.mxu0 0
        %3040 = vmatprep.subr.bf16.mxu0 0
        %3041 = vmatpush1.bf16.xpose.msra.mxu0 0
        %3042 = vmatprep.subr.bf16.mxu0 0
        %3043 = vmatpush1.bf16.xpose.msra.mxu0 0
        %3044 = vmatprep.mubr.bf16.mxu0 0
        %3045 = vmatmul.mubr.bf16.gmra.mrb[0].mxu0 %v3007
        %v3046 = vpop.f32.mrb[0].mxu0
        %v3047 = vadd.f32 0.0, %v3046
        %v3048 = vpop.f32.mrb[0].mxu0
        %v3049 = vpop.f32.mrb[0].mxu0
        %v3050 = vadd.f32 0.0, %v3049
        %v3051 = vpop.f32.mrb[0].mxu0
        %3052 = vdwg.mxu0
        %3053 = vrot.lane.b32.xlu0 %v591, 96
        %v3054 = vpop.permute.xlu0 %3053
        %3055 = vrot.lane.b32.xlu0 %v591, 32
        %v3056 = vpop.permute.xlu0 %3055
        %v3058 = vsel %vm746, %v3054, 0
        %v3061 = vsel %vm746, %v3056, 0
        %3063 = vmatprep.subr.bf16.mxu0 0
        %3064 = vmatpush1.bf16.xpose.msra.mxu0 %v3061
        %3065 = vmatprep.subr.bf16.mxu0 0
        %3066 = vmatpush1.bf16.xpose.msra.mxu0 0
        %3067 = vmatprep.subr.bf16.mxu0 0
        %3068 = vmatpush1.bf16.xpose.msra.mxu0 0
        %3069 = vmatprep.subr.bf16.mxu0 0
        %3070 = vmatpush1.bf16.xpose.msra.mxu0 0
        %3071 = vmatprep.subr.bf16.mxu0 0
        %3072 = vmatpush1.bf16.xpose.msra.mxu0 0
        %3073 = vmatprep.subr.bf16.mxu0 0
        %3074 = vmatpush1.bf16.xpose.msra.mxu0 0
        %3075 = vmatprep.subr.bf16.mxu0 0
        %3076 = vmatpush1.bf16.xpose.msra.mxu0 0
        %3077 = vmatprep.subr.bf16.mxu0 0
        %3078 = vmatpush1.bf16.xpose.msra.mxu0 0
        %3079 = vmatprep.subr.bf16.mxu0 0
        %3080 = vmatpush1.bf16.xpose.msra.mxu0 0
        %3081 = vmatprep.subr.bf16.mxu0 0
        %3082 = vmatpush1.bf16.xpose.msra.mxu0 0
        %3083 = vmatprep.subr.bf16.mxu0 0
        %3084 = vmatpush1.bf16.xpose.msra.mxu0 0
        %3085 = vmatprep.subr.bf16.mxu0 0
        %3086 = vmatpush1.bf16.xpose.msra.mxu0 0
        %3087 = vmatprep.subr.bf16.mxu0 0
        %3088 = vmatpush1.bf16.xpose.msra.mxu0 0
        %3089 = vmatprep.subr.bf16.mxu0 0
        %3090 = vmatpush1.bf16.xpose.msra.mxu0 0
        %3091 = vmatprep.subr.bf16.mxu0 0
        %3092 = vmatpush1.bf16.xpose.msra.mxu0 0
        %3093 = vmatprep.subr.bf16.mxu0 0
        %3094 = vmatpush1.bf16.xpose.msra.mxu0 0
        %3095 = vmatprep.mubr.bf16.mxu0 0
        %3096 = vmatmul.mubr.bf16.gmra.mrb[0].mxu0 %v3058
        %v3097 = vpop.f32.mrb[0].mxu0
        %v3098 = vadd.f32 0.0, %v3097
        %v3099 = vpop.f32.mrb[0].mxu0
        %v3100 = vpop.f32.mrb[0].mxu0
        %v3101 = vadd.f32 0.0, %v3100
        %v3102 = vpop.f32.mrb[0].mxu0
        %3103 = vdwg.mxu0
        %3104 = vrot.lane.b32.xlu0 %v592, 96
        %v3105 = vpop.permute.xlu0 %3104
        %3106 = vrot.lane.b32.xlu0 %v592, 32
        %v3107 = vpop.permute.xlu0 %3106
        %v3109 = vsel %vm746, %v3105, 0
        %v3112 = vsel %vm746, %v3107, 0
        %3114 = vmatprep.subr.bf16.mxu0 0
        %3115 = vmatpush1.bf16.xpose.msra.mxu0 %v3112
        %3116 = vmatprep.subr.bf16.mxu0 0
        %3117 = vmatpush1.bf16.xpose.msra.mxu0 0
        %3118 = vmatprep.subr.bf16.mxu0 0
        %3119 = vmatpush1.bf16.xpose.msra.mxu0 0
        %3120 = vmatprep.subr.bf16.mxu0 0
        %3121 = vmatpush1.bf16.xpose.msra.mxu0 0
        %3122 = vmatprep.subr.bf16.mxu0 0
        %3123 = vmatpush1.bf16.xpose.msra.mxu0 0
        %3124 = vmatprep.subr.bf16.mxu0 0
        %3125 = vmatpush1.bf16.xpose.msra.mxu0 0
        %3126 = vmatprep.subr.bf16.mxu0 0
        %3127 = vmatpush1.bf16.xpose.msra.mxu0 0
        %3128 = vmatprep.subr.bf16.mxu0 0
        %3129 = vmatpush1.bf16.xpose.msra.mxu0 0
        %3130 = vmatprep.subr.bf16.mxu0 0
        %3131 = vmatpush1.bf16.xpose.msra.mxu0 0
        %3132 = vmatprep.subr.bf16.mxu0 0
        %3133 = vmatpush1.bf16.xpose.msra.mxu0 0
        %3134 = vmatprep.subr.bf16.mxu0 0
        %3135 = vmatpush1.bf16.xpose.msra.mxu0 0
        %3136 = vmatprep.subr.bf16.mxu0 0
        %3137 = vmatpush1.bf16.xpose.msra.mxu0 0
        %3138 = vmatprep.subr.bf16.mxu0 0
        %3139 = vmatpush1.bf16.xpose.msra.mxu0 0
        %3140 = vmatprep.subr.bf16.mxu0 0
        %3141 = vmatpush1.bf16.xpose.msra.mxu0 0
        %3142 = vmatprep.subr.bf16.mxu0 0
        %3143 = vmatpush1.bf16.xpose.msra.mxu0 0
        %3144 = vmatprep.subr.bf16.mxu0 0
        %3145 = vmatpush1.bf16.xpose.msra.mxu0 0
        %3146 = vmatprep.mubr.bf16.mxu0 0
        %3147 = vmatmul.mubr.bf16.gmra.mrb[0].mxu0 %v3109
        %v3148 = vpop.f32.mrb[0].mxu0
        %v3149 = vadd.f32 0.0, %v3148
        %v3150 = vpop.f32.mrb[0].mxu0
        %v3151 = vpop.f32.mrb[0].mxu0
        %v3152 = vadd.f32 0.0, %v3151
        %v3153 = vpop.f32.mrb[0].mxu0
        %3154 = vdwg.mxu0
        %3155 = vrot.lane.b32.xlu0 %v593, 96
        %v3156 = vpop.permute.xlu0 %3155
        %3157 = vrot.lane.b32.xlu0 %v593, 32
        %v3158 = vpop.permute.xlu0 %3157
        %v3160 = vsel %vm746, %v3156, 0
        %v3163 = vsel %vm746, %v3158, 0
        %3165 = vmatprep.subr.bf16.mxu0 0
        %3166 = vmatpush1.bf16.xpose.msra.mxu0 %v3163
        %3167 = vmatprep.subr.bf16.mxu0 0
        %3168 = vmatpush1.bf16.xpose.msra.mxu0 0
        %3169 = vmatprep.subr.bf16.mxu0 0
        %3170 = vmatpush1.bf16.xpose.msra.mxu0 0
        %3171 = vmatprep.subr.bf16.mxu0 0
        %3172 = vmatpush1.bf16.xpose.msra.mxu0 0
        %3173 = vmatprep.subr.bf16.mxu0 0
        %3174 = vmatpush1.bf16.xpose.msra.mxu0 0
        %3175 = vmatprep.subr.bf16.mxu0 0
        %3176 = vmatpush1.bf16.xpose.msra.mxu0 0
        %3177 = vmatprep.subr.bf16.mxu0 0
        %3178 = vmatpush1.bf16.xpose.msra.mxu0 0
        %3179 = vmatprep.subr.bf16.mxu0 0
        %3180 = vmatpush1.bf16.xpose.msra.mxu0 0
        %3181 = vmatprep.subr.bf16.mxu0 0
        %3182 = vmatpush1.bf16.xpose.msra.mxu0 0
        %3183 = vmatprep.subr.bf16.mxu0 0
        %3184 = vmatpush1.bf16.xpose.msra.mxu0 0
        %3185 = vmatprep.subr.bf16.mxu0 0
        %3186 = vmatpush1.bf16.xpose.msra.mxu0 0
        %3187 = vmatprep.subr.bf16.mxu0 0
        %3188 = vmatpush1.bf16.xpose.msra.mxu0 0
        %3189 = vmatprep.subr.bf16.mxu0 0
        %3190 = vmatpush1.bf16.xpose.msra.mxu0 0
        %3191 = vmatprep.subr.bf16.mxu0 0
        %3192 = vmatpush1.bf16.xpose.msra.mxu0 0
        %3193 = vmatprep.subr.bf16.mxu0 0
        %3194 = vmatpush1.bf16.xpose.msra.mxu0 0
        %3195 = vmatprep.subr.bf16.mxu0 0
        %3196 = vmatpush1.bf16.xpose.msra.mxu0 0
        %3197 = vmatprep.mubr.bf16.mxu0 0
        %3198 = vmatmul.mubr.bf16.gmra.mrb[0].mxu0 %v3160
        %v3199 = vpop.f32.mrb[0].mxu0
        %v3200 = vadd.f32 0.0, %v3199
        %v3201 = vpop.f32.mrb[0].mxu0
        %v3202 = vpop.f32.mrb[0].mxu0
        %v3203 = vadd.f32 0.0, %v3202
        %v3204 = vpop.f32.mrb[0].mxu0
        %3205 = vdwg.mxu0
        %3206 = vrot.lane.b32.xlu0 %v594, 96
        %v3207 = vpop.permute.xlu0 %3206
        %3208 = vrot.lane.b32.xlu0 %v594, 32
        %v3209 = vpop.permute.xlu0 %3208
        %v3211 = vsel %vm746, %v3207, 0
        %v3214 = vsel %vm746, %v3209, 0
        %3216 = vmatprep.subr.bf16.mxu0 0
        %3217 = vmatpush1.bf16.xpose.msra.mxu0 %v3214
        %3218 = vmatprep.subr.bf16.mxu0 0
        %3219 = vmatpush1.bf16.xpose.msra.mxu0 0
        %3220 = vmatprep.subr.bf16.mxu0 0
        %3221 = vmatpush1.bf16.xpose.msra.mxu0 0
        %3222 = vmatprep.subr.bf16.mxu0 0
        %3223 = vmatpush1.bf16.xpose.msra.mxu0 0
        %3224 = vmatprep.subr.bf16.mxu0 0
        %3225 = vmatpush1.bf16.xpose.msra.mxu0 0
        %3226 = vmatprep.subr.bf16.mxu0 0
        %3227 = vmatpush1.bf16.xpose.msra.mxu0 0
        %3228 = vmatprep.subr.bf16.mxu0 0
        %3229 = vmatpush1.bf16.xpose.msra.mxu0 0
        %3230 = vmatprep.subr.bf16.mxu0 0
        %3231 = vmatpush1.bf16.xpose.msra.mxu0 0
        %3232 = vmatprep.subr.bf16.mxu0 0
        %3233 = vmatpush1.bf16.xpose.msra.mxu0 0
        %3234 = vmatprep.subr.bf16.mxu0 0
        %3235 = vmatpush1.bf16.xpose.msra.mxu0 0
        %3236 = vmatprep.subr.bf16.mxu0 0
        %3237 = vmatpush1.bf16.xpose.msra.mxu0 0
        %3238 = vmatprep.subr.bf16.mxu0 0
        %3239 = vmatpush1.bf16.xpose.msra.mxu0 0
        %3240 = vmatprep.subr.bf16.mxu0 0
        %3241 = vmatpush1.bf16.xpose.msra.mxu0 0
        %3242 = vmatprep.subr.bf16.mxu0 0
        %3243 = vmatpush1.bf16.xpose.msra.mxu0 0
        %3244 = vmatprep.subr.bf16.mxu0 0
        %3245 = vmatpush1.bf16.xpose.msra.mxu0 0
        %3246 = vmatprep.subr.bf16.mxu0 0
        %3247 = vmatpush1.bf16.xpose.msra.mxu0 0
        %3248 = vmatprep.mubr.bf16.mxu0 0
        %3249 = vmatmul.mubr.bf16.gmra.mrb[0].mxu0 %v3211
        %v3250 = vpop.f32.mrb[0].mxu0
        %v3251 = vadd.f32 0.0, %v3250
        %v3252 = vpop.f32.mrb[0].mxu0
        %v3253 = vpop.f32.mrb[0].mxu0
        %v3254 = vadd.f32 0.0, %v3253
        %v3255 = vpop.f32.mrb[0].mxu0
        %3256 = vdwg.mxu0
        %3257 = vrot.lane.b32.xlu0 %v595, 96
        %v3258 = vpop.permute.xlu0 %3257
        %3259 = vrot.lane.b32.xlu0 %v595, 32
        %v3260 = vpop.permute.xlu0 %3259
        %v3262 = vsel %vm746, %v3258, 0
        %v3265 = vsel %vm746, %v3260, 0
        %3267 = vmatprep.subr.bf16.mxu0 0
        %3268 = vmatpush1.bf16.xpose.msra.mxu0 %v3265
        %3269 = vmatprep.subr.bf16.mxu0 0
        %3270 = vmatpush1.bf16.xpose.msra.mxu0 0
        %3271 = vmatprep.subr.bf16.mxu0 0
        %3272 = vmatpush1.bf16.xpose.msra.mxu0 0
        %3273 = vmatprep.subr.bf16.mxu0 0
        %3274 = vmatpush1.bf16.xpose.msra.mxu0 0
        %3275 = vmatprep.subr.bf16.mxu0 0
        %3276 = vmatpush1.bf16.xpose.msra.mxu0 0
        %3277 = vmatprep.subr.bf16.mxu0 0
        %3278 = vmatpush1.bf16.xpose.msra.mxu0 0
        %3279 = vmatprep.subr.bf16.mxu0 0
        %3280 = vmatpush1.bf16.xpose.msra.mxu0 0
        %3281 = vmatprep.subr.bf16.mxu0 0
        %3282 = vmatpush1.bf16.xpose.msra.mxu0 0
        %3283 = vmatprep.subr.bf16.mxu0 0
        %3284 = vmatpush1.bf16.xpose.msra.mxu0 0
        %3285 = vmatprep.subr.bf16.mxu0 0
        %3286 = vmatpush1.bf16.xpose.msra.mxu0 0
        %3287 = vmatprep.subr.bf16.mxu0 0
        %3288 = vmatpush1.bf16.xpose.msra.mxu0 0
        %3289 = vmatprep.subr.bf16.mxu0 0
        %3290 = vmatpush1.bf16.xpose.msra.mxu0 0
        %3291 = vmatprep.subr.bf16.mxu0 0
        %3292 = vmatpush1.bf16.xpose.msra.mxu0 0
        %3293 = vmatprep.subr.bf16.mxu0 0
        %3294 = vmatpush1.bf16.xpose.msra.mxu0 0
        %3295 = vmatprep.subr.bf16.mxu0 0
        %3296 = vmatpush1.bf16.xpose.msra.mxu0 0
        %3297 = vmatprep.subr.bf16.mxu0 0
        %3298 = vmatpush1.bf16.xpose.msra.mxu0 0
        %3299 = vmatprep.mubr.bf16.mxu0 0
        %3300 = vmatmul.mubr.bf16.gmra.mrb[0].mxu0 %v3262
        %v3301 = vpop.f32.mrb[0].mxu0
        %v3302 = vadd.f32 0.0, %v3301
        %v3303 = vpop.f32.mrb[0].mxu0
        %v3304 = vpop.f32.mrb[0].mxu0
        %v3305 = vadd.f32 0.0, %v3304
        %v3306 = vpop.f32.mrb[0].mxu0
        %3307 = vdwg.mxu0
        %3308 = vrot.lane.b32.xlu0 %v596, 96
        %v3309 = vpop.permute.xlu0 %3308
        %3310 = vrot.lane.b32.xlu0 %v596, 32
        %v3311 = vpop.permute.xlu0 %3310
        %v3313 = vsel %vm746, %v3309, 0
        %v3316 = vsel %vm746, %v3311, 0
        %3318 = vmatprep.subr.bf16.mxu0 0
        %3319 = vmatpush1.bf16.xpose.msra.mxu0 %v3316
        %3320 = vmatprep.subr.bf16.mxu0 0
        %3321 = vmatpush1.bf16.xpose.msra.mxu0 0
        %3322 = vmatprep.subr.bf16.mxu0 0
        %3323 = vmatpush1.bf16.xpose.msra.mxu0 0
        %3324 = vmatprep.subr.bf16.mxu0 0
        %3325 = vmatpush1.bf16.xpose.msra.mxu0 0
        %3326 = vmatprep.subr.bf16.mxu0 0
        %3327 = vmatpush1.bf16.xpose.msra.mxu0 0
        %3328 = vmatprep.subr.bf16.mxu0 0
        %3329 = vmatpush1.bf16.xpose.msra.mxu0 0
        %3330 = vmatprep.subr.bf16.mxu0 0
        %3331 = vmatpush1.bf16.xpose.msra.mxu0 0
        %3332 = vmatprep.subr.bf16.mxu0 0
        %3333 = vmatpush1.bf16.xpose.msra.mxu0 0
        %3334 = vmatprep.subr.bf16.mxu0 0
        %3335 = vmatpush1.bf16.xpose.msra.mxu0 0
        %3336 = vmatprep.subr.bf16.mxu0 0
        %3337 = vmatpush1.bf16.xpose.msra.mxu0 0
        %3338 = vmatprep.subr.bf16.mxu0 0
        %3339 = vmatpush1.bf16.xpose.msra.mxu0 0
        %3340 = vmatprep.subr.bf16.mxu0 0
        %3341 = vmatpush1.bf16.xpose.msra.mxu0 0
        %3342 = vmatprep.subr.bf16.mxu0 0
        %3343 = vmatpush1.bf16.xpose.msra.mxu0 0
        %3344 = vmatprep.subr.bf16.mxu0 0
        %3345 = vmatpush1.bf16.xpose.msra.mxu0 0
        %3346 = vmatprep.subr.bf16.mxu0 0
        %3347 = vmatpush1.bf16.xpose.msra.mxu0 0
        %3348 = vmatprep.subr.bf16.mxu0 0
        %3349 = vmatpush1.bf16.xpose.msra.mxu0 0
        %3350 = vmatprep.mubr.bf16.mxu0 0
        %3351 = vmatmul.mubr.bf16.gmra.mrb[0].mxu0 %v3313
        %v3352 = vpop.f32.mrb[0].mxu0
        %v3353 = vadd.f32 0.0, %v3352
        %v3354 = vpop.f32.mrb[0].mxu0
        %v3355 = vpop.f32.mrb[0].mxu0
        %v3356 = vadd.f32 0.0, %v3355
        %v3357 = vpop.f32.mrb[0].mxu0
        %3358 = vdwg.mxu0
        %3359 = vrot.lane.b32.xlu0 %v597, 96
        %v3360 = vpop.permute.xlu0 %3359
        %3361 = vrot.lane.b32.xlu0 %v597, 32
        %v3362 = vpop.permute.xlu0 %3361
        %v3364 = vsel %vm746, %v3360, 0
        %v3367 = vsel %vm746, %v3362, 0
        %3369 = vmatprep.subr.bf16.mxu0 0
        %3370 = vmatpush1.bf16.xpose.msra.mxu0 %v3367
        %3371 = vmatprep.subr.bf16.mxu0 0
        %3372 = vmatpush1.bf16.xpose.msra.mxu0 0
        %3373 = vmatprep.subr.bf16.mxu0 0
        %3374 = vmatpush1.bf16.xpose.msra.mxu0 0
        %3375 = vmatprep.subr.bf16.mxu0 0
        %3376 = vmatpush1.bf16.xpose.msra.mxu0 0
        %3377 = vmatprep.subr.bf16.mxu0 0
        %3378 = vmatpush1.bf16.xpose.msra.mxu0 0
        %3379 = vmatprep.subr.bf16.mxu0 0
        %3380 = vmatpush1.bf16.xpose.msra.mxu0 0
        %3381 = vmatprep.subr.bf16.mxu0 0
        %3382 = vmatpush1.bf16.xpose.msra.mxu0 0
        %3383 = vmatprep.subr.bf16.mxu0 0
        %3384 = vmatpush1.bf16.xpose.msra.mxu0 0
        %3385 = vmatprep.subr.bf16.mxu0 0
        %3386 = vmatpush1.bf16.xpose.msra.mxu0 0
        %3387 = vmatprep.subr.bf16.mxu0 0
        %3388 = vmatpush1.bf16.xpose.msra.mxu0 0
        %3389 = vmatprep.subr.bf16.mxu0 0
        %3390 = vmatpush1.bf16.xpose.msra.mxu0 0
        %3391 = vmatprep.subr.bf16.mxu0 0
        %3392 = vmatpush1.bf16.xpose.msra.mxu0 0
        %3393 = vmatprep.subr.bf16.mxu0 0
        %3394 = vmatpush1.bf16.xpose.msra.mxu0 0
        %3395 = vmatprep.subr.bf16.mxu0 0
        %3396 = vmatpush1.bf16.xpose.msra.mxu0 0
        %3397 = vmatprep.subr.bf16.mxu0 0
        %3398 = vmatpush1.bf16.xpose.msra.mxu0 0
        %3399 = vmatprep.subr.bf16.mxu0 0
        %3400 = vmatpush1.bf16.xpose.msra.mxu0 0
        %3401 = vmatprep.mubr.bf16.mxu0 0
        %3402 = vmatmul.mubr.bf16.gmra.mrb[0].mxu0 %v3364
        %v3403 = vpop.f32.mrb[0].mxu0
        %v3404 = vadd.f32 0.0, %v3403
        %v3405 = vpop.f32.mrb[0].mxu0
        %v3406 = vpop.f32.mrb[0].mxu0
        %v3407 = vadd.f32 0.0, %v3406
        %v3408 = vpop.f32.mrb[0].mxu0
        %3409 = vdwg.mxu0
        %v3410 = vmul.f32 %v3047, 0.25
        %v3411 = vmul.f32 %v3050, 0.25
        %v3412 = vmul.f32 %v3098, 0.25
        %v3413 = vmul.f32 %v3101, 0.25
        %v3414 = vmul.f32 %v3149, 0.25
        %v3415 = vmul.f32 %v3152, 0.25
        %v3416 = vmul.f32 %v3200, 0.25
        %v3417 = vmul.f32 %v3203, 0.25
        %v3418 = vmul.f32 %v3251, 0.25
        %v3419 = vmul.f32 %v3254, 0.25
        %v3420 = vmul.f32 %v3302, 0.25
        %v3421 = vmul.f32 %v3305, 0.25
        %v3422 = vmul.f32 %v3353, 0.25
        %v3423 = vmul.f32 %v3356, 0.25
        %v3424 = vmul.f32 %v3404, 0.25
        %v3425 = vmul.f32 %v3407, 0.25
        %v3426 = vadd.f32 %v3410, %v1163
        %v3427 = vadd.f32 %v3411, %v1163
        %v3428 = vadd.f32 %v3412, %v1167
        %v3429 = vadd.f32 %v3413, %v1167
        %v3430 = vadd.f32 %v3414, %v1171
        %v3431 = vadd.f32 %v3415, %v1171
        %v3432 = vadd.f32 %v3416, %v1175
        %v3433 = vadd.f32 %v3417, %v1175
        %v3434 = vadd.f32 %v3418, %v1179
        %v3435 = vadd.f32 %v3419, %v1179
        %v3436 = vadd.f32 %v3420, %v1183
        %v3437 = vadd.f32 %v3421, %v1183
        %v3438 = vadd.f32 %v3422, %v1187
        %v3439 = vadd.f32 %v3423, %v1187
        %v3440 = vadd.f32 %v3424, %v1191
        %v3441 = vadd.f32 %v3425, %v1191
        %s3442 = scalar_lea.vmem %s369, 16
        %v3443 = vld [vmem:[%s3442] sm:$0xf]
        %v3444 = vld [vmem:[%s3442 + $0x4] sm:$0xf]
        %v3445 = vunpack.c.l.bf16 %v3443
        %v3446 = vunpack.c.l.bf16 %v3444
        %v3447 = vadd.f32 %v3426, %v3445
        %v3448 = vadd.f32 %v3427, %v3446
        %v3449 = vadd.f32 %v3428, %v3445
        %v3450 = vadd.f32 %v3429, %v3446
        %v3451 = vadd.f32 %v3430, %v3445
        %v3452 = vadd.f32 %v3431, %v3446
        %v3453 = vadd.f32 %v3432, %v3445
        %v3454 = vadd.f32 %v3433, %v3446
        %v3455 = vadd.f32 %v3434, %v3445
        %v3456 = vadd.f32 %v3435, %v3446
        %v3457 = vadd.f32 %v3436, %v3445
        %v3458 = vadd.f32 %v3437, %v3446
        %v3459 = vadd.f32 %v3438, %v3445
        %v3460 = vadd.f32 %v3439, %v3446
        %v3461 = vadd.f32 %v3440, %v3445
        %v3462 = vadd.f32 %v3441, %v3446
        %v3463 = vsel %vm746, %v3447, -inf
        %3464 = vmax.xlane.f32.xlu0 %v3463
        %v3465 = vpop.xlane.xlu0 %3464
        %v3466 = vsel %vm746, %v3448, -inf
        %3467 = vmax.xlane.f32.xlu0 %v3466
        %v3468 = vpop.xlane.xlu0 %3467
        %v3469 = vsel %vm746, %v3449, -inf
        %3470 = vmax.xlane.f32.xlu0 %v3469
        %v3471 = vpop.xlane.xlu0 %3470
        %v3472 = vsel %vm746, %v3450, -inf
        %3473 = vmax.xlane.f32.xlu0 %v3472
        %v3474 = vpop.xlane.xlu0 %3473
        %v3475 = vsel %vm746, %v3451, -inf
        %3476 = vmax.xlane.f32.xlu0 %v3475
        %v3477 = vpop.xlane.xlu0 %3476
        %v3478 = vsel %vm746, %v3452, -inf
        %3479 = vmax.xlane.f32.xlu0 %v3478
        %v3480 = vpop.xlane.xlu0 %3479
        %v3481 = vsel %vm746, %v3453, -inf
        %3482 = vmax.xlane.f32.xlu0 %v3481
        %v3483 = vpop.xlane.xlu0 %3482
        %v3484 = vsel %vm746, %v3454, -inf
        %3485 = vmax.xlane.f32.xlu0 %v3484
        %v3486 = vpop.xlane.xlu0 %3485
        %v3487 = vsel %vm746, %v3455, -inf
        %3488 = vmax.xlane.f32.xlu0 %v3487
        %v3489 = vpop.xlane.xlu0 %3488
        %v3490 = vsel %vm746, %v3456, -inf
        %3491 = vmax.xlane.f32.xlu0 %v3490
        %v3492 = vpop.xlane.xlu0 %3491
        %v3493 = vsel %vm746, %v3457, -inf
        %3494 = vmax.xlane.f32.xlu0 %v3493
        %v3495 = vpop.xlane.xlu0 %3494
        %v3496 = vsel %vm746, %v3458, -inf
        %3497 = vmax.xlane.f32.xlu0 %v3496
        %v3498 = vpop.xlane.xlu0 %3497
        %v3499 = vsel %vm746, %v3459, -inf
        %3500 = vmax.xlane.f32.xlu0 %v3499
        %v3501 = vpop.xlane.xlu0 %3500
        %v3502 = vsel %vm746, %v3460, -inf
        %3503 = vmax.xlane.f32.xlu0 %v3502
        %v3504 = vpop.xlane.xlu0 %3503
        %v3505 = vsel %vm746, %v3461, -inf
        %3506 = vmax.xlane.f32.xlu0 %v3505
        %v3507 = vpop.xlane.xlu0 %3506
        %v3508 = vsel %vm746, %v3462, -inf
        %3509 = vmax.xlane.f32.xlu0 %v3508
        %v3510 = vpop.xlane.xlu0 %3509
        %v3511 = vsub.f32 %v3447, %v3465
        %v3512 = vsub.f32 %v3448, %v3468
        %v3513 = vsub.f32 %v3449, %v3471
        %v3514 = vsub.f32 %v3450, %v3474
        %v3515 = vsub.f32 %v3451, %v3477
        %v3516 = vsub.f32 %v3452, %v3480
        %v3517 = vsub.f32 %v3453, %v3483
        %v3518 = vsub.f32 %v3454, %v3486
        %v3519 = vsub.f32 %v3455, %v3489
        %v3520 = vsub.f32 %v3456, %v3492
        %v3521 = vsub.f32 %v3457, %v3495
        %v3522 = vsub.f32 %v3458, %v3498
        %v3523 = vsub.f32 %v3459, %v3501
        %v3524 = vsub.f32 %v3460, %v3504
        %v3525 = vsub.f32 %v3461, %v3507
        %v3526 = vsub.f32 %v3462, %v3510
        %v3527 = vmul.f32 %v3511, 1.442695
        %v3528 = vpow.pop %v3527
        %v3529 = vmul.f32 %v3512, 1.442695
        %v3530 = vpow.pop %v3529
        %v3531 = vmul.f32 %v3513, 1.442695
        %v3532 = vpow.pop %v3531
        %v3533 = vmul.f32 %v3514, 1.442695
        %v3534 = vpow.pop %v3533
        %v3535 = vmul.f32 %v3515, 1.442695
        %v3536 = vpow.pop %v3535
        %v3537 = vmul.f32 %v3516, 1.442695
        %v3538 = vpow.pop %v3537
        %v3539 = vmul.f32 %v3517, 1.442695
        %v3540 = vpow.pop %v3539
        %v3541 = vmul.f32 %v3518, 1.442695
        %v3542 = vpow.pop %v3541
        %v3543 = vmul.f32 %v3519, 1.442695
        %v3544 = vpow.pop %v3543
        %v3545 = vmul.f32 %v3520, 1.442695
        %v3546 = vpow.pop %v3545
        %v3547 = vmul.f32 %v3521, 1.442695
        %v3548 = vpow.pop %v3547
        %v3549 = vmul.f32 %v3522, 1.442695
        %v3550 = vpow.pop %v3549
        %v3551 = vmul.f32 %v3523, 1.442695
        %v3552 = vpow.pop %v3551
        %v3553 = vmul.f32 %v3524, 1.442695
        %v3554 = vpow.pop %v3553
        %v3555 = vmul.f32 %v3525, 1.442695
        %v3556 = vpow.pop %v3555
        %v3557 = vmul.f32 %v3526, 1.442695
        %v3558 = vpow.pop %v3557
        %v3559 = vsel %vm746, %v3528, 0.0
        %3560 = vadd.xlane.f32.xlu0 %v3559
        %v3561 = vpop.xlane.xlu0 %3560
        %v3562 = vsel %vm746, %v3530, 0.0
        %3563 = vadd.xlane.f32.xlu0 %v3562
        %v3564 = vpop.xlane.xlu0 %3563
        %v3565 = vsel %vm746, %v3532, 0.0
        %3566 = vadd.xlane.f32.xlu0 %v3565
        %v3567 = vpop.xlane.xlu0 %3566
        %v3568 = vsel %vm746, %v3534, 0.0
        %3569 = vadd.xlane.f32.xlu0 %v3568
        %v3570 = vpop.xlane.xlu0 %3569
        %v3571 = vsel %vm746, %v3536, 0.0
        %3572 = vadd.xlane.f32.xlu0 %v3571
        %v3573 = vpop.xlane.xlu0 %3572
        %v3574 = vsel %vm746, %v3538, 0.0
        %3575 = vadd.xlane.f32.xlu0 %v3574
        %v3576 = vpop.xlane.xlu0 %3575
        %v3577 = vsel %vm746, %v3540, 0.0
        %3578 = vadd.xlane.f32.xlu0 %v3577
        %v3579 = vpop.xlane.xlu0 %3578
        %v3580 = vsel %vm746, %v3542, 0.0
        %3581 = vadd.xlane.f32.xlu0 %v3580
        %v3582 = vpop.xlane.xlu0 %3581
        %v3583 = vsel %vm746, %v3544, 0.0
        %3584 = vadd.xlane.f32.xlu0 %v3583
        %v3585 = vpop.xlane.xlu0 %3584
        %v3586 = vsel %vm746, %v3546, 0.0
        %3587 = vadd.xlane.f32.xlu0 %v3586
        %v3588 = vpop.xlane.xlu0 %3587
        %v3589 = vsel %vm746, %v3548, 0.0
        %3590 = vadd.xlane.f32.xlu0 %v3589
        %v3591 = vpop.xlane.xlu0 %3590
        %v3592 = vsel %vm746, %v3550, 0.0
        %3593 = vadd.xlane.f32.xlu0 %v3592
        %v3594 = vpop.xlane.xlu0 %3593
        %v3595 = vsel %vm746, %v3552, 0.0
        %3596 = vadd.xlane.f32.xlu0 %v3595
        %v3597 = vpop.xlane.xlu0 %3596
        %v3598 = vsel %vm746, %v3554, 0.0
        %3599 = vadd.xlane.f32.xlu0 %v3598
        %v3600 = vpop.xlane.xlu0 %3599
        %v3601 = vsel %vm746, %v3556, 0.0
        %3602 = vadd.xlane.f32.xlu0 %v3601
        %v3603 = vpop.xlane.xlu0 %3602
        %v3604 = vsel %vm746, %v3558, 0.0
        %3605 = vadd.xlane.f32.xlu0 %v3604
        %v3606 = vpop.xlane.xlu0 %3605
        %v3607 = vrcp.pop %v3561
        %v3608 = vrcp.pop %v3564
        %v3609 = vrcp.pop %v3567
        %v3610 = vrcp.pop %v3570
        %v3611 = vrcp.pop %v3573
        %v3612 = vrcp.pop %v3576
        %v3613 = vrcp.pop %v3579
        %v3614 = vrcp.pop %v3582
        %v3615 = vrcp.pop %v3585
        %v3616 = vrcp.pop %v3588
        %v3617 = vrcp.pop %v3591
        %v3618 = vrcp.pop %v3594
        %v3619 = vrcp.pop %v3597
        %v3620 = vrcp.pop %v3600
        %v3621 = vrcp.pop %v3603
        %v3622 = vrcp.pop %v3606
        %v3623 = vmul.f32 %v3528, %v3607
        %v3624 = vmul.f32 %v3530, %v3608
        %v3625 = vmul.f32 %v3532, %v3609
        %v3626 = vmul.f32 %v3534, %v3610
        %v3627 = vmul.f32 %v3536, %v3611
        %v3628 = vmul.f32 %v3538, %v3612
        %v3629 = vmul.f32 %v3540, %v3613
        %v3630 = vmul.f32 %v3542, %v3614
        %v3631 = vmul.f32 %v3544, %v3615
        %v3632 = vmul.f32 %v3546, %v3616
        %v3633 = vmul.f32 %v3548, %v3617
        %v3634 = vmul.f32 %v3550, %v3618
        %v3635 = vmul.f32 %v3552, %v3619
        %v3636 = vmul.f32 %v3554, %v3620
        %v3637 = vmul.f32 %v3556, %v3621
        %v3638 = vmul.f32 %v3558, %v3622
        %v3639 = vpack.c.bf16 %v3624, %v3623
        %v3640 = vpack.c.bf16 %v3626, %v3625
        %v3641 = vpack.c.bf16 %v3628, %v3627
        %v3642 = vpack.c.bf16 %v3630, %v3629
        %v3643 = vpack.c.bf16 %v3632, %v3631
        %v3644 = vpack.c.bf16 %v3634, %v3633
        %v3645 = vpack.c.bf16 %v3636, %v3635
        %v3646 = vpack.c.bf16 %v3638, %v3637
        %3647 = vrot.lane.b32.xlu0 %v598, 96
        %v3648 = vpop.permute.xlu0 %3647
        %v3651 = vsel %vm746, %v3639, 0
        %3653 = vmatprep.subr.bf16.mxu0 0
        %3654 = vmatpush1.bf16.msra.mxu0 %v3648
        %3655 = vmatprep.subr.bf16.mxu0 0
        %3656 = vmatpush1.bf16.msra.mxu0 0
        %3657 = vmatprep.subr.bf16.mxu0 0
        %3658 = vmatpush1.bf16.msra.mxu0 0
        %3659 = vmatprep.subr.bf16.mxu0 0
        %3660 = vmatpush1.bf16.msra.mxu0 0
        %3661 = vmatprep.subr.bf16.mxu0 0
        %3662 = vmatpush1.bf16.msra.mxu0 0
        %3663 = vmatprep.subr.bf16.mxu0 0
        %3664 = vmatpush1.bf16.msra.mxu0 0
        %3665 = vmatprep.subr.bf16.mxu0 0
        %3666 = vmatpush1.bf16.msra.mxu0 0
        %3667 = vmatprep.subr.bf16.mxu0 0
        %3668 = vmatpush1.bf16.msra.mxu0 0
        %3669 = vmatprep.subr.bf16.mxu0 0
        %3670 = vmatpush1.bf16.msra.mxu0 0
        %3671 = vmatprep.subr.bf16.mxu0 0
        %3672 = vmatpush1.bf16.msra.mxu0 0
        %3673 = vmatprep.subr.bf16.mxu0 0
        %3674 = vmatpush1.bf16.msra.mxu0 0
        %3675 = vmatprep.subr.bf16.mxu0 0
        %3676 = vmatpush1.bf16.msra.mxu0 0
        %3677 = vmatprep.subr.bf16.mxu0 0
        %3678 = vmatpush1.bf16.msra.mxu0 0
        %3679 = vmatprep.subr.bf16.mxu0 0
        %3680 = vmatpush1.bf16.msra.mxu0 0
        %3681 = vmatprep.subr.bf16.mxu0 0
        %3682 = vmatpush1.bf16.msra.mxu0 0
        %3683 = vmatprep.subr.bf16.mxu0 0
        %3684 = vmatpush1.bf16.msra.mxu0 0
        %3685 = vmatprep.mubr.bf16.mxu0 0
        %3686 = vmatmul.mubr.bf16.gmra.mrb[0].mxu0 %v3651
        %v3687 = vpop.f32.mrb[0].mxu0
        %v3688 = vadd.f32 0.0, %v3687
        %v3689 = vpop.f32.mrb[0].mxu0
        %v3690 = vpop.f32.mrb[0].mxu0
        %v3691 = vadd.f32 0.0, %v3690
        %v3692 = vpop.f32.mrb[0].mxu0
        %3693 = vdwg.mxu0
        %3694 = vrot.lane.b32.xlu0 %v599, 96
        %v3695 = vpop.permute.xlu0 %3694
        %v3698 = vsel %vm746, %v3640, 0
        %3700 = vmatprep.subr.bf16.mxu0 0
        %3701 = vmatpush1.bf16.msra.mxu0 %v3695
        %3702 = vmatprep.subr.bf16.mxu0 0
        %3703 = vmatpush1.bf16.msra.mxu0 0
        %3704 = vmatprep.subr.bf16.mxu0 0
        %3705 = vmatpush1.bf16.msra.mxu0 0
        %3706 = vmatprep.subr.bf16.mxu0 0
        %3707 = vmatpush1.bf16.msra.mxu0 0
        %3708 = vmatprep.subr.bf16.mxu0 0
        %3709 = vmatpush1.bf16.msra.mxu0 0
        %3710 = vmatprep.subr.bf16.mxu0 0
        %3711 = vmatpush1.bf16.msra.mxu0 0
        %3712 = vmatprep.subr.bf16.mxu0 0
        %3713 = vmatpush1.bf16.msra.mxu0 0
        %3714 = vmatprep.subr.bf16.mxu0 0
        %3715 = vmatpush1.bf16.msra.mxu0 0
        %3716 = vmatprep.subr.bf16.mxu0 0
        %3717 = vmatpush1.bf16.msra.mxu0 0
        %3718 = vmatprep.subr.bf16.mxu0 0
        %3719 = vmatpush1.bf16.msra.mxu0 0
        %3720 = vmatprep.subr.bf16.mxu0 0
        %3721 = vmatpush1.bf16.msra.mxu0 0
        %3722 = vmatprep.subr.bf16.mxu0 0
        %3723 = vmatpush1.bf16.msra.mxu0 0
        %3724 = vmatprep.subr.bf16.mxu0 0
        %3725 = vmatpush1.bf16.msra.mxu0 0
        %3726 = vmatprep.subr.bf16.mxu0 0
        %3727 = vmatpush1.bf16.msra.mxu0 0
        %3728 = vmatprep.subr.bf16.mxu0 0
        %3729 = vmatpush1.bf16.msra.mxu0 0
        %3730 = vmatprep.subr.bf16.mxu0 0
        %3731 = vmatpush1.bf16.msra.mxu0 0
        %3732 = vmatprep.mubr.bf16.mxu0 0
        %3733 = vmatmul.mubr.bf16.gmra.mrb[0].mxu0 %v3698
        %v3734 = vpop.f32.mrb[0].mxu0
        %v3735 = vadd.f32 0.0, %v3734
        %v3736 = vpop.f32.mrb[0].mxu0
        %v3737 = vpop.f32.mrb[0].mxu0
        %v3738 = vadd.f32 0.0, %v3737
        %v3739 = vpop.f32.mrb[0].mxu0
        %3740 = vdwg.mxu0
        %3741 = vrot.lane.b32.xlu0 %v600, 96
        %v3742 = vpop.permute.xlu0 %3741
        %v3745 = vsel %vm746, %v3641, 0
        %3747 = vmatprep.subr.bf16.mxu0 0
        %3748 = vmatpush1.bf16.msra.mxu0 %v3742
        %3749 = vmatprep.subr.bf16.mxu0 0
        %3750 = vmatpush1.bf16.msra.mxu0 0
        %3751 = vmatprep.subr.bf16.mxu0 0
        %3752 = vmatpush1.bf16.msra.mxu0 0
        %3753 = vmatprep.subr.bf16.mxu0 0
        %3754 = vmatpush1.bf16.msra.mxu0 0
        %3755 = vmatprep.subr.bf16.mxu0 0
        %3756 = vmatpush1.bf16.msra.mxu0 0
        %3757 = vmatprep.subr.bf16.mxu0 0
        %3758 = vmatpush1.bf16.msra.mxu0 0
        %3759 = vmatprep.subr.bf16.mxu0 0
        %3760 = vmatpush1.bf16.msra.mxu0 0
        %3761 = vmatprep.subr.bf16.mxu0 0
        %3762 = vmatpush1.bf16.msra.mxu0 0
        %3763 = vmatprep.subr.bf16.mxu0 0
        %3764 = vmatpush1.bf16.msra.mxu0 0
        %3765 = vmatprep.subr.bf16.mxu0 0
        %3766 = vmatpush1.bf16.msra.mxu0 0
        %3767 = vmatprep.subr.bf16.mxu0 0
        %3768 = vmatpush1.bf16.msra.mxu0 0
        %3769 = vmatprep.subr.bf16.mxu0 0
        %3770 = vmatpush1.bf16.msra.mxu0 0
        %3771 = vmatprep.subr.bf16.mxu0 0
        %3772 = vmatpush1.bf16.msra.mxu0 0
        %3773 = vmatprep.subr.bf16.mxu0 0
        %3774 = vmatpush1.bf16.msra.mxu0 0
        %3775 = vmatprep.subr.bf16.mxu0 0
        %3776 = vmatpush1.bf16.msra.mxu0 0
        %3777 = vmatprep.subr.bf16.mxu0 0
        %3778 = vmatpush1.bf16.msra.mxu0 0
        %3779 = vmatprep.mubr.bf16.mxu0 0
        %3780 = vmatmul.mubr.bf16.gmra.mrb[0].mxu0 %v3745
        %v3781 = vpop.f32.mrb[0].mxu0
        %v3782 = vadd.f32 0.0, %v3781
        %v3783 = vpop.f32.mrb[0].mxu0
        %v3784 = vpop.f32.mrb[0].mxu0
        %v3785 = vadd.f32 0.0, %v3784
        %v3786 = vpop.f32.mrb[0].mxu0
        %3787 = vdwg.mxu0
        %3788 = vrot.lane.b32.xlu0 %v601, 96
        %v3789 = vpop.permute.xlu0 %3788
        %v3792 = vsel %vm746, %v3642, 0
        %3794 = vmatprep.subr.bf16.mxu0 0
        %3795 = vmatpush1.bf16.msra.mxu0 %v3789
        %3796 = vmatprep.subr.bf16.mxu0 0
        %3797 = vmatpush1.bf16.msra.mxu0 0
        %3798 = vmatprep.subr.bf16.mxu0 0
        %3799 = vmatpush1.bf16.msra.mxu0 0
        %3800 = vmatprep.subr.bf16.mxu0 0
        %3801 = vmatpush1.bf16.msra.mxu0 0
        %3802 = vmatprep.subr.bf16.mxu0 0
        %3803 = vmatpush1.bf16.msra.mxu0 0
        %3804 = vmatprep.subr.bf16.mxu0 0
        %3805 = vmatpush1.bf16.msra.mxu0 0
        %3806 = vmatprep.subr.bf16.mxu0 0
        %3807 = vmatpush1.bf16.msra.mxu0 0
        %3808 = vmatprep.subr.bf16.mxu0 0
        %3809 = vmatpush1.bf16.msra.mxu0 0
        %3810 = vmatprep.subr.bf16.mxu0 0
        %3811 = vmatpush1.bf16.msra.mxu0 0
        %3812 = vmatprep.subr.bf16.mxu0 0
        %3813 = vmatpush1.bf16.msra.mxu0 0
        %3814 = vmatprep.subr.bf16.mxu0 0
        %3815 = vmatpush1.bf16.msra.mxu0 0
        %3816 = vmatprep.subr.bf16.mxu0 0
        %3817 = vmatpush1.bf16.msra.mxu0 0
        %3818 = vmatprep.subr.bf16.mxu0 0
        %3819 = vmatpush1.bf16.msra.mxu0 0
        %3820 = vmatprep.subr.bf16.mxu0 0
        %3821 = vmatpush1.bf16.msra.mxu0 0
        %3822 = vmatprep.subr.bf16.mxu0 0
        %3823 = vmatpush1.bf16.msra.mxu0 0
        %3824 = vmatprep.subr.bf16.mxu0 0
        %3825 = vmatpush1.bf16.msra.mxu0 0
        %3826 = vmatprep.mubr.bf16.mxu0 0
        %3827 = vmatmul.mubr.bf16.gmra.mrb[0].mxu0 %v3792
        %v3828 = vpop.f32.mrb[0].mxu0
        %v3829 = vadd.f32 0.0, %v3828
        %v3830 = vpop.f32.mrb[0].mxu0
        %v3831 = vpop.f32.mrb[0].mxu0
        %v3832 = vadd.f32 0.0, %v3831
        %v3833 = vpop.f32.mrb[0].mxu0
        %3834 = vdwg.mxu0
        %3835 = vrot.lane.b32.xlu0 %v602, 96
        %v3836 = vpop.permute.xlu0 %3835
        %v3839 = vsel %vm746, %v3643, 0
        %3841 = vmatprep.subr.bf16.mxu0 0
        %3842 = vmatpush1.bf16.msra.mxu0 %v3836
        %3843 = vmatprep.subr.bf16.mxu0 0
        %3844 = vmatpush1.bf16.msra.mxu0 0
        %3845 = vmatprep.subr.bf16.mxu0 0
        %3846 = vmatpush1.bf16.msra.mxu0 0
        %3847 = vmatprep.subr.bf16.mxu0 0
        %3848 = vmatpush1.bf16.msra.mxu0 0
        %3849 = vmatprep.subr.bf16.mxu0 0
        %3850 = vmatpush1.bf16.msra.mxu0 0
        %3851 = vmatprep.subr.bf16.mxu0 0
        %3852 = vmatpush1.bf16.msra.mxu0 0
        %3853 = vmatprep.subr.bf16.mxu0 0
        %3854 = vmatpush1.bf16.msra.mxu0 0
        %3855 = vmatprep.subr.bf16.mxu0 0
        %3856 = vmatpush1.bf16.msra.mxu0 0
        %3857 = vmatprep.subr.bf16.mxu0 0
        %3858 = vmatpush1.bf16.msra.mxu0 0
        %3859 = vmatprep.subr.bf16.mxu0 0
        %3860 = vmatpush1.bf16.msra.mxu0 0
        %3861 = vmatprep.subr.bf16.mxu0 0
        %3862 = vmatpush1.bf16.msra.mxu0 0
        %3863 = vmatprep.subr.bf16.mxu0 0
        %3864 = vmatpush1.bf16.msra.mxu0 0
        %3865 = vmatprep.subr.bf16.mxu0 0
        %3866 = vmatpush1.bf16.msra.mxu0 0
        %3867 = vmatprep.subr.bf16.mxu0 0
        %3868 = vmatpush1.bf16.msra.mxu0 0
        %3869 = vmatprep.subr.bf16.mxu0 0
        %3870 = vmatpush1.bf16.msra.mxu0 0
        %3871 = vmatprep.subr.bf16.mxu0 0
        %3872 = vmatpush1.bf16.msra.mxu0 0
        %3873 = vmatprep.mubr.bf16.mxu0 0
        %3874 = vmatmul.mubr.bf16.gmra.mrb[0].mxu0 %v3839
        %v3875 = vpop.f32.mrb[0].mxu0
        %v3876 = vadd.f32 0.0, %v3875
        %v3877 = vpop.f32.mrb[0].mxu0
        %v3878 = vpop.f32.mrb[0].mxu0
        %v3879 = vadd.f32 0.0, %v3878
        %v3880 = vpop.f32.mrb[0].mxu0
        %3881 = vdwg.mxu0
        %3882 = vrot.lane.b32.xlu0 %v603, 96
        %v3883 = vpop.permute.xlu0 %3882
        %v3886 = vsel %vm746, %v3644, 0
        %3888 = vmatprep.subr.bf16.mxu0 0
        %3889 = vmatpush1.bf16.msra.mxu0 %v3883
        %3890 = vmatprep.subr.bf16.mxu0 0
        %3891 = vmatpush1.bf16.msra.mxu0 0
        %3892 = vmatprep.subr.bf16.mxu0 0
        %3893 = vmatpush1.bf16.msra.mxu0 0
        %3894 = vmatprep.subr.bf16.mxu0 0
        %3895 = vmatpush1.bf16.msra.mxu0 0
        %3896 = vmatprep.subr.bf16.mxu0 0
        %3897 = vmatpush1.bf16.msra.mxu0 0
        %3898 = vmatprep.subr.bf16.mxu0 0
        %3899 = vmatpush1.bf16.msra.mxu0 0
        %3900 = vmatprep.subr.bf16.mxu0 0
        %3901 = vmatpush1.bf16.msra.mxu0 0
        %3902 = vmatprep.subr.bf16.mxu0 0
        %3903 = vmatpush1.bf16.msra.mxu0 0
        %3904 = vmatprep.subr.bf16.mxu0 0
        %3905 = vmatpush1.bf16.msra.mxu0 0
        %3906 = vmatprep.subr.bf16.mxu0 0
        %3907 = vmatpush1.bf16.msra.mxu0 0
        %3908 = vmatprep.subr.bf16.mxu0 0
        %3909 = vmatpush1.bf16.msra.mxu0 0
        %3910 = vmatprep.subr.bf16.mxu0 0
        %3911 = vmatpush1.bf16.msra.mxu0 0
        %3912 = vmatprep.subr.bf16.mxu0 0
        %3913 = vmatpush1.bf16.msra.mxu0 0
        %3914 = vmatprep.subr.bf16.mxu0 0
        %3915 = vmatpush1.bf16.msra.mxu0 0
        %3916 = vmatprep.subr.bf16.mxu0 0
        %3917 = vmatpush1.bf16.msra.mxu0 0
        %3918 = vmatprep.subr.bf16.mxu0 0
        %3919 = vmatpush1.bf16.msra.mxu0 0
        %3920 = vmatprep.mubr.bf16.mxu0 0
        %3921 = vmatmul.mubr.bf16.gmra.mrb[0].mxu0 %v3886
        %v3922 = vpop.f32.mrb[0].mxu0
        %v3923 = vadd.f32 0.0, %v3922
        %v3924 = vpop.f32.mrb[0].mxu0
        %v3925 = vpop.f32.mrb[0].mxu0
        %v3926 = vadd.f32 0.0, %v3925
        %v3927 = vpop.f32.mrb[0].mxu0
        %3928 = vdwg.mxu0
        %3929 = vrot.lane.b32.xlu0 %v604, 96
        %v3930 = vpop.permute.xlu0 %3929
        %v3933 = vsel %vm746, %v3645, 0
        %3935 = vmatprep.subr.bf16.mxu0 0
        %3936 = vmatpush1.bf16.msra.mxu0 %v3930
        %3937 = vmatprep.subr.bf16.mxu0 0
        %3938 = vmatpush1.bf16.msra.mxu0 0
        %3939 = vmatprep.subr.bf16.mxu0 0
        %3940 = vmatpush1.bf16.msra.mxu0 0
        %3941 = vmatprep.subr.bf16.mxu0 0
        %3942 = vmatpush1.bf16.msra.mxu0 0
        %3943 = vmatprep.subr.bf16.mxu0 0
        %3944 = vmatpush1.bf16.msra.mxu0 0
        %3945 = vmatprep.subr.bf16.mxu0 0
        %3946 = vmatpush1.bf16.msra.mxu0 0
        %3947 = vmatprep.subr.bf16.mxu0 0
        %3948 = vmatpush1.bf16.msra.mxu0 0
        %3949 = vmatprep.subr.bf16.mxu0 0
        %3950 = vmatpush1.bf16.msra.mxu0 0
        %3951 = vmatprep.subr.bf16.mxu0 0
        %3952 = vmatpush1.bf16.msra.mxu0 0
        %3953 = vmatprep.subr.bf16.mxu0 0
        %3954 = vmatpush1.bf16.msra.mxu0 0
        %3955 = vmatprep.subr.bf16.mxu0 0
        %3956 = vmatpush1.bf16.msra.mxu0 0
        %3957 = vmatprep.subr.bf16.mxu0 0
        %3958 = vmatpush1.bf16.msra.mxu0 0
        %3959 = vmatprep.subr.bf16.mxu0 0
        %3960 = vmatpush1.bf16.msra.mxu0 0
        %3961 = vmatprep.subr.bf16.mxu0 0
        %3962 = vmatpush1.bf16.msra.mxu0 0
        %3963 = vmatprep.subr.bf16.mxu0 0
        %3964 = vmatpush1.bf16.msra.mxu0 0
        %3965 = vmatprep.subr.bf16.mxu0 0
        %3966 = vmatpush1.bf16.msra.mxu0 0
        %3967 = vmatprep.mubr.bf16.mxu0 0
        %3968 = vmatmul.mubr.bf16.gmra.mrb[0].mxu0 %v3933
        %v3969 = vpop.f32.mrb[0].mxu0
        %v3970 = vadd.f32 0.0, %v3969
        %v3971 = vpop.f32.mrb[0].mxu0
        %v3972 = vpop.f32.mrb[0].mxu0
        %v3973 = vadd.f32 0.0, %v3972
        %v3974 = vpop.f32.mrb[0].mxu0
        %3975 = vdwg.mxu0
        %3976 = vrot.lane.b32.xlu0 %v605, 96
        %v3977 = vpop.permute.xlu0 %3976
        %v3980 = vsel %vm746, %v3646, 0
        %3982 = vmatprep.subr.bf16.mxu0 0
        %3983 = vmatpush1.bf16.msra.mxu0 %v3977
        %3984 = vmatprep.subr.bf16.mxu0 0
        %3985 = vmatpush1.bf16.msra.mxu0 0
        %3986 = vmatprep.subr.bf16.mxu0 0
        %3987 = vmatpush1.bf16.msra.mxu0 0
        %3988 = vmatprep.subr.bf16.mxu0 0
        %3989 = vmatpush1.bf16.msra.mxu0 0
        %3990 = vmatprep.subr.bf16.mxu0 0
        %3991 = vmatpush1.bf16.msra.mxu0 0
        %3992 = vmatprep.subr.bf16.mxu0 0
        %3993 = vmatpush1.bf16.msra.mxu0 0
        %3994 = vmatprep.subr.bf16.mxu0 0
        %3995 = vmatpush1.bf16.msra.mxu0 0
        %3996 = vmatprep.subr.bf16.mxu0 0
        %3997 = vmatpush1.bf16.msra.mxu0 0
        %3998 = vmatprep.subr.bf16.mxu0 0
        %3999 = vmatpush1.bf16.msra.mxu0 0
        %4000 = vmatprep.subr.bf16.mxu0 0
        %4001 = vmatpush1.bf16.msra.mxu0 0
        %4002 = vmatprep.subr.bf16.mxu0 0
        %4003 = vmatpush1.bf16.msra.mxu0 0
        %4004 = vmatprep.subr.bf16.mxu0 0
        %4005 = vmatpush1.bf16.msra.mxu0 0
        %4006 = vmatprep.subr.bf16.mxu0 0
        %4007 = vmatpush1.bf16.msra.mxu0 0
        %4008 = vmatprep.subr.bf16.mxu0 0
        %4009 = vmatpush1.bf16.msra.mxu0 0
        %4010 = vmatprep.subr.bf16.mxu0 0
        %4011 = vmatpush1.bf16.msra.mxu0 0
        %4012 = vmatprep.subr.bf16.mxu0 0
        %4013 = vmatpush1.bf16.msra.mxu0 0
        %4014 = vmatprep.mubr.bf16.mxu0 0
        %4015 = vmatmul.mubr.bf16.gmra.mrb[0].mxu0 %v3980
        %v4016 = vpop.f32.mrb[0].mxu0
        %v4017 = vadd.f32 0.0, %v4016
        %v4018 = vpop.f32.mrb[0].mxu0
        %v4019 = vpop.f32.mrb[0].mxu0
        %v4020 = vadd.f32 0.0, %v4019
        %v4021 = vpop.f32.mrb[0].mxu0
        %4022 = vdwg.mxu0
        %4023 = vrot.lane.b32.xlu0 %v696, 32
        %v4024 = vpop.permute.xlu0 %4023
        %4025 = vrot.lane.b32.xlu0 %v698, 32
        %v4026 = vpop.permute.xlu0 %4025
        %4027 = vrot.lane.b32.xlu0 %v700, 32
        %v4028 = vpop.permute.xlu0 %4027
        %4029 = vrot.lane.b32.xlu0 %v702, 32
        %v4030 = vpop.permute.xlu0 %4029
        %4031 = vrot.lane.b32.xlu0 %v704, 32
        %v4032 = vpop.permute.xlu0 %4031
        %4033 = vrot.lane.b32.xlu0 %v706, 32
        %v4034 = vpop.permute.xlu0 %4033
        %4035 = vrot.lane.b32.xlu0 %v708, 32
        %v4036 = vpop.permute.xlu0 %4035
        %4037 = vrot.lane.b32.xlu0 %v710, 32
        %v4038 = vpop.permute.xlu0 %4037
        %4039 = vrot.lane.b32.xlu0 %v712, 32
        %v4040 = vpop.permute.xlu0 %4039
        %4041 = vrot.lane.b32.xlu0 %v714, 32
        %v4042 = vpop.permute.xlu0 %4041
        %4043 = vrot.lane.b32.xlu0 %v716, 32
        %v4044 = vpop.permute.xlu0 %4043
        %4045 = vrot.lane.b32.xlu0 %v718, 32
        %v4046 = vpop.permute.xlu0 %4045
        %4047 = vrot.lane.b32.xlu0 %v720, 32
        %v4048 = vpop.permute.xlu0 %4047
        %4049 = vrot.lane.b32.xlu0 %v722, 32
        %v4050 = vpop.permute.xlu0 %4049
        %4051 = vrot.lane.b32.xlu0 %v724, 32
        %v4052 = vpop.permute.xlu0 %4051
        %4053 = vrot.lane.b32.xlu0 %v726, 32
        %v4054 = vpop.permute.xlu0 %4053
        %v4071 = vmul.f32 %v3688, %v4024
        %v4072 = vmul.f32 %v3691, %v4026
        %v4073 = vmul.f32 %v3735, %v4028
        %v4074 = vmul.f32 %v3738, %v4030
        %v4075 = vmul.f32 %v3782, %v4032
        %v4076 = vmul.f32 %v3785, %v4034
        %v4077 = vmul.f32 %v3829, %v4036
        %v4078 = vmul.f32 %v3832, %v4038
        %v4079 = vmul.f32 %v3876, %v4040
        %v4080 = vmul.f32 %v3879, %v4042
        %v4081 = vmul.f32 %v3923, %v4044
        %v4082 = vmul.f32 %v3926, %v4046
        %v4083 = vmul.f32 %v3970, %v4048
        %v4084 = vmul.f32 %v3973, %v4050
        %v4085 = vmul.f32 %v4017, %v4052
        %v4086 = vmul.f32 %v4020, %v4054
        %v4087 = vpack.c.bf16 %v4072, %v4071
        %v4088 = vpack.c.bf16 %v4074, %v4073
        %v4089 = vpack.c.bf16 %v4076, %v4075
        %v4090 = vpack.c.bf16 %v4078, %v4077
        %v4091 = vpack.c.bf16 %v4080, %v4079
        %v4092 = vpack.c.bf16 %v4082, %v4081
        %v4093 = vpack.c.bf16 %v4084, %v4083
        %v4094 = vpack.c.bf16 %v4086, %v4085
        %4103 = vrot.lane.b32.xlu0 %v4087, 32
        %v4104 = vpop.permute.xlu0 %4103
        %4105 = vrot.lane.b32.xlu0 %v4088, 32
        %v4106 = vpop.permute.xlu0 %4105
        %4107 = vrot.lane.b32.xlu0 %v4089, 32
        %v4108 = vpop.permute.xlu0 %4107
        %4109 = vrot.lane.b32.xlu0 %v4090, 32
        %v4110 = vpop.permute.xlu0 %4109
        %4111 = vrot.lane.b32.xlu0 %v4091, 32
        %v4112 = vpop.permute.xlu0 %4111
        %4113 = vrot.lane.b32.xlu0 %v4092, 32
        %v4114 = vpop.permute.xlu0 %4113
        %4115 = vrot.lane.b32.xlu0 %v4093, 32
        %v4116 = vpop.permute.xlu0 %4115
        %4117 = vrot.lane.b32.xlu0 %v4094, 32
        %v4118 = vpop.permute.xlu0 %4117
        %vm4127 = vcmask 392448
        %4128 = vst.msk [vmem:[#allocation2] sm:$0xff] %vm4127, %v4104
        %4129 = vst.msk [vmem:[#allocation2 + $0x8] sm:$0xff] %vm4127, %v4106
        %4130 = vst.msk [vmem:[#allocation2 + $0x10] sm:$0xff] %vm4127, %v4108
        %4131 = vst.msk [vmem:[#allocation2 + $0x18] sm:$0xff] %vm4127, %v4110
        %4132 = vst.msk [vmem:[#allocation2 + $0x20] sm:$0xff] %vm4127, %v4112
        %4133 = vst.msk [vmem:[#allocation2 + $0x28] sm:$0xff] %vm4127, %v4114
        %4134 = vst.msk [vmem:[#allocation2 + $0x30] sm:$0xff] %vm4127, %v4116
        %4135 = vst.msk [vmem:[#allocation2 + $0x38] sm:$0xff] %vm4127, %v4118
        %4136 = vrot.lane.b32.xlu0 %v590, 80
        %v4137 = vpop.permute.xlu0 %4136
        %4138 = vrot.lane.b32.xlu0 %v590, 16
        %v4139 = vpop.permute.xlu0 %4138
        %v4141 = vsel %vm746, %v4137, 0
        %v4144 = vsel %vm746, %v4139, 0
        %4146 = vmatprep.subr.bf16.mxu0 0
        %4147 = vmatpush1.bf16.xpose.msra.mxu0 %v4144
        %4148 = vmatprep.subr.bf16.mxu0 0
        %4149 = vmatpush1.bf16.xpose.msra.mxu0 0
        %4150 = vmatprep.subr.bf16.mxu0 0
        %4151 = vmatpush1.bf16.xpose.msra.mxu0 0
        %4152 = vmatprep.subr.bf16.mxu0 0
        %4153 = vmatpush1.bf16.xpose.msra.mxu0 0
        %4154 = vmatprep.subr.bf16.mxu0 0
        %4155 = vmatpush1.bf16.xpose.msra.mxu0 0
        %4156 = vmatprep.subr.bf16.mxu0 0
        %4157 = vmatpush1.bf16.xpose.msra.mxu0 0
        %4158 = vmatprep.subr.bf16.mxu0 0
        %4159 = vmatpush1.bf16.xpose.msra.mxu0 0
        %4160 = vmatprep.subr.bf16.mxu0 0
        %4161 = vmatpush1.bf16.xpose.msra.mxu0 0
        %4162 = vmatprep.subr.bf16.mxu0 0
        %4163 = vmatpush1.bf16.xpose.msra.mxu0 0
        %4164 = vmatprep.subr.bf16.mxu0 0
        %4165 = vmatpush1.bf16.xpose.msra.mxu0 0
        %4166 = vmatprep.subr.bf16.mxu0 0
        %4167 = vmatpush1.bf16.xpose.msra.mxu0 0
        %4168 = vmatprep.subr.bf16.mxu0 0
        %4169 = vmatpush1.bf16.xpose.msra.mxu0 0
        %4170 = vmatprep.subr.bf16.mxu0 0
        %4171 = vmatpush1.bf16.xpose.msra.mxu0 0
        %4172 = vmatprep.subr.bf16.mxu0 0
        %4173 = vmatpush1.bf16.xpose.msra.mxu0 0
        %4174 = vmatprep.subr.bf16.mxu0 0
        %4175 = vmatpush1.bf16.xpose.msra.mxu0 0
        %4176 = vmatprep.subr.bf16.mxu0 0
        %4177 = vmatpush1.bf16.xpose.msra.mxu0 0
        %4178 = vmatprep.mubr.bf16.mxu0 0
        %4179 = vmatmul.mubr.bf16.gmra.mrb[0].mxu0 %v4141
        %v4180 = vpop.f32.mrb[0].mxu0
        %v4181 = vadd.f32 0.0, %v4180
        %v4182 = vpop.f32.mrb[0].mxu0
        %v4183 = vpop.f32.mrb[0].mxu0
        %v4184 = vadd.f32 0.0, %v4183
        %v4185 = vpop.f32.mrb[0].mxu0
        %4186 = vdwg.mxu0
        %4187 = vrot.lane.b32.xlu0 %v591, 80
        %v4188 = vpop.permute.xlu0 %4187
        %4189 = vrot.lane.b32.xlu0 %v591, 16
        %v4190 = vpop.permute.xlu0 %4189
        %v4192 = vsel %vm746, %v4188, 0
        %v4195 = vsel %vm746, %v4190, 0
        %4197 = vmatprep.subr.bf16.mxu0 0
        %4198 = vmatpush1.bf16.xpose.msra.mxu0 %v4195
        %4199 = vmatprep.subr.bf16.mxu0 0
        %4200 = vmatpush1.bf16.xpose.msra.mxu0 0
        %4201 = vmatprep.subr.bf16.mxu0 0
        %4202 = vmatpush1.bf16.xpose.msra.mxu0 0
        %4203 = vmatprep.subr.bf16.mxu0 0
        %4204 = vmatpush1.bf16.xpose.msra.mxu0 0
        %4205 = vmatprep.subr.bf16.mxu0 0
        %4206 = vmatpush1.bf16.xpose.msra.mxu0 0
        %4207 = vmatprep.subr.bf16.mxu0 0
        %4208 = vmatpush1.bf16.xpose.msra.mxu0 0
        %4209 = vmatprep.subr.bf16.mxu0 0
        %4210 = vmatpush1.bf16.xpose.msra.mxu0 0
        %4211 = vmatprep.subr.bf16.mxu0 0
        %4212 = vmatpush1.bf16.xpose.msra.mxu0 0
        %4213 = vmatprep.subr.bf16.mxu0 0
        %4214 = vmatpush1.bf16.xpose.msra.mxu0 0
        %4215 = vmatprep.subr.bf16.mxu0 0
        %4216 = vmatpush1.bf16.xpose.msra.mxu0 0
        %4217 = vmatprep.subr.bf16.mxu0 0
        %4218 = vmatpush1.bf16.xpose.msra.mxu0 0
        %4219 = vmatprep.subr.bf16.mxu0 0
        %4220 = vmatpush1.bf16.xpose.msra.mxu0 0
        %4221 = vmatprep.subr.bf16.mxu0 0
        %4222 = vmatpush1.bf16.xpose.msra.mxu0 0
        %4223 = vmatprep.subr.bf16.mxu0 0
        %4224 = vmatpush1.bf16.xpose.msra.mxu0 0
        %4225 = vmatprep.subr.bf16.mxu0 0
        %4226 = vmatpush1.bf16.xpose.msra.mxu0 0
        %4227 = vmatprep.subr.bf16.mxu0 0
        %4228 = vmatpush1.bf16.xpose.msra.mxu0 0
        %4229 = vmatprep.mubr.bf16.mxu0 0
        %4230 = vmatmul.mubr.bf16.gmra.mrb[0].mxu0 %v4192
        %v4231 = vpop.f32.mrb[0].mxu0
        %v4232 = vadd.f32 0.0, %v4231
        %v4233 = vpop.f32.mrb[0].mxu0
        %v4234 = vpop.f32.mrb[0].mxu0
        %v4235 = vadd.f32 0.0, %v4234
        %v4236 = vpop.f32.mrb[0].mxu0
        %4237 = vdwg.mxu0
        %4238 = vrot.lane.b32.xlu0 %v592, 80
        %v4239 = vpop.permute.xlu0 %4238
        %4240 = vrot.lane.b32.xlu0 %v592, 16
        %v4241 = vpop.permute.xlu0 %4240
        %v4243 = vsel %vm746, %v4239, 0
        %v4246 = vsel %vm746, %v4241, 0
        %4248 = vmatprep.subr.bf16.mxu0 0
        %4249 = vmatpush1.bf16.xpose.msra.mxu0 %v4246
        %4250 = vmatprep.subr.bf16.mxu0 0
        %4251 = vmatpush1.bf16.xpose.msra.mxu0 0
        %4252 = vmatprep.subr.bf16.mxu0 0
        %4253 = vmatpush1.bf16.xpose.msra.mxu0 0
        %4254 = vmatprep.subr.bf16.mxu0 0
        %4255 = vmatpush1.bf16.xpose.msra.mxu0 0
        %4256 = vmatprep.subr.bf16.mxu0 0
        %4257 = vmatpush1.bf16.xpose.msra.mxu0 0
        %4258 = vmatprep.subr.bf16.mxu0 0
        %4259 = vmatpush1.bf16.xpose.msra.mxu0 0
        %4260 = vmatprep.subr.bf16.mxu0 0
        %4261 = vmatpush1.bf16.xpose.msra.mxu0 0
        %4262 = vmatprep.subr.bf16.mxu0 0
        %4263 = vmatpush1.bf16.xpose.msra.mxu0 0
        %4264 = vmatprep.subr.bf16.mxu0 0
        %4265 = vmatpush1.bf16.xpose.msra.mxu0 0
        %4266 = vmatprep.subr.bf16.mxu0 0
        %4267 = vmatpush1.bf16.xpose.msra.mxu0 0
        %4268 = vmatprep.subr.bf16.mxu0 0
        %4269 = vmatpush1.bf16.xpose.msra.mxu0 0
        %4270 = vmatprep.subr.bf16.mxu0 0
        %4271 = vmatpush1.bf16.xpose.msra.mxu0 0
        %4272 = vmatprep.subr.bf16.mxu0 0
        %4273 = vmatpush1.bf16.xpose.msra.mxu0 0
        %4274 = vmatprep.subr.bf16.mxu0 0
        %4275 = vmatpush1.bf16.xpose.msra.mxu0 0
        %4276 = vmatprep.subr.bf16.mxu0 0
        %4277 = vmatpush1.bf16.xpose.msra.mxu0 0
        %4278 = vmatprep.subr.bf16.mxu0 0
        %4279 = vmatpush1.bf16.xpose.msra.mxu0 0
        %4280 = vmatprep.mubr.bf16.mxu0 0
        %4281 = vmatmul.mubr.bf16.gmra.mrb[0].mxu0 %v4243
        %v4282 = vpop.f32.mrb[0].mxu0
        %v4283 = vadd.f32 0.0, %v4282
        %v4284 = vpop.f32.mrb[0].mxu0
        %v4285 = vpop.f32.mrb[0].mxu0
        %v4286 = vadd.f32 0.0, %v4285
        %v4287 = vpop.f32.mrb[0].mxu0
        %4288 = vdwg.mxu0
        %4289 = vrot.lane.b32.xlu0 %v593, 80
        %v4290 = vpop.permute.xlu0 %4289
        %4291 = vrot.lane.b32.xlu0 %v593, 16
        %v4292 = vpop.permute.xlu0 %4291
        %v4294 = vsel %vm746, %v4290, 0
        %v4297 = vsel %vm746, %v4292, 0
        %4299 = vmatprep.subr.bf16.mxu0 0
        %4300 = vmatpush1.bf16.xpose.msra.mxu0 %v4297
        %4301 = vmatprep.subr.bf16.mxu0 0
        %4302 = vmatpush1.bf16.xpose.msra.mxu0 0
        %4303 = vmatprep.subr.bf16.mxu0 0
        %4304 = vmatpush1.bf16.xpose.msra.mxu0 0
        %4305 = vmatprep.subr.bf16.mxu0 0
        %4306 = vmatpush1.bf16.xpose.msra.mxu0 0
        %4307 = vmatprep.subr.bf16.mxu0 0
        %4308 = vmatpush1.bf16.xpose.msra.mxu0 0
        %4309 = vmatprep.subr.bf16.mxu0 0
        %4310 = vmatpush1.bf16.xpose.msra.mxu0 0
        %4311 = vmatprep.subr.bf16.mxu0 0
        %4312 = vmatpush1.bf16.xpose.msra.mxu0 0
        %4313 = vmatprep.subr.bf16.mxu0 0
        %4314 = vmatpush1.bf16.xpose.msra.mxu0 0
        %4315 = vmatprep.subr.bf16.mxu0 0
        %4316 = vmatpush1.bf16.xpose.msra.mxu0 0
        %4317 = vmatprep.subr.bf16.mxu0 0
        %4318 = vmatpush1.bf16.xpose.msra.mxu0 0
        %4319 = vmatprep.subr.bf16.mxu0 0
        %4320 = vmatpush1.bf16.xpose.msra.mxu0 0
        %4321 = vmatprep.subr.bf16.mxu0 0
        %4322 = vmatpush1.bf16.xpose.msra.mxu0 0
        %4323 = vmatprep.subr.bf16.mxu0 0
        %4324 = vmatpush1.bf16.xpose.msra.mxu0 0
        %4325 = vmatprep.subr.bf16.mxu0 0
        %4326 = vmatpush1.bf16.xpose.msra.mxu0 0
        %4327 = vmatprep.subr.bf16.mxu0 0
        %4328 = vmatpush1.bf16.xpose.msra.mxu0 0
        %4329 = vmatprep.subr.bf16.mxu0 0
        %4330 = vmatpush1.bf16.xpose.msra.mxu0 0
        %4331 = vmatprep.mubr.bf16.mxu0 0
        %4332 = vmatmul.mubr.bf16.gmra.mrb[0].mxu0 %v4294
        %v4333 = vpop.f32.mrb[0].mxu0
        %v4334 = vadd.f32 0.0, %v4333
        %v4335 = vpop.f32.mrb[0].mxu0
        %v4336 = vpop.f32.mrb[0].mxu0
        %v4337 = vadd.f32 0.0, %v4336
        %v4338 = vpop.f32.mrb[0].mxu0
        %4339 = vdwg.mxu0
        %4340 = vrot.lane.b32.xlu0 %v594, 80
        %v4341 = vpop.permute.xlu0 %4340
        %4342 = vrot.lane.b32.xlu0 %v594, 16
        %v4343 = vpop.permute.xlu0 %4342
        %v4345 = vsel %vm746, %v4341, 0
        %v4348 = vsel %vm746, %v4343, 0
        %4350 = vmatprep.subr.bf16.mxu0 0
        %4351 = vmatpush1.bf16.xpose.msra.mxu0 %v4348
        %4352 = vmatprep.subr.bf16.mxu0 0
        %4353 = vmatpush1.bf16.xpose.msra.mxu0 0
        %4354 = vmatprep.subr.bf16.mxu0 0
        %4355 = vmatpush1.bf16.xpose.msra.mxu0 0
        %4356 = vmatprep.subr.bf16.mxu0 0
        %4357 = vmatpush1.bf16.xpose.msra.mxu0 0
        %4358 = vmatprep.subr.bf16.mxu0 0
        %4359 = vmatpush1.bf16.xpose.msra.mxu0 0
        %4360 = vmatprep.subr.bf16.mxu0 0
        %4361 = vmatpush1.bf16.xpose.msra.mxu0 0
        %4362 = vmatprep.subr.bf16.mxu0 0
        %4363 = vmatpush1.bf16.xpose.msra.mxu0 0
        %4364 = vmatprep.subr.bf16.mxu0 0
        %4365 = vmatpush1.bf16.xpose.msra.mxu0 0
        %4366 = vmatprep.subr.bf16.mxu0 0
        %4367 = vmatpush1.bf16.xpose.msra.mxu0 0
        %4368 = vmatprep.subr.bf16.mxu0 0
        %4369 = vmatpush1.bf16.xpose.msra.mxu0 0
        %4370 = vmatprep.subr.bf16.mxu0 0
        %4371 = vmatpush1.bf16.xpose.msra.mxu0 0
        %4372 = vmatprep.subr.bf16.mxu0 0
        %4373 = vmatpush1.bf16.xpose.msra.mxu0 0
        %4374 = vmatprep.subr.bf16.mxu0 0
        %4375 = vmatpush1.bf16.xpose.msra.mxu0 0
        %4376 = vmatprep.subr.bf16.mxu0 0
        %4377 = vmatpush1.bf16.xpose.msra.mxu0 0
        %4378 = vmatprep.subr.bf16.mxu0 0
        %4379 = vmatpush1.bf16.xpose.msra.mxu0 0
        %4380 = vmatprep.subr.bf16.mxu0 0
        %4381 = vmatpush1.bf16.xpose.msra.mxu0 0
        %4382 = vmatprep.mubr.bf16.mxu0 0
        %4383 = vmatmul.mubr.bf16.gmra.mrb[0].mxu0 %v4345
        %v4384 = vpop.f32.mrb[0].mxu0
        %v4385 = vadd.f32 0.0, %v4384
        %v4386 = vpop.f32.mrb[0].mxu0
        %v4387 = vpop.f32.mrb[0].mxu0
        %v4388 = vadd.f32 0.0, %v4387
        %v4389 = vpop.f32.mrb[0].mxu0
        %4390 = vdwg.mxu0
        %4391 = vrot.lane.b32.xlu0 %v595, 80
        %v4392 = vpop.permute.xlu0 %4391
        %4393 = vrot.lane.b32.xlu0 %v595, 16
        %v4394 = vpop.permute.xlu0 %4393
        %v4396 = vsel %vm746, %v4392, 0
        %v4399 = vsel %vm746, %v4394, 0
        %4401 = vmatprep.subr.bf16.mxu0 0
        %4402 = vmatpush1.bf16.xpose.msra.mxu0 %v4399
        %4403 = vmatprep.subr.bf16.mxu0 0
        %4404 = vmatpush1.bf16.xpose.msra.mxu0 0
        %4405 = vmatprep.subr.bf16.mxu0 0
        %4406 = vmatpush1.bf16.xpose.msra.mxu0 0
        %4407 = vmatprep.subr.bf16.mxu0 0
        %4408 = vmatpush1.bf16.xpose.msra.mxu0 0
        %4409 = vmatprep.subr.bf16.mxu0 0
        %4410 = vmatpush1.bf16.xpose.msra.mxu0 0
        %4411 = vmatprep.subr.bf16.mxu0 0
        %4412 = vmatpush1.bf16.xpose.msra.mxu0 0
        %4413 = vmatprep.subr.bf16.mxu0 0
        %4414 = vmatpush1.bf16.xpose.msra.mxu0 0
        %4415 = vmatprep.subr.bf16.mxu0 0
        %4416 = vmatpush1.bf16.xpose.msra.mxu0 0
        %4417 = vmatprep.subr.bf16.mxu0 0
        %4418 = vmatpush1.bf16.xpose.msra.mxu0 0
        %4419 = vmatprep.subr.bf16.mxu0 0
        %4420 = vmatpush1.bf16.xpose.msra.mxu0 0
        %4421 = vmatprep.subr.bf16.mxu0 0
        %4422 = vmatpush1.bf16.xpose.msra.mxu0 0
        %4423 = vmatprep.subr.bf16.mxu0 0
        %4424 = vmatpush1.bf16.xpose.msra.mxu0 0
        %4425 = vmatprep.subr.bf16.mxu0 0
        %4426 = vmatpush1.bf16.xpose.msra.mxu0 0
        %4427 = vmatprep.subr.bf16.mxu0 0
        %4428 = vmatpush1.bf16.xpose.msra.mxu0 0
        %4429 = vmatprep.subr.bf16.mxu0 0
        %4430 = vmatpush1.bf16.xpose.msra.mxu0 0
        %4431 = vmatprep.subr.bf16.mxu0 0
        %4432 = vmatpush1.bf16.xpose.msra.mxu0 0
        %4433 = vmatprep.mubr.bf16.mxu0 0
        %4434 = vmatmul.mubr.bf16.gmra.mrb[0].mxu0 %v4396
        %v4435 = vpop.f32.mrb[0].mxu0
        %v4436 = vadd.f32 0.0, %v4435
        %v4437 = vpop.f32.mrb[0].mxu0
        %v4438 = vpop.f32.mrb[0].mxu0
        %v4439 = vadd.f32 0.0, %v4438
        %v4440 = vpop.f32.mrb[0].mxu0
        %4441 = vdwg.mxu0
        %4442 = vrot.lane.b32.xlu0 %v596, 80
        %v4443 = vpop.permute.xlu0 %4442
        %4444 = vrot.lane.b32.xlu0 %v596, 16
        %v4445 = vpop.permute.xlu0 %4444
        %v4447 = vsel %vm746, %v4443, 0
        %v4450 = vsel %vm746, %v4445, 0
        %4452 = vmatprep.subr.bf16.mxu0 0
        %4453 = vmatpush1.bf16.xpose.msra.mxu0 %v4450
        %4454 = vmatprep.subr.bf16.mxu0 0
        %4455 = vmatpush1.bf16.xpose.msra.mxu0 0
        %4456 = vmatprep.subr.bf16.mxu0 0
        %4457 = vmatpush1.bf16.xpose.msra.mxu0 0
        %4458 = vmatprep.subr.bf16.mxu0 0
        %4459 = vmatpush1.bf16.xpose.msra.mxu0 0
        %4460 = vmatprep.subr.bf16.mxu0 0
        %4461 = vmatpush1.bf16.xpose.msra.mxu0 0
        %4462 = vmatprep.subr.bf16.mxu0 0
        %4463 = vmatpush1.bf16.xpose.msra.mxu0 0
        %4464 = vmatprep.subr.bf16.mxu0 0
        %4465 = vmatpush1.bf16.xpose.msra.mxu0 0
        %4466 = vmatprep.subr.bf16.mxu0 0
        %4467 = vmatpush1.bf16.xpose.msra.mxu0 0
        %4468 = vmatprep.subr.bf16.mxu0 0
        %4469 = vmatpush1.bf16.xpose.msra.mxu0 0
        %4470 = vmatprep.subr.bf16.mxu0 0
        %4471 = vmatpush1.bf16.xpose.msra.mxu0 0
        %4472 = vmatprep.subr.bf16.mxu0 0
        %4473 = vmatpush1.bf16.xpose.msra.mxu0 0
        %4474 = vmatprep.subr.bf16.mxu0 0
        %4475 = vmatpush1.bf16.xpose.msra.mxu0 0
        %4476 = vmatprep.subr.bf16.mxu0 0
        %4477 = vmatpush1.bf16.xpose.msra.mxu0 0
        %4478 = vmatprep.subr.bf16.mxu0 0
        %4479 = vmatpush1.bf16.xpose.msra.mxu0 0
        %4480 = vmatprep.subr.bf16.mxu0 0
        %4481 = vmatpush1.bf16.xpose.msra.mxu0 0
        %4482 = vmatprep.subr.bf16.mxu0 0
        %4483 = vmatpush1.bf16.xpose.msra.mxu0 0
        %4484 = vmatprep.mubr.bf16.mxu0 0
        %4485 = vmatmul.mubr.bf16.gmra.mrb[0].mxu0 %v4447
        %v4486 = vpop.f32.mrb[0].mxu0
        %v4487 = vadd.f32 0.0, %v4486
        %v4488 = vpop.f32.mrb[0].mxu0
        %v4489 = vpop.f32.mrb[0].mxu0
        %v4490 = vadd.f32 0.0, %v4489
        %v4491 = vpop.f32.mrb[0].mxu0
        %4492 = vdwg.mxu0
        %4493 = vrot.lane.b32.xlu0 %v597, 80
        %v4494 = vpop.permute.xlu0 %4493
        %4495 = vrot.lane.b32.xlu0 %v597, 16
        %v4496 = vpop.permute.xlu0 %4495
        %v4498 = vsel %vm746, %v4494, 0
        %v4501 = vsel %vm746, %v4496, 0
        %4503 = vmatprep.subr.bf16.mxu0 0
        %4504 = vmatpush1.bf16.xpose.msra.mxu0 %v4501
        %4505 = vmatprep.subr.bf16.mxu0 0
        %4506 = vmatpush1.bf16.xpose.msra.mxu0 0
        %4507 = vmatprep.subr.bf16.mxu0 0
        %4508 = vmatpush1.bf16.xpose.msra.mxu0 0
        %4509 = vmatprep.subr.bf16.mxu0 0
        %4510 = vmatpush1.bf16.xpose.msra.mxu0 0
        %4511 = vmatprep.subr.bf16.mxu0 0
        %4512 = vmatpush1.bf16.xpose.msra.mxu0 0
        %4513 = vmatprep.subr.bf16.mxu0 0
        %4514 = vmatpush1.bf16.xpose.msra.mxu0 0
        %4515 = vmatprep.subr.bf16.mxu0 0
        %4516 = vmatpush1.bf16.xpose.msra.mxu0 0
        %4517 = vmatprep.subr.bf16.mxu0 0
        %4518 = vmatpush1.bf16.xpose.msra.mxu0 0
        %4519 = vmatprep.subr.bf16.mxu0 0
        %4520 = vmatpush1.bf16.xpose.msra.mxu0 0
        %4521 = vmatprep.subr.bf16.mxu0 0
        %4522 = vmatpush1.bf16.xpose.msra.mxu0 0
        %4523 = vmatprep.subr.bf16.mxu0 0
        %4524 = vmatpush1.bf16.xpose.msra.mxu0 0
        %4525 = vmatprep.subr.bf16.mxu0 0
        %4526 = vmatpush1.bf16.xpose.msra.mxu0 0
        %4527 = vmatprep.subr.bf16.mxu0 0
        %4528 = vmatpush1.bf16.xpose.msra.mxu0 0
        %4529 = vmatprep.subr.bf16.mxu0 0
        %4530 = vmatpush1.bf16.xpose.msra.mxu0 0
        %4531 = vmatprep.subr.bf16.mxu0 0
        %4532 = vmatpush1.bf16.xpose.msra.mxu0 0
        %4533 = vmatprep.subr.bf16.mxu0 0
        %4534 = vmatpush1.bf16.xpose.msra.mxu0 0
        %4535 = vmatprep.mubr.bf16.mxu0 0
        %4536 = vmatmul.mubr.bf16.gmra.mrb[0].mxu0 %v4498
        %v4537 = vpop.f32.mrb[0].mxu0
        %v4538 = vadd.f32 0.0, %v4537
        %v4539 = vpop.f32.mrb[0].mxu0
        %v4540 = vpop.f32.mrb[0].mxu0
        %v4541 = vadd.f32 0.0, %v4540
        %v4542 = vpop.f32.mrb[0].mxu0
        %4543 = vdwg.mxu0
        %v4544 = vmul.f32 %v4181, 0.25
        %v4545 = vmul.f32 %v4184, 0.25
        %v4546 = vmul.f32 %v4232, 0.25
        %v4547 = vmul.f32 %v4235, 0.25
        %v4548 = vmul.f32 %v4283, 0.25
        %v4549 = vmul.f32 %v4286, 0.25
        %v4550 = vmul.f32 %v4334, 0.25
        %v4551 = vmul.f32 %v4337, 0.25
        %v4552 = vmul.f32 %v4385, 0.25
        %v4553 = vmul.f32 %v4388, 0.25
        %v4554 = vmul.f32 %v4436, 0.25
        %v4555 = vmul.f32 %v4439, 0.25
        %v4556 = vmul.f32 %v4487, 0.25
        %v4557 = vmul.f32 %v4490, 0.25
        %v4558 = vmul.f32 %v4538, 0.25
        %v4559 = vmul.f32 %v4541, 0.25
        %v4560 = vadd.f32 %v4544, %v1163
        %v4561 = vadd.f32 %v4545, %v1163
        %v4562 = vadd.f32 %v4546, %v1167
        %v4563 = vadd.f32 %v4547, %v1167
        %v4564 = vadd.f32 %v4548, %v1171
        %v4565 = vadd.f32 %v4549, %v1171
        %v4566 = vadd.f32 %v4550, %v1175
        %v4567 = vadd.f32 %v4551, %v1175
        %v4568 = vadd.f32 %v4552, %v1179
        %v4569 = vadd.f32 %v4553, %v1179
        %v4570 = vadd.f32 %v4554, %v1183
        %v4571 = vadd.f32 %v4555, %v1183
        %v4572 = vadd.f32 %v4556, %v1187
        %v4573 = vadd.f32 %v4557, %v1187
        %v4574 = vadd.f32 %v4558, %v1191
        %v4575 = vadd.f32 %v4559, %v1191
        %s4576 = scalar_lea.vmem %s369, 24
        %v4577 = vld [vmem:[%s4576] sm:$0xf]
        %v4578 = vld [vmem:[%s4576 + $0x4] sm:$0xf]
        %v4579 = vunpack.c.l.bf16 %v4577
        %v4580 = vunpack.c.l.bf16 %v4578
        %v4581 = vadd.f32 %v4560, %v4579
        %v4582 = vadd.f32 %v4561, %v4580
        %v4583 = vadd.f32 %v4562, %v4579
        %v4584 = vadd.f32 %v4563, %v4580
        %v4585 = vadd.f32 %v4564, %v4579
        %v4586 = vadd.f32 %v4565, %v4580
        %v4587 = vadd.f32 %v4566, %v4579
        %v4588 = vadd.f32 %v4567, %v4580
        %v4589 = vadd.f32 %v4568, %v4579
        %v4590 = vadd.f32 %v4569, %v4580
        %v4591 = vadd.f32 %v4570, %v4579
        %v4592 = vadd.f32 %v4571, %v4580
        %v4593 = vadd.f32 %v4572, %v4579
        %v4594 = vadd.f32 %v4573, %v4580
        %v4595 = vadd.f32 %v4574, %v4579
        %v4596 = vadd.f32 %v4575, %v4580
        %v4597 = vsel %vm746, %v4581, -inf
        %4598 = vmax.xlane.f32.xlu0 %v4597
        %v4599 = vpop.xlane.xlu0 %4598
        %v4600 = vsel %vm746, %v4582, -inf
        %4601 = vmax.xlane.f32.xlu0 %v4600
        %v4602 = vpop.xlane.xlu0 %4601
        %v4603 = vsel %vm746, %v4583, -inf
        %4604 = vmax.xlane.f32.xlu0 %v4603
        %v4605 = vpop.xlane.xlu0 %4604
        %v4606 = vsel %vm746, %v4584, -inf
        %4607 = vmax.xlane.f32.xlu0 %v4606
        %v4608 = vpop.xlane.xlu0 %4607
        %v4609 = vsel %vm746, %v4585, -inf
        %4610 = vmax.xlane.f32.xlu0 %v4609
        %v4611 = vpop.xlane.xlu0 %4610
        %v4612 = vsel %vm746, %v4586, -inf
        %4613 = vmax.xlane.f32.xlu0 %v4612
        %v4614 = vpop.xlane.xlu0 %4613
        %v4615 = vsel %vm746, %v4587, -inf
        %4616 = vmax.xlane.f32.xlu0 %v4615
        %v4617 = vpop.xlane.xlu0 %4616
        %v4618 = vsel %vm746, %v4588, -inf
        %4619 = vmax.xlane.f32.xlu0 %v4618
        %v4620 = vpop.xlane.xlu0 %4619
        %v4621 = vsel %vm746, %v4589, -inf
        %4622 = vmax.xlane.f32.xlu0 %v4621
        %v4623 = vpop.xlane.xlu0 %4622
        %v4624 = vsel %vm746, %v4590, -inf
        %4625 = vmax.xlane.f32.xlu0 %v4624
        %v4626 = vpop.xlane.xlu0 %4625
        %v4627 = vsel %vm746, %v4591, -inf
        %4628 = vmax.xlane.f32.xlu0 %v4627
        %v4629 = vpop.xlane.xlu0 %4628
        %v4630 = vsel %vm746, %v4592, -inf
        %4631 = vmax.xlane.f32.xlu0 %v4630
        %v4632 = vpop.xlane.xlu0 %4631
        %v4633 = vsel %vm746, %v4593, -inf
        %4634 = vmax.xlane.f32.xlu0 %v4633
        %v4635 = vpop.xlane.xlu0 %4634
        %v4636 = vsel %vm746, %v4594, -inf
        %4637 = vmax.xlane.f32.xlu0 %v4636
        %v4638 = vpop.xlane.xlu0 %4637
        %v4639 = vsel %vm746, %v4595, -inf
        %4640 = vmax.xlane.f32.xlu0 %v4639
        %v4641 = vpop.xlane.xlu0 %4640
        %v4642 = vsel %vm746, %v4596, -inf
        %4643 = vmax.xlane.f32.xlu0 %v4642
        %v4644 = vpop.xlane.xlu0 %4643
        %v4645 = vsub.f32 %v4581, %v4599
        %v4646 = vsub.f32 %v4582, %v4602
        %v4647 = vsub.f32 %v4583, %v4605
        %v4648 = vsub.f32 %v4584, %v4608
        %v4649 = vsub.f32 %v4585, %v4611
        %v4650 = vsub.f32 %v4586, %v4614
        %v4651 = vsub.f32 %v4587, %v4617
        %v4652 = vsub.f32 %v4588, %v4620
        %v4653 = vsub.f32 %v4589, %v4623
        %v4654 = vsub.f32 %v4590, %v4626
        %v4655 = vsub.f32 %v4591, %v4629
        %v4656 = vsub.f32 %v4592, %v4632
        %v4657 = vsub.f32 %v4593, %v4635
        %v4658 = vsub.f32 %v4594, %v4638
        %v4659 = vsub.f32 %v4595, %v4641
        %v4660 = vsub.f32 %v4596, %v4644
        %v4661 = vmul.f32 %v4645, 1.442695
        %v4662 = vpow.pop %v4661
        %v4663 = vmul.f32 %v4646, 1.442695
        %v4664 = vpow.pop %v4663
        %v4665 = vmul.f32 %v4647, 1.442695
        %v4666 = vpow.pop %v4665
        %v4667 = vmul.f32 %v4648, 1.442695
        %v4668 = vpow.pop %v4667
        %v4669 = vmul.f32 %v4649, 1.442695
        %v4670 = vpow.pop %v4669
        %v4671 = vmul.f32 %v4650, 1.442695
        %v4672 = vpow.pop %v4671
        %v4673 = vmul.f32 %v4651, 1.442695
        %v4674 = vpow.pop %v4673
        %v4675 = vmul.f32 %v4652, 1.442695
        %v4676 = vpow.pop %v4675
        %v4677 = vmul.f32 %v4653, 1.442695
        %v4678 = vpow.pop %v4677
        %v4679 = vmul.f32 %v4654, 1.442695
        %v4680 = vpow.pop %v4679
        %v4681 = vmul.f32 %v4655, 1.442695
        %v4682 = vpow.pop %v4681
        %v4683 = vmul.f32 %v4656, 1.442695
        %v4684 = vpow.pop %v4683
        %v4685 = vmul.f32 %v4657, 1.442695
        %v4686 = vpow.pop %v4685
        %v4687 = vmul.f32 %v4658, 1.442695
        %v4688 = vpow.pop %v4687
        %v4689 = vmul.f32 %v4659, 1.442695
        %v4690 = vpow.pop %v4689
        %v4691 = vmul.f32 %v4660, 1.442695
        %v4692 = vpow.pop %v4691
        %v4693 = vsel %vm746, %v4662, 0.0
        %4694 = vadd.xlane.f32.xlu0 %v4693
        %v4695 = vpop.xlane.xlu0 %4694
        %v4696 = vsel %vm746, %v4664, 0.0
        %4697 = vadd.xlane.f32.xlu0 %v4696
        %v4698 = vpop.xlane.xlu0 %4697
        %v4699 = vsel %vm746, %v4666, 0.0
        %4700 = vadd.xlane.f32.xlu0 %v4699
        %v4701 = vpop.xlane.xlu0 %4700
        %v4702 = vsel %vm746, %v4668, 0.0
        %4703 = vadd.xlane.f32.xlu0 %v4702
        %v4704 = vpop.xlane.xlu0 %4703
        %v4705 = vsel %vm746, %v4670, 0.0
        %4706 = vadd.xlane.f32.xlu0 %v4705
        %v4707 = vpop.xlane.xlu0 %4706
        %v4708 = vsel %vm746, %v4672, 0.0
        %4709 = vadd.xlane.f32.xlu0 %v4708
        %v4710 = vpop.xlane.xlu0 %4709
        %v4711 = vsel %vm746, %v4674, 0.0
        %4712 = vadd.xlane.f32.xlu0 %v4711
        %v4713 = vpop.xlane.xlu0 %4712
        %v4714 = vsel %vm746, %v4676, 0.0
        %4715 = vadd.xlane.f32.xlu0 %v4714
        %v4716 = vpop.xlane.xlu0 %4715
        %v4717 = vsel %vm746, %v4678, 0.0
        %4718 = vadd.xlane.f32.xlu0 %v4717
        %v4719 = vpop.xlane.xlu0 %4718
        %v4720 = vsel %vm746, %v4680, 0.0
        %4721 = vadd.xlane.f32.xlu0 %v4720
        %v4722 = vpop.xlane.xlu0 %4721
        %v4723 = vsel %vm746, %v4682, 0.0
        %4724 = vadd.xlane.f32.xlu0 %v4723
        %v4725 = vpop.xlane.xlu0 %4724
        %v4726 = vsel %vm746, %v4684, 0.0
        %4727 = vadd.xlane.f32.xlu0 %v4726
        %v4728 = vpop.xlane.xlu0 %4727
        %v4729 = vsel %vm746, %v4686, 0.0
        %4730 = vadd.xlane.f32.xlu0 %v4729
        %v4731 = vpop.xlane.xlu0 %4730
        %v4732 = vsel %vm746, %v4688, 0.0
        %4733 = vadd.xlane.f32.xlu0 %v4732
        %v4734 = vpop.xlane.xlu0 %4733
        %v4735 = vsel %vm746, %v4690, 0.0
        %4736 = vadd.xlane.f32.xlu0 %v4735
        %v4737 = vpop.xlane.xlu0 %4736
        %v4738 = vsel %vm746, %v4692, 0.0
        %4739 = vadd.xlane.f32.xlu0 %v4738
        %v4740 = vpop.xlane.xlu0 %4739
        %v4741 = vrcp.pop %v4695
        %v4742 = vrcp.pop %v4698
        %v4743 = vrcp.pop %v4701
        %v4744 = vrcp.pop %v4704
        %v4745 = vrcp.pop %v4707
        %v4746 = vrcp.pop %v4710
        %v4747 = vrcp.pop %v4713
        %v4748 = vrcp.pop %v4716
        %v4749 = vrcp.pop %v4719
        %v4750 = vrcp.pop %v4722
        %v4751 = vrcp.pop %v4725
        %v4752 = vrcp.pop %v4728
        %v4753 = vrcp.pop %v4731
        %v4754 = vrcp.pop %v4734
        %v4755 = vrcp.pop %v4737
        %v4756 = vrcp.pop %v4740
        %v4757 = vmul.f32 %v4662, %v4741
        %v4758 = vmul.f32 %v4664, %v4742
        %v4759 = vmul.f32 %v4666, %v4743
        %v4760 = vmul.f32 %v4668, %v4744
        %v4761 = vmul.f32 %v4670, %v4745
        %v4762 = vmul.f32 %v4672, %v4746
        %v4763 = vmul.f32 %v4674, %v4747
        %v4764 = vmul.f32 %v4676, %v4748
        %v4765 = vmul.f32 %v4678, %v4749
        %v4766 = vmul.f32 %v4680, %v4750
        %v4767 = vmul.f32 %v4682, %v4751
        %v4768 = vmul.f32 %v4684, %v4752
        %v4769 = vmul.f32 %v4686, %v4753
        %v4770 = vmul.f32 %v4688, %v4754
        %v4771 = vmul.f32 %v4690, %v4755
        %v4772 = vmul.f32 %v4692, %v4756
        %v4773 = vpack.c.bf16 %v4758, %v4757
        %v4774 = vpack.c.bf16 %v4760, %v4759
        %v4775 = vpack.c.bf16 %v4762, %v4761
        %v4776 = vpack.c.bf16 %v4764, %v4763
        %v4777 = vpack.c.bf16 %v4766, %v4765
        %v4778 = vpack.c.bf16 %v4768, %v4767
        %v4779 = vpack.c.bf16 %v4770, %v4769
        %v4780 = vpack.c.bf16 %v4772, %v4771
        %4781 = vrot.lane.b32.xlu0 %v598, 80
        %v4782 = vpop.permute.xlu0 %4781
        %v4785 = vsel %vm746, %v4773, 0
        %4787 = vmatprep.subr.bf16.mxu0 0
        %4788 = vmatpush1.bf16.msra.mxu0 %v4782
        %4789 = vmatprep.subr.bf16.mxu0 0
        %4790 = vmatpush1.bf16.msra.mxu0 0
        %4791 = vmatprep.subr.bf16.mxu0 0
        %4792 = vmatpush1.bf16.msra.mxu0 0
        %4793 = vmatprep.subr.bf16.mxu0 0
        %4794 = vmatpush1.bf16.msra.mxu0 0
        %4795 = vmatprep.subr.bf16.mxu0 0
        %4796 = vmatpush1.bf16.msra.mxu0 0
        %4797 = vmatprep.subr.bf16.mxu0 0
        %4798 = vmatpush1.bf16.msra.mxu0 0
        %4799 = vmatprep.subr.bf16.mxu0 0
        %4800 = vmatpush1.bf16.msra.mxu0 0
        %4801 = vmatprep.subr.bf16.mxu0 0
        %4802 = vmatpush1.bf16.msra.mxu0 0
        %4803 = vmatprep.subr.bf16.mxu0 0
        %4804 = vmatpush1.bf16.msra.mxu0 0
        %4805 = vmatprep.subr.bf16.mxu0 0
        %4806 = vmatpush1.bf16.msra.mxu0 0
        %4807 = vmatprep.subr.bf16.mxu0 0
        %4808 = vmatpush1.bf16.msra.mxu0 0
        %4809 = vmatprep.subr.bf16.mxu0 0
        %4810 = vmatpush1.bf16.msra.mxu0 0
        %4811 = vmatprep.subr.bf16.mxu0 0
        %4812 = vmatpush1.bf16.msra.mxu0 0
        %4813 = vmatprep.subr.bf16.mxu0 0
        %4814 = vmatpush1.bf16.msra.mxu0 0
        %4815 = vmatprep.subr.bf16.mxu0 0
        %4816 = vmatpush1.bf16.msra.mxu0 0
        %4817 = vmatprep.subr.bf16.mxu0 0
        %4818 = vmatpush1.bf16.msra.mxu0 0
        %4819 = vmatprep.mubr.bf16.mxu0 0
        %4820 = vmatmul.mubr.bf16.gmra.mrb[0].mxu0 %v4785
        %v4821 = vpop.f32.mrb[0].mxu0
        %v4822 = vadd.f32 0.0, %v4821
        %v4823 = vpop.f32.mrb[0].mxu0
        %v4824 = vpop.f32.mrb[0].mxu0
        %v4825 = vadd.f32 0.0, %v4824
        %v4826 = vpop.f32.mrb[0].mxu0
        %4827 = vdwg.mxu0
        %4828 = vrot.lane.b32.xlu0 %v599, 80
        %v4829 = vpop.permute.xlu0 %4828
        %v4832 = vsel %vm746, %v4774, 0
        %4834 = vmatprep.subr.bf16.mxu0 0
        %4835 = vmatpush1.bf16.msra.mxu0 %v4829
        %4836 = vmatprep.subr.bf16.mxu0 0
        %4837 = vmatpush1.bf16.msra.mxu0 0
        %4838 = vmatprep.subr.bf16.mxu0 0
        %4839 = vmatpush1.bf16.msra.mxu0 0
        %4840 = vmatprep.subr.bf16.mxu0 0
        %4841 = vmatpush1.bf16.msra.mxu0 0
        %4842 = vmatprep.subr.bf16.mxu0 0
        %4843 = vmatpush1.bf16.msra.mxu0 0
        %4844 = vmatprep.subr.bf16.mxu0 0
        %4845 = vmatpush1.bf16.msra.mxu0 0
        %4846 = vmatprep.subr.bf16.mxu0 0
        %4847 = vmatpush1.bf16.msra.mxu0 0
        %4848 = vmatprep.subr.bf16.mxu0 0
        %4849 = vmatpush1.bf16.msra.mxu0 0
        %4850 = vmatprep.subr.bf16.mxu0 0
        %4851 = vmatpush1.bf16.msra.mxu0 0
        %4852 = vmatprep.subr.bf16.mxu0 0
        %4853 = vmatpush1.bf16.msra.mxu0 0
        %4854 = vmatprep.subr.bf16.mxu0 0
        %4855 = vmatpush1.bf16.msra.mxu0 0
        %4856 = vmatprep.subr.bf16.mxu0 0
        %4857 = vmatpush1.bf16.msra.mxu0 0
        %4858 = vmatprep.subr.bf16.mxu0 0
        %4859 = vmatpush1.bf16.msra.mxu0 0
        %4860 = vmatprep.subr.bf16.mxu0 0
        %4861 = vmatpush1.bf16.msra.mxu0 0
        %4862 = vmatprep.subr.bf16.mxu0 0
        %4863 = vmatpush1.bf16.msra.mxu0 0
        %4864 = vmatprep.subr.bf16.mxu0 0
        %4865 = vmatpush1.bf16.msra.mxu0 0
        %4866 = vmatprep.mubr.bf16.mxu0 0
        %4867 = vmatmul.mubr.bf16.gmra.mrb[0].mxu0 %v4832
        %v4868 = vpop.f32.mrb[0].mxu0
        %v4869 = vadd.f32 0.0, %v4868
        %v4870 = vpop.f32.mrb[0].mxu0
        %v4871 = vpop.f32.mrb[0].mxu0
        %v4872 = vadd.f32 0.0, %v4871
        %v4873 = vpop.f32.mrb[0].mxu0
        %4874 = vdwg.mxu0
        %4875 = vrot.lane.b32.xlu0 %v600, 80
        %v4876 = vpop.permute.xlu0 %4875
        %v4879 = vsel %vm746, %v4775, 0
        %4881 = vmatprep.subr.bf16.mxu0 0
        %4882 = vmatpush1.bf16.msra.mxu0 %v4876
        %4883 = vmatprep.subr.bf16.mxu0 0
        %4884 = vmatpush1.bf16.msra.mxu0 0
        %4885 = vmatprep.subr.bf16.mxu0 0
        %4886 = vmatpush1.bf16.msra.mxu0 0
        %4887 = vmatprep.subr.bf16.mxu0 0
        %4888 = vmatpush1.bf16.msra.mxu0 0
        %4889 = vmatprep.subr.bf16.mxu0 0
        %4890 = vmatpush1.bf16.msra.mxu0 0
        %4891 = vmatprep.subr.bf16.mxu0 0
        %4892 = vmatpush1.bf16.msra.mxu0 0
        %4893 = vmatprep.subr.bf16.mxu0 0
        %4894 = vmatpush1.bf16.msra.mxu0 0
        %4895 = vmatprep.subr.bf16.mxu0 0
        %4896 = vmatpush1.bf16.msra.mxu0 0
        %4897 = vmatprep.subr.bf16.mxu0 0
        %4898 = vmatpush1.bf16.msra.mxu0 0
        %4899 = vmatprep.subr.bf16.mxu0 0
        %4900 = vmatpush1.bf16.msra.mxu0 0
        %4901 = vmatprep.subr.bf16.mxu0 0
        %4902 = vmatpush1.bf16.msra.mxu0 0
        %4903 = vmatprep.subr.bf16.mxu0 0
        %4904 = vmatpush1.bf16.msra.mxu0 0
        %4905 = vmatprep.subr.bf16.mxu0 0
        %4906 = vmatpush1.bf16.msra.mxu0 0
        %4907 = vmatprep.subr.bf16.mxu0 0
        %4908 = vmatpush1.bf16.msra.mxu0 0
        %4909 = vmatprep.subr.bf16.mxu0 0
        %4910 = vmatpush1.bf16.msra.mxu0 0
        %4911 = vmatprep.subr.bf16.mxu0 0
        %4912 = vmatpush1.bf16.msra.mxu0 0
        %4913 = vmatprep.mubr.bf16.mxu0 0
        %4914 = vmatmul.mubr.bf16.gmra.mrb[0].mxu0 %v4879
        %v4915 = vpop.f32.mrb[0].mxu0
        %v4916 = vadd.f32 0.0, %v4915
        %v4917 = vpop.f32.mrb[0].mxu0
        %v4918 = vpop.f32.mrb[0].mxu0
        %v4919 = vadd.f32 0.0, %v4918
        %v4920 = vpop.f32.mrb[0].mxu0
        %4921 = vdwg.mxu0
        %4922 = vrot.lane.b32.xlu0 %v601, 80
        %v4923 = vpop.permute.xlu0 %4922
        %v4926 = vsel %vm746, %v4776, 0
        %4928 = vmatprep.subr.bf16.mxu0 0
        %4929 = vmatpush1.bf16.msra.mxu0 %v4923
        %4930 = vmatprep.subr.bf16.mxu0 0
        %4931 = vmatpush1.bf16.msra.mxu0 0
        %4932 = vmatprep.subr.bf16.mxu0 0
        %4933 = vmatpush1.bf16.msra.mxu0 0
        %4934 = vmatprep.subr.bf16.mxu0 0
        %4935 = vmatpush1.bf16.msra.mxu0 0
        %4936 = vmatprep.subr.bf16.mxu0 0
        %4937 = vmatpush1.bf16.msra.mxu0 0
        %4938 = vmatprep.subr.bf16.mxu0 0
        %4939 = vmatpush1.bf16.msra.mxu0 0
        %4940 = vmatprep.subr.bf16.mxu0 0
        %4941 = vmatpush1.bf16.msra.mxu0 0
        %4942 = vmatprep.subr.bf16.mxu0 0
        %4943 = vmatpush1.bf16.msra.mxu0 0
        %4944 = vmatprep.subr.bf16.mxu0 0
        %4945 = vmatpush1.bf16.msra.mxu0 0
        %4946 = vmatprep.subr.bf16.mxu0 0
        %4947 = vmatpush1.bf16.msra.mxu0 0
        %4948 = vmatprep.subr.bf16.mxu0 0
        %4949 = vmatpush1.bf16.msra.mxu0 0
        %4950 = vmatprep.subr.bf16.mxu0 0
        %4951 = vmatpush1.bf16.msra.mxu0 0
        %4952 = vmatprep.subr.bf16.mxu0 0
        %4953 = vmatpush1.bf16.msra.mxu0 0
        %4954 = vmatprep.subr.bf16.mxu0 0
        %4955 = vmatpush1.bf16.msra.mxu0 0
        %4956 = vmatprep.subr.bf16.mxu0 0
        %4957 = vmatpush1.bf16.msra.mxu0 0
        %4958 = vmatprep.subr.bf16.mxu0 0
        %4959 = vmatpush1.bf16.msra.mxu0 0
        %4960 = vmatprep.mubr.bf16.mxu0 0
        %4961 = vmatmul.mubr.bf16.gmra.mrb[0].mxu0 %v4926
        %v4962 = vpop.f32.mrb[0].mxu0
        %v4963 = vadd.f32 0.0, %v4962
        %v4964 = vpop.f32.mrb[0].mxu0
        %v4965 = vpop.f32.mrb[0].mxu0
        %v4966 = vadd.f32 0.0, %v4965
        %v4967 = vpop.f32.mrb[0].mxu0
        %4968 = vdwg.mxu0
        %4969 = vrot.lane.b32.xlu0 %v602, 80
        %v4970 = vpop.permute.xlu0 %4969
        %v4973 = vsel %vm746, %v4777, 0
        %4975 = vmatprep.subr.bf16.mxu0 0
        %4976 = vmatpush1.bf16.msra.mxu0 %v4970
        %4977 = vmatprep.subr.bf16.mxu0 0
        %4978 = vmatpush1.bf16.msra.mxu0 0
        %4979 = vmatprep.subr.bf16.mxu0 0
        %4980 = vmatpush1.bf16.msra.mxu0 0
        %4981 = vmatprep.subr.bf16.mxu0 0
        %4982 = vmatpush1.bf16.msra.mxu0 0
        %4983 = vmatprep.subr.bf16.mxu0 0
        %4984 = vmatpush1.bf16.msra.mxu0 0
        %4985 = vmatprep.subr.bf16.mxu0 0
        %4986 = vmatpush1.bf16.msra.mxu0 0
        %4987 = vmatprep.subr.bf16.mxu0 0
        %4988 = vmatpush1.bf16.msra.mxu0 0
        %4989 = vmatprep.subr.bf16.mxu0 0
        %4990 = vmatpush1.bf16.msra.mxu0 0
        %4991 = vmatprep.subr.bf16.mxu0 0
        %4992 = vmatpush1.bf16.msra.mxu0 0
        %4993 = vmatprep.subr.bf16.mxu0 0
        %4994 = vmatpush1.bf16.msra.mxu0 0
        %4995 = vmatprep.subr.bf16.mxu0 0
        %4996 = vmatpush1.bf16.msra.mxu0 0
        %4997 = vmatprep.subr.bf16.mxu0 0
        %4998 = vmatpush1.bf16.msra.mxu0 0
        %4999 = vmatprep.subr.bf16.mxu0 0
        %5000 = vmatpush1.bf16.msra.mxu0 0
        %5001 = vmatprep.subr.bf16.mxu0 0
        %5002 = vmatpush1.bf16.msra.mxu0 0
        %5003 = vmatprep.subr.bf16.mxu0 0
        %5004 = vmatpush1.bf16.msra.mxu0 0
        %5005 = vmatprep.subr.bf16.mxu0 0
        %5006 = vmatpush1.bf16.msra.mxu0 0
        %5007 = vmatprep.mubr.bf16.mxu0 0
        %5008 = vmatmul.mubr.bf16.gmra.mrb[0].mxu0 %v4973
        %v5009 = vpop.f32.mrb[0].mxu0
        %v5010 = vadd.f32 0.0, %v5009
        %v5011 = vpop.f32.mrb[0].mxu0
        %v5012 = vpop.f32.mrb[0].mxu0
        %v5013 = vadd.f32 0.0, %v5012
        %v5014 = vpop.f32.mrb[0].mxu0
        %5015 = vdwg.mxu0
        %5016 = vrot.lane.b32.xlu0 %v603, 80
        %v5017 = vpop.permute.xlu0 %5016
        %v5020 = vsel %vm746, %v4778, 0
        %5022 = vmatprep.subr.bf16.mxu0 0
        %5023 = vmatpush1.bf16.msra.mxu0 %v5017
        %5024 = vmatprep.subr.bf16.mxu0 0
        %5025 = vmatpush1.bf16.msra.mxu0 0
        %5026 = vmatprep.subr.bf16.mxu0 0
        %5027 = vmatpush1.bf16.msra.mxu0 0
        %5028 = vmatprep.subr.bf16.mxu0 0
        %5029 = vmatpush1.bf16.msra.mxu0 0
        %5030 = vmatprep.subr.bf16.mxu0 0
        %5031 = vmatpush1.bf16.msra.mxu0 0
        %5032 = vmatprep.subr.bf16.mxu0 0
        %5033 = vmatpush1.bf16.msra.mxu0 0
        %5034 = vmatprep.subr.bf16.mxu0 0
        %5035 = vmatpush1.bf16.msra.mxu0 0
        %5036 = vmatprep.subr.bf16.mxu0 0
        %5037 = vmatpush1.bf16.msra.mxu0 0
        %5038 = vmatprep.subr.bf16.mxu0 0
        %5039 = vmatpush1.bf16.msra.mxu0 0
        %5040 = vmatprep.subr.bf16.mxu0 0
        %5041 = vmatpush1.bf16.msra.mxu0 0
        %5042 = vmatprep.subr.bf16.mxu0 0
        %5043 = vmatpush1.bf16.msra.mxu0 0
        %5044 = vmatprep.subr.bf16.mxu0 0
        %5045 = vmatpush1.bf16.msra.mxu0 0
        %5046 = vmatprep.subr.bf16.mxu0 0
        %5047 = vmatpush1.bf16.msra.mxu0 0
        %5048 = vmatprep.subr.bf16.mxu0 0
        %5049 = vmatpush1.bf16.msra.mxu0 0
        %5050 = vmatprep.subr.bf16.mxu0 0
        %5051 = vmatpush1.bf16.msra.mxu0 0
        %5052 = vmatprep.subr.bf16.mxu0 0
        %5053 = vmatpush1.bf16.msra.mxu0 0
        %5054 = vmatprep.mubr.bf16.mxu0 0
        %5055 = vmatmul.mubr.bf16.gmra.mrb[0].mxu0 %v5020
        %v5056 = vpop.f32.mrb[0].mxu0
        %v5057 = vadd.f32 0.0, %v5056
        %v5058 = vpop.f32.mrb[0].mxu0
        %v5059 = vpop.f32.mrb[0].mxu0
        %v5060 = vadd.f32 0.0, %v5059
        %v5061 = vpop.f32.mrb[0].mxu0
        %5062 = vdwg.mxu0
        %5063 = vrot.lane.b32.xlu0 %v604, 80
        %v5064 = vpop.permute.xlu0 %5063
        %v5067 = vsel %vm746, %v4779, 0
        %5069 = vmatprep.subr.bf16.mxu0 0
        %5070 = vmatpush1.bf16.msra.mxu0 %v5064
        %5071 = vmatprep.subr.bf16.mxu0 0
        %5072 = vmatpush1.bf16.msra.mxu0 0
        %5073 = vmatprep.subr.bf16.mxu0 0
        %5074 = vmatpush1.bf16.msra.mxu0 0
        %5075 = vmatprep.subr.bf16.mxu0 0
        %5076 = vmatpush1.bf16.msra.mxu0 0
        %5077 = vmatprep.subr.bf16.mxu0 0
        %5078 = vmatpush1.bf16.msra.mxu0 0
        %5079 = vmatprep.subr.bf16.mxu0 0
        %5080 = vmatpush1.bf16.msra.mxu0 0
        %5081 = vmatprep.subr.bf16.mxu0 0
        %5082 = vmatpush1.bf16.msra.mxu0 0
        %5083 = vmatprep.subr.bf16.mxu0 0
        %5084 = vmatpush1.bf16.msra.mxu0 0
        %5085 = vmatprep.subr.bf16.mxu0 0
        %5086 = vmatpush1.bf16.msra.mxu0 0
        %5087 = vmatprep.subr.bf16.mxu0 0
        %5088 = vmatpush1.bf16.msra.mxu0 0
        %5089 = vmatprep.subr.bf16.mxu0 0
        %5090 = vmatpush1.bf16.msra.mxu0 0
        %5091 = vmatprep.subr.bf16.mxu0 0
        %5092 = vmatpush1.bf16.msra.mxu0 0
        %5093 = vmatprep.subr.bf16.mxu0 0
        %5094 = vmatpush1.bf16.msra.mxu0 0
        %5095 = vmatprep.subr.bf16.mxu0 0
        %5096 = vmatpush1.bf16.msra.mxu0 0
        %5097 = vmatprep.subr.bf16.mxu0 0
        %5098 = vmatpush1.bf16.msra.mxu0 0
        %5099 = vmatprep.subr.bf16.mxu0 0
        %5100 = vmatpush1.bf16.msra.mxu0 0
        %5101 = vmatprep.mubr.bf16.mxu0 0
        %5102 = vmatmul.mubr.bf16.gmra.mrb[0].mxu0 %v5067
        %v5103 = vpop.f32.mrb[0].mxu0
        %v5104 = vadd.f32 0.0, %v5103
        %v5105 = vpop.f32.mrb[0].mxu0
        %v5106 = vpop.f32.mrb[0].mxu0
        %v5107 = vadd.f32 0.0, %v5106
        %v5108 = vpop.f32.mrb[0].mxu0
        %5109 = vdwg.mxu0
        %5110 = vrot.lane.b32.xlu0 %v605, 80
        %v5111 = vpop.permute.xlu0 %5110
        %v5114 = vsel %vm746, %v4780, 0
        %5116 = vmatprep.subr.bf16.mxu0 0
        %5117 = vmatpush1.bf16.msra.mxu0 %v5111
        %5118 = vmatprep.subr.bf16.mxu0 0
        %5119 = vmatpush1.bf16.msra.mxu0 0
        %5120 = vmatprep.subr.bf16.mxu0 0
        %5121 = vmatpush1.bf16.msra.mxu0 0
        %5122 = vmatprep.subr.bf16.mxu0 0
        %5123 = vmatpush1.bf16.msra.mxu0 0
        %5124 = vmatprep.subr.bf16.mxu0 0
        %5125 = vmatpush1.bf16.msra.mxu0 0
        %5126 = vmatprep.subr.bf16.mxu0 0
        %5127 = vmatpush1.bf16.msra.mxu0 0
        %5128 = vmatprep.subr.bf16.mxu0 0
        %5129 = vmatpush1.bf16.msra.mxu0 0
        %5130 = vmatprep.subr.bf16.mxu0 0
        %5131 = vmatpush1.bf16.msra.mxu0 0
        %5132 = vmatprep.subr.bf16.mxu0 0
        %5133 = vmatpush1.bf16.msra.mxu0 0
        %5134 = vmatprep.subr.bf16.mxu0 0
        %5135 = vmatpush1.bf16.msra.mxu0 0
        %5136 = vmatprep.subr.bf16.mxu0 0
        %5137 = vmatpush1.bf16.msra.mxu0 0
        %5138 = vmatprep.subr.bf16.mxu0 0
        %5139 = vmatpush1.bf16.msra.mxu0 0
        %5140 = vmatprep.subr.bf16.mxu0 0
        %5141 = vmatpush1.bf16.msra.mxu0 0
        %5142 = vmatprep.subr.bf16.mxu0 0
        %5143 = vmatpush1.bf16.msra.mxu0 0
        %5144 = vmatprep.subr.bf16.mxu0 0
        %5145 = vmatpush1.bf16.msra.mxu0 0
        %5146 = vmatprep.subr.bf16.mxu0 0
        %5147 = vmatpush1.bf16.msra.mxu0 0
        %5148 = vmatprep.mubr.bf16.mxu0 0
        %5149 = vmatmul.mubr.bf16.gmra.mrb[0].mxu0 %v5114
        %v5150 = vpop.f32.mrb[0].mxu0
        %v5151 = vadd.f32 0.0, %v5150
        %v5152 = vpop.f32.mrb[0].mxu0
        %v5153 = vpop.f32.mrb[0].mxu0
        %v5154 = vadd.f32 0.0, %v5153
        %v5155 = vpop.f32.mrb[0].mxu0
        %5156 = vdwg.mxu0
        %5157 = vrot.lane.b32.xlu0 %v696, 16
        %v5158 = vpop.permute.xlu0 %5157
        %5159 = vrot.lane.b32.xlu0 %v698, 16
        %v5160 = vpop.permute.xlu0 %5159
        %5161 = vrot.lane.b32.xlu0 %v700, 16
        %v5162 = vpop.permute.xlu0 %5161
        %5163 = vrot.lane.b32.xlu0 %v702, 16
        %v5164 = vpop.permute.xlu0 %5163
        %5165 = vrot.lane.b32.xlu0 %v704, 16
        %v5166 = vpop.permute.xlu0 %5165
        %5167 = vrot.lane.b32.xlu0 %v706, 16
        %v5168 = vpop.permute.xlu0 %5167
        %5169 = vrot.lane.b32.xlu0 %v708, 16
        %v5170 = vpop.permute.xlu0 %5169
        %5171 = vrot.lane.b32.xlu0 %v710, 16
        %v5172 = vpop.permute.xlu0 %5171
        %5173 = vrot.lane.b32.xlu0 %v712, 16
        %v5174 = vpop.permute.xlu0 %5173
        %5175 = vrot.lane.b32.xlu0 %v714, 16
        %v5176 = vpop.permute.xlu0 %5175
        %5177 = vrot.lane.b32.xlu0 %v716, 16
        %v5178 = vpop.permute.xlu0 %5177
        %5179 = vrot.lane.b32.xlu0 %v718, 16
        %v5180 = vpop.permute.xlu0 %5179
        %5181 = vrot.lane.b32.xlu0 %v720, 16
        %v5182 = vpop.permute.xlu0 %5181
        %5183 = vrot.lane.b32.xlu0 %v722, 16
        %v5184 = vpop.permute.xlu0 %5183
        %5185 = vrot.lane.b32.xlu0 %v724, 16
        %v5186 = vpop.permute.xlu0 %5185
        %5187 = vrot.lane.b32.xlu0 %v726, 16
        %v5188 = vpop.permute.xlu0 %5187
        %v5205 = vmul.f32 %v4822, %v5158
        %v5206 = vmul.f32 %v4825, %v5160
        %v5207 = vmul.f32 %v4869, %v5162
        %v5208 = vmul.f32 %v4872, %v5164
        %v5209 = vmul.f32 %v4916, %v5166
        %v5210 = vmul.f32 %v4919, %v5168
        %v5211 = vmul.f32 %v4963, %v5170
        %v5212 = vmul.f32 %v4966, %v5172
        %v5213 = vmul.f32 %v5010, %v5174
        %v5214 = vmul.f32 %v5013, %v5176
        %v5215 = vmul.f32 %v5057, %v5178
        %v5216 = vmul.f32 %v5060, %v5180
        %v5217 = vmul.f32 %v5104, %v5182
        %v5218 = vmul.f32 %v5107, %v5184
        %v5219 = vmul.f32 %v5151, %v5186
        %v5220 = vmul.f32 %v5154, %v5188
        %v5221 = vpack.c.bf16 %v5206, %v5205
        %v5222 = vpack.c.bf16 %v5208, %v5207
        %v5223 = vpack.c.bf16 %v5210, %v5209
        %v5224 = vpack.c.bf16 %v5212, %v5211
        %v5225 = vpack.c.bf16 %v5214, %v5213
        %v5226 = vpack.c.bf16 %v5216, %v5215
        %v5227 = vpack.c.bf16 %v5218, %v5217
        %v5228 = vpack.c.bf16 %v5220, %v5219
        %5237 = vrot.lane.b32.xlu0 %v5221, 48
        %v5238 = vpop.permute.xlu0 %5237
        %5239 = vrot.lane.b32.xlu0 %v5222, 48
        %v5240 = vpop.permute.xlu0 %5239
        %5241 = vrot.lane.b32.xlu0 %v5223, 48
        %v5242 = vpop.permute.xlu0 %5241
        %5243 = vrot.lane.b32.xlu0 %v5224, 48
        %v5244 = vpop.permute.xlu0 %5243
        %5245 = vrot.lane.b32.xlu0 %v5225, 48
        %v5246 = vpop.permute.xlu0 %5245
        %5247 = vrot.lane.b32.xlu0 %v5226, 48
        %v5248 = vpop.permute.xlu0 %5247
        %5249 = vrot.lane.b32.xlu0 %v5227, 48
        %v5250 = vpop.permute.xlu0 %5249
        %5251 = vrot.lane.b32.xlu0 %v5228, 48
        %v5252 = vpop.permute.xlu0 %5251
        %vm5261 = vcmask 523648
        %5262 = vst.msk [vmem:[#allocation2] sm:$0xff] %vm5261, %v5238
        %5263 = vst.msk [vmem:[#allocation2 + $0x8] sm:$0xff] %vm5261, %v5240
        %5264 = vst.msk [vmem:[#allocation2 + $0x10] sm:$0xff] %vm5261, %v5242
        %5265 = vst.msk [vmem:[#allocation2 + $0x18] sm:$0xff] %vm5261, %v5244
        %5266 = vst.msk [vmem:[#allocation2 + $0x20] sm:$0xff] %vm5261, %v5246
        %5267 = vst.msk [vmem:[#allocation2 + $0x28] sm:$0xff] %vm5261, %v5248
        %5268 = vst.msk [vmem:[#allocation2 + $0x30] sm:$0xff] %vm5261, %v5250
        %5269 = vst.msk [vmem:[#allocation2 + $0x38] sm:$0xff] %vm5261, %v5252
        %v5270 = vld [vmem:[#allocation2] sm:$0xff]
        %v5271 = vld [vmem:[#allocation2 + $0x8] sm:$0xff]
        %v5272 = vld [vmem:[#allocation2 + $0x10] sm:$0xff]
        %v5273 = vld [vmem:[#allocation2 + $0x18] sm:$0xff]
        %v5274 = vld [vmem:[#allocation2 + $0x20] sm:$0xff]
        %v5275 = vld [vmem:[#allocation2 + $0x28] sm:$0xff]
        %v5276 = vld [vmem:[#allocation2 + $0x30] sm:$0xff]
        %v5277 = vld [vmem:[#allocation2 + $0x38] sm:$0xff]
        %v5278 = vld [vmem:[%s5] sm:$0xf]
        %v5279 = vld [vmem:[%s5 + $0x4] sm:$0xf]
        %v5280 = vld [vmem:[%s5 + $0x8] sm:$0xf]
        %v5281 = vld [vmem:[%s5 + $0xc] sm:$0xf]
        %v5282 = vld [vmem:[%s5 + $0x10] sm:$0xf]
        %v5283 = vld [vmem:[%s5 + $0x14] sm:$0xf]
        %v5284 = vld [vmem:[%s5 + $0x18] sm:$0xf]
        %v5285 = vld [vmem:[%s5 + $0x1c] sm:$0xf]
        %v5286 = vld [vmem:[%s6] sm:$0x1]
        %v5288 = vlaneseq
        %v5289 = vshrl.u32 %v5288, 7
        %v5290 = vsub.s32 0, %v5289
        %v5291 = vrot.slane %v5286, %v5290
        %v5301 = vunpack.c.l.b16 %v5278
        %v5302 = vunpack.c.l.b16 %v5279
        %v5303 = vunpack.c.l.b16 %v5280
        %v5304 = vunpack.c.l.b16 %v5281
        %v5305 = vunpack.c.l.b16 %v5282
        %v5306 = vunpack.c.l.b16 %v5283
        %v5307 = vunpack.c.l.b16 %v5284
        %v5308 = vunpack.c.l.b16 %v5285
        %v5309 = vpack.c.b16 %v5302, %v5301
        %v5310 = vpack.c.b16 %v5304, %v5303
        %v5311 = vpack.c.b16 %v5306, %v5305
        %v5312 = vpack.c.b16 %v5308, %v5307
        %vm5317 = vcmask 523264
        %v5319 = vsel %vm5317, %v5270, 0
        %v5322 = vsel %vm5317, %v5271, 0
        %v5325 = vsel %vm5317, %v5272, 0
        %v5328 = vsel %vm5317, %v5273, 0
        %v5331 = vsel %vm5317, %v5274, 0
        %v5334 = vsel %vm5317, %v5275, 0
        %v5337 = vsel %vm5317, %v5276, 0
        %v5340 = vsel %vm5317, %v5277, 0
        %5342 = vmatprep.subr.bf16.mxu0 0
        %5343 = vmatpush1.bf16.msra.mxu0 %v5309
        %5344 = vmatprep.subr.bf16.mxu0 0
        %5345 = vmatpush1.bf16.msra.mxu0 %v5310
        %5346 = vmatprep.subr.bf16.mxu0 0
        %5347 = vmatpush1.bf16.msra.mxu0 %v5311
        %5348 = vmatprep.subr.bf16.mxu0 0
        %5349 = vmatpush1.bf16.msra.mxu0 %v5312
        %5350 = vmatprep.subr.bf16.mxu0 0
        %5351 = vmatpush1.bf16.msra.mxu0 0
        %5352 = vmatprep.subr.bf16.mxu0 0
        %5353 = vmatpush1.bf16.msra.mxu0 0
        %5354 = vmatprep.subr.bf16.mxu0 0
        %5355 = vmatpush1.bf16.msra.mxu0 0
        %5356 = vmatprep.subr.bf16.mxu0 0
        %5357 = vmatpush1.bf16.msra.mxu0 0
        %5358 = vmatprep.subr.bf16.mxu0 0
        %5359 = vmatpush1.bf16.msra.mxu0 0
        %5360 = vmatprep.subr.bf16.mxu0 0
        %5361 = vmatpush1.bf16.msra.mxu0 0
        %5362 = vmatprep.subr.bf16.mxu0 0
        %5363 = vmatpush1.bf16.msra.mxu0 0
        %5364 = vmatprep.subr.bf16.mxu0 0
        %5365 = vmatpush1.bf16.msra.mxu0 0
        %5366 = vmatprep.subr.bf16.mxu0 0
        %5367 = vmatpush1.bf16.msra.mxu0 0
        %5368 = vmatprep.subr.bf16.mxu0 0
        %5369 = vmatpush1.bf16.msra.mxu0 0
        %5370 = vmatprep.subr.bf16.mxu0 0
        %5371 = vmatpush1.bf16.msra.mxu0 0
        %5372 = vmatprep.subr.bf16.mxu0 0
        %5373 = vmatpush1.bf16.msra.mxu0 0
        %5374 = vmatprep.mubr.bf16.mxu0 0
        %5375 = vmatmul.mubr.bf16.gmra.mrb[0].mxu0 %v5319
        %v5376 = vpop.f32.mrb[0].mxu0
        %v5377 = vadd.f32 %v5291, %v5376
        %v5378 = vpop.f32.mrb[0].mxu0
        %v5379 = vpop.f32.mrb[0].mxu0
        %v5380 = vadd.f32 %v5291, %v5379
        %v5381 = vpop.f32.mrb[0].mxu0
        %5382 = vmatprep.mubr.bf16.mxu0 0
        %5383 = vmatmul.mubr.bf16.gmra.mrb[0].mxu0 %v5322
        %v5384 = vpop.f32.mrb[0].mxu0
        %v5385 = vadd.f32 %v5291, %v5384
        %v5386 = vpop.f32.mrb[0].mxu0
        %v5387 = vpop.f32.mrb[0].mxu0
        %v5388 = vadd.f32 %v5291, %v5387
        %v5389 = vpop.f32.mrb[0].mxu0
        %5390 = vmatprep.mubr.bf16.mxu0 0
        %5391 = vmatmul.mubr.bf16.gmra.mrb[0].mxu0 %v5325
        %v5392 = vpop.f32.mrb[0].mxu0
        %v5393 = vadd.f32 %v5291, %v5392
        %v5394 = vpop.f32.mrb[0].mxu0
        %v5395 = vpop.f32.mrb[0].mxu0
        %v5396 = vadd.f32 %v5291, %v5395
        %v5397 = vpop.f32.mrb[0].mxu0
        %5398 = vmatprep.mubr.bf16.mxu0 0
        %5399 = vmatmul.mubr.bf16.gmra.mrb[0].mxu0 %v5328
        %v5400 = vpop.f32.mrb[0].mxu0
        %v5401 = vadd.f32 %v5291, %v5400
        %v5402 = vpop.f32.mrb[0].mxu0
        %v5403 = vpop.f32.mrb[0].mxu0
        %v5404 = vadd.f32 %v5291, %v5403
        %v5405 = vpop.f32.mrb[0].mxu0
        %5406 = vmatprep.mubr.bf16.mxu0 0
        %5407 = vmatmul.mubr.bf16.gmra.mrb[0].mxu0 %v5331
        %v5408 = vpop.f32.mrb[0].mxu0
        %v5409 = vadd.f32 %v5291, %v5408
        %v5410 = vpop.f32.mrb[0].mxu0
        %v5411 = vpop.f32.mrb[0].mxu0
        %v5412 = vadd.f32 %v5291, %v5411
        %v5413 = vpop.f32.mrb[0].mxu0
        %5414 = vmatprep.mubr.bf16.mxu0 0
        %5415 = vmatmul.mubr.bf16.gmra.mrb[0].mxu0 %v5334
        %v5416 = vpop.f32.mrb[0].mxu0
        %v5417 = vadd.f32 %v5291, %v5416
        %v5418 = vpop.f32.mrb[0].mxu0
        %v5419 = vpop.f32.mrb[0].mxu0
        %v5420 = vadd.f32 %v5291, %v5419
        %v5421 = vpop.f32.mrb[0].mxu0
        %5422 = vmatprep.mubr.bf16.mxu0 0
        %5423 = vmatmul.mubr.bf16.gmra.mrb[0].mxu0 %v5337
        %v5424 = vpop.f32.mrb[0].mxu0
        %v5425 = vadd.f32 %v5291, %v5424
        %v5426 = vpop.f32.mrb[0].mxu0
        %v5427 = vpop.f32.mrb[0].mxu0
        %v5428 = vadd.f32 %v5291, %v5427
        %v5429 = vpop.f32.mrb[0].mxu0
        %5430 = vmatprep.mubr.bf16.mxu0 0
        %5431 = vmatmul.mubr.bf16.gmra.mrb[0].mxu0 %v5340
        %v5432 = vpop.f32.mrb[0].mxu0
        %v5433 = vadd.f32 %v5291, %v5432
        %v5434 = vpop.f32.mrb[0].mxu0
        %v5435 = vpop.f32.mrb[0].mxu0
        %v5436 = vadd.f32 %v5291, %v5435
        %v5437 = vpop.f32.mrb[0].mxu0
        %5438 = vdwg.mxu0
        %5439 = vst.msk [vmem:[%s354] sm:$0xff] %vm452, %v5377
        %5440 = vst.msk [vmem:[%s354 + $0x8] sm:$0xff] %vm452, %v5380
        %5441 = vst.msk [vmem:[%s354 + $0x10] sm:$0xff] %vm452, %v5385
        %5442 = vst.msk [vmem:[%s354 + $0x18] sm:$0xff] %vm452, %v5388
        %5443 = vst.msk [vmem:[%s354 + $0x20] sm:$0xff] %vm452, %v5393
        %5444 = vst.msk [vmem:[%s354 + $0x28] sm:$0xff] %vm452, %v5396
        %5445 = vst.msk [vmem:[%s354 + $0x30] sm:$0xff] %vm452, %v5401
        %5446 = vst.msk [vmem:[%s354 + $0x38] sm:$0xff] %vm452, %v5404
        %5447 = vst.msk [vmem:[%s354 + $0x40] sm:$0xff] %vm452, %v5409
        %5448 = vst.msk [vmem:[%s354 + $0x48] sm:$0xff] %vm452, %v5412
        %5449 = vst.msk [vmem:[%s354 + $0x50] sm:$0xff] %vm452, %v5417
        %5450 = vst.msk [vmem:[%s354 + $0x58] sm:$0xff] %vm452, %v5420
        %5451 = vst.msk [vmem:[%s354 + $0x60] sm:$0xff] %vm452, %v5425
        %5452 = vst.msk [vmem:[%s354 + $0x68] sm:$0xff] %vm452, %v5428
        %5453 = vst.msk [vmem:[%s354 + $0x70] sm:$0xff] %vm452, %v5433
        %5454 = vst.msk [vmem:[%s354 + $0x78] sm:$0xff] %vm452, %v5436
        %s5455 = sand.u32 %s212, 1
        %s5456 = scalar_lea.sflag [#allocation5], %s5455
        %s5457 = sand.u32 %s212, 1
        %s5458 = smul.addr %s5457, 128
        %s5459 = scalar_lea.vmem [#allocation6], %s5458
        // Predicated region
        $region53: #{tpu_custom_call.1} parent=47 // pred_check
          %p5460 = pneg %p222
        $region54: #{tpu_custom_call.1} parent=47 // pred_check_branch
          %5462 = sbr.rel (%p5460) target = $region56
        $region55: #{tpu_custom_call.1} parent=47 // pred_region
          %s5463 = smul.u32 8, %s29
          %s5465 = ssub.s32 2048, 2048
          %5466 = vsyncadd %s5456, %s5465
          %s5467 = smul.addr %s5463, 2
          %s5468 = smul.addr %s28, 32
          %s5469 = sadd.s32 %s5467, %s5468
          %s5470 = smul.addr %s5469, 128
          %s5471 = scalar_lea.hbm %s7, %s5470
          %s5472 = sshll.u32 %s5459, 4
          %s5473 = int_to_ptr.vmem [resolvable:$true] %s5472
          %5478 = dma.vmem_to_hbm [thread:$0]  %s5473, 2048, %s5471, %s5456, 128, 128, 8
        $region56: #{tpu_custom_call.1} parent=47 // pred_fallthru
          _
      $region48: #{tpu_custom_call.1} parent=5 // pred_fallthru
        _
      %p5479 = scmp.le.s32.totalorder 2, %s19
      // Predicated region
      $region57: #{tpu_custom_call.1} parent=5 // pred_check
        %p5480 = pneg %p5479
      $region58: #{tpu_custom_call.1} parent=5 // pred_check_branch
        %5482 = sbr.rel (%p5480) target = $region60
      $region59: #{tpu_custom_call.1} parent=5 // pred_region
        %s5483 = ssub.s32 %s19, 2
        // Predicated region
        $region61: #{tpu_custom_call.1} parent=59 // pred_check
          %p5484 = pneg %p228
        $region62: #{tpu_custom_call.1} parent=59 // pred_check_branch
          %5486 = sbr.rel (%p5484) target = $region64
        $region63: #{tpu_custom_call.1} parent=59 // pred_region
          %s5487 = sand.u32 %s213, 1
          %s5488 = scalar_lea.sflag [#allocation5], %s5487
          %s5489 = sand.u32 %s213, 1
          %s5490 = smul.addr %s5489, 128
          %s5491 = scalar_lea.vmem [#allocation6], %s5490
          %5492 = dma.done %s5488, 2048
        $region64: #{tpu_custom_call.1} parent=59 // pred_fallthru
          _
      $region60: #{tpu_custom_call.1} parent=5 // pred_fallthru
        _
    $region6: #{tpu_custom_call.1} parent=1 // loop_footer
      %s23 = sadd.s32 1, %s19
    $region7: #{tpu_custom_call.1} parent=1 // loop_footer_branch
      %18 = sbr.rel target = $region3
    $region8: #{tpu_custom_call.1} parent=1 // loop_exit
      _
    %5493 = vsyncpa [#allocation4], 1
    %s5494 = scalar_lea.sflag [#allocation4], 1
    %5495 = vsyncpa %s5494, 1
    %5496 = vsyncpa [#allocation5], 1
    %s5497 = scalar_lea.sflag [#allocation5], 1
    %5498 = vsyncpa %s5497, 1

</llo_original>
